<compile_context>
chip_gen: v7x
topology: tpu7x:2x2x1
jax: 0.10.0
libtpu: 0.0.40
codegen_flags: <defaults>
</compile_context>

<pallas_src>
import math
from collections import namedtuple

import jax
import jax.numpy as jnp
import numpy as np
from jax import lax
from jax.experimental import pallas as pl
from jax.experimental.pallas import tpu as pltpu

LANE = 128          # TPU lane width: everything is padded to this in the feature dim
SUB = 8             # sublane alignment
VMEM = pltpu.MemorySpace.VMEM

Shape = namedtuple("Shape", ["name"])


# ----------------------------------------------------------------------------
# Deterministic parameter init (mirrors nn.Module __init__ shapes)
# ----------------------------------------------------------------------------
def _uniform(key, shape, lo, hi):
    return jax.random.uniform(key, shape, jnp.float32, lo, hi)


def _xavier(key, shape):
    fan_in, fan_out = shape[-2], shape[-1]
    bound = math.sqrt(6.0 / (fan_in + fan_out))
    return _uniform(key, shape, -bound, bound)


def _linear_params(key, in_dim, out_dim):
    # Stored as [in, out] (transpose of torch's [out, in]) so kernels do x @ w.
    kw, kb = jax.random.split(key)
    bound = 1.0 / math.sqrt(in_dim)
    return (_uniform(kw, (in_dim, out_dim), -bound, bound),
            _uniform(kb, (out_dim,), -bound, bound))


def init_params(key, n_receiving_faces, block_dim, obstacle_dim, target_dim,
                hidden_dim, num_heads, num_ground_actions,
                num_block_actions_per_face):
    keys = iter(jax.random.split(key, 64))
    params = {"block_encoders": [], "block_decoders": []}
    for n_f in n_receiving_faces:
        w1, b1 = _linear_params(next(keys), block_dim, hidden_dim)
        w2, b2 = _linear_params(next(keys), hidden_dim, hidden_dim)
        params["block_encoders"].append((w1, b1, w2, b2))
        params["block_decoders"].append(
            _linear_params(next(keys), 2 * hidden_dim,
                           n_f * num_block_actions_per_face))
    w1, b1 = _linear_params(next(keys), obstacle_dim, hidden_dim)
    w2, b2 = _linear_params(next(keys), hidden_dim, hidden_dim)
    params["obstacle_encoder"] = (w1, b1, w2, b2)
    w1, b1 = _linear_params(next(keys), target_dim, hidden_dim)
    w2, b2 = _linear_params(next(keys), hidden_dim, hidden_dim)
    params["target_encoder"] = (w1, b1, w2, b2)
    params["ground_param"] = _uniform(next(keys), (hidden_dim,), -1.0, 1.0)
    wk = _xavier(next(keys), (num_heads, hidden_dim, hidden_dim))
    wq = _xavier(next(keys), (num_heads, hidden_dim, hidden_dim))
    wv = _xavier(next(keys), (num_heads, hidden_dim, hidden_dim))
    wm = jnp.ones((num_heads,), jnp.float32)
    gw, gb = _linear_params(next(keys), hidden_dim, hidden_dim)
    params["attention"] = (wk, wq, wv, wm, gw, gb)
    params["global_decoder"] = _linear_params(next(keys), hidden_dim, hidden_dim)
    params["ground_decoder"] = _linear_params(next(keys), 2 * hidden_dim,
                                              num_ground_actions)
    return params


# ----------------------------------------------------------------------------
# Host-side packing helpers (run ONCE at construction)
# ----------------------------------------------------------------------------
def _pad_block(m):
    m = np.asarray(m, np.float32)
    assert m.ndim == 2 and m.shape[0] <= LANE and m.shape[1] <= LANE
    out = np.zeros((LANE, LANE), np.float32)
    out[:m.shape[0], :m.shape[1]] = m
    return out


def _pad_row(v):
    v = np.asarray(v, np.float32).reshape(-1)
    assert v.shape[0] <= LANE
    out = np.zeros((1, LANE), np.float32)
    out[0, :v.shape[0]] = v
    return out


def _round_up(n, m):
    return max(m, ((n + m - 1) // m) * m)


# ----------------------------------------------------------------------------
# GraphNetwork as a single fused Pallas TPU kernel (per static layout)
# ----------------------------------------------------------------------------
class GraphNetworkPallas:
    def __init__(self, params, shapes, n_receiving_faces, num_rounds, num_heads,
                 num_ground_actions, num_block_actions_per_face):
        self.shapes = tuple(shapes)
        self.num_shapes = len(shapes)
        self.num_rounds = int(num_rounds)
        self.num_heads = int(num_heads)
        self.num_ground_actions = int(num_ground_actions)
        self.block_out_dims = tuple(int(nf) * int(num_block_actions_per_face)
                                    for nf in n_receiving_faces)

        hidden = int(np.asarray(params["ground_param"]).shape[0])
        assert hidden <= LANE, "hidden_dim must be <= 128 for this packing"
        self.hidden = hidden

        # ---- pack ALL weights/biases once into two lane-dense slabs ----------
        w_blocks, self._w_off = [], {}
        b_rows, self._b_off = [], {}

        def add_w(name, mat):
            self._w_off[name] = len(w_blocks) * LANE
            w_blocks.append(_pad_block(mat))

        def add_b(name, vec):
            self._b_off[name] = len(b_rows)
            b_rows.append(_pad_row(vec))

        add_b("ground", params["ground_param"])
        for s in range(self.num_shapes):
            w1, b1, w2, b2 = params["block_encoders"][s]
            add_w(f"benc{s}_1", w1); add_b(f"benc{s}_1b", b1)
            add_w(f"benc{s}_2", w2); add_b(f"benc{s}_2b", b2)
            wd, bd = params["block_decoders"][s]
            wd = np.asarray(wd, np.float32)
            add_w(f"decX_{s}", wd[:hidden])      # block half of Linear(2h, out)
            add_w(f"decG_{s}", wd[hidden:])      # G half
            add_b(f"decB_{s}", bd)
        w1, b1, w2, b2 = params["obstacle_encoder"]
        add_w("obs_1", w1); add_b("obs_1b", b1)
        add_w("obs_2", w2); add_b("obs_2b", b2)
        w1, b1, w2, b2 = params["target_encoder"]
        add_w("tgt_1", w1); add_b("tgt_1b", b1)
        add_w("tgt_2", w2); add_b("tgt_2b", b2)

        wk, wq, wv, wm, gw, gb = params["attention"]
        wk = np.asarray(wk, np.float32); wq = np.asarray(wq, np.float32)
        wv = np.asarray(wv, np.float32); wm = np.asarray(wm, np.float32)
        for h in range(self.num_heads):
            # Algebraic fold: e = (x Wq)(x Wk)^T = x (Wq Wk^T) x^T.
            # W_m scales the value path in the reference -> fold into W_v (exact).
            add_w(f"A{h}", wq[h] @ wk[h].T)
            add_w(f"V{h}", wv[h] * wm[h])
        add_w("gW", gw); add_b("gB", gb)
        wg, bg = params["global_decoder"]
        add_w("glob", wg); add_b("globB", bg)
        wgr, bgr = params["ground_decoder"]
        wgr = np.asarray(wgr, np.float32)
        add_w("grX", wgr[:hidden])
        add_w("grG", wgr[hidden:])
        add_b("grB", bgr)

        pad_b = (-len(b_rows)) % SUB
        b_rows += [np.zeros((1, LANE), np.float32)] * pad_b
        self.w_slab = jnp.asarray(np.concatenate(w_blocks, axis=0))  # [nW*128,128]
        self.b_slab = jnp.asarray(np.concatenate(b_rows, axis=0))    # [nB, 128]

        self._cache = {}   # (group_meta, n_obs, n_tgt) -> jitted fused kernel

    # ------------------------------------------------------------------ kernel
    def _build_kernel(self, group_meta, n_obs, n_tgt, n_nodes, out_rows,
                      out_rows_pad):
        w_off, b_off = self._w_off, self._b_off
        num_heads, num_rounds = self.num_heads, self.num_rounds
        f32 = jnp.float32

        def kernel(w_ref, b_ref, d_ref, o_ref, x_scr):
            def W(name):
                off = w_off[name]
                return w_ref[off:off + LANE, :]            # [128, 128] weight block

            def B(name):
                r = b_off[name]
                return b_ref[r:r + 1, :]                   # [1, 128] bias row

            def mlp(xv, p):
                h = jnp.dot(xv, W(p + "_1"), preferred_element_type=f32) + B(p + "_1b")
                h = jnp.maximum(h, 0.0)
                return jnp.dot(h, W(p + "_2"), preferred_element_type=f32) + B(p + "_2b")

            # -------- encoders: assemble node matrix (lane-dense [N, 128]) ----
            x_scr[0:1, :] = B("ground")
            row, drow = 1, 0
            for (s, n_i) in group_meta:
                x_scr[row:row + n_i, :] = mlp(d_ref[drow:drow + n_i, :], f"benc{s}")
                row += n_i; drow += n_i
            if n_obs > 0:
                x_scr[row:row + n_obs, :] = mlp(d_ref[drow:drow + n_obs, :], "obs")
                row += n_obs; drow += n_obs
            if n_tgt > 0:
                x_scr[row:row + n_tgt, :] = mlp(d_ref[drow:drow + n_tgt, :], "tgt")

            x_ = x_scr[...]                                 # [N, 128], stays in vregs

            # -------- num_rounds of GraphAttentionLayer (static unroll) -------
            for _ in range(num_rounds):
                out = jnp.zeros_like(x_)
                for h in range(num_heads):
                    xa = jnp.dot(x_, W(f"A{h}"), preferred_element_type=f32)
                    e = lax.dot_general(xa, x_, (((1,), (1,)), ((), ())),
                                        preferred_element_type=f32)      # [N, N]
                    e = e - jnp.max(e, axis=1, keepdims=True)
                    p = jnp.exp(e)
                    att = p / jnp.sum(p, axis=1, keepdims=True)           # exact softmax
                    v = jnp.dot(x_, W(f"V{h}"), preferred_element_type=f32)
                    out = out + jnp.dot(att, v, preferred_element_type=f32)
                g1 = jnp.dot(x_ + out, W("gW"), preferred_element_type=f32) + B("gB")
                x_ = x_ + jnp.maximum(g1, 0.0)

            # -------- decoders (slice the live value x_; no scratch reload) ---
            G = (jnp.dot(jnp.mean(x_, axis=0, keepdims=True), W("glob"),
                         preferred_element_type=f32) + B("globB"))        # [1, 128]

            o_ref[0:1, :] = (jnp.dot(x_[0:1, :], W("grX"), preferred_element_type=f32)
                             + jnp.dot(G, W("grG"), preferred_element_type=f32)
                             + B("grB"))
            row, orow = 1, 1
            for (s, n_i) in group_meta:
                g_term = (jnp.dot(G, W(f"decG_{s}"), preferred_element_type=f32)
                          + B(f"decB_{s}"))
                o_ref[orow:orow + n_i, :] = (
                    jnp.dot(x_[row:row + n_i, :], W(f"decX_{s}"),
                            preferred_element_type=f32) + g_term)
                row += n_i; orow += n_i
            if out_rows_pad > out_rows:
                o_ref[out_rows:out_rows_pad, :] = jnp.zeros(
                    (out_rows_pad - out_rows, LANE), f32)

        return kernel

    # ------------------------------------------------------- per-layout build
    def _build(self, key):
        group_meta, n_obs, n_tgt = key
        n_blocks = sum(n for _, n in group_meta)
        n_nodes = 1 + n_blocks + n_obs + n_tgt
        out_rows = 1 + n_blocks
        out_rows_pad = _round_up(out_rows, SUB)
        d_rows_pad = _round_up(n_blocks + n_obs + n_tgt, SUB)

        kernel = self._build_kernel(group_meta, n_obs, n_tgt, n_nodes,
                                    out_rows, out_rows_pad)

        n_matmul = (2 * (len(group_meta) + (n_obs > 0) + (n_tgt > 0))
                    + self.num_rounds * (3 * self.num_heads + 1)
                    + 1 + 2 + 2 * len(group_meta))
        cost = pl.CostEstimate(
            flops=2 * n_matmul * n_nodes * LANE * LANE,
            transcendentals=self.num_rounds * self.num_heads * n_nodes * n_nodes,
            bytes_accessed=4 * (int(self.w_slab.size) + int(self.b_slab.size)
                                + d_rows_pad * LANE + out_rows_pad * LANE),
        )
        call = pl.pallas_call(
            kernel,
            out_shape=jax.ShapeDtypeStruct((out_rows_pad, LANE), jnp.float32),
            in_specs=[pl.BlockSpec(memory_space=VMEM)] * 3,
            out_specs=pl.BlockSpec(memory_space=VMEM),
            scratch_shapes=[pltpu.VMEM((n_nodes, LANE), jnp.float32)],
            cost_estimate=cost,
        )
        return jax.jit(call)

    # ---------------------------------------------------------------- forward
    def __call__(self, x):
        # x values are host arrays (numpy / lists), matching the torch API which
        # calls torch.tensor(x[key]) -> no device->host sync for grouping.
        blocks = np.asarray(x["blocks"], np.float32)
        obstacles = np.asarray(x["obstacles"], np.float32)
        targets = np.asarray(x["targets"], np.float32)

        group_meta, feats = [], []
        if blocks.shape[0] > 0:
            labels = np.rint(blocks[:, -1]).astype(np.int64)  # robust to float ids
            for s in range(self.num_shapes):
                mask = labels == s
                n_s = int(mask.sum())
                if n_s > 0:
                    group_meta.append((s, n_s))
                    feats.append(blocks[mask][:, :-1])
        n_obs = int(obstacles.shape[0])
        n_tgt = int(targets.shape[0])
        if n_obs > 0:
            feats.append(obstacles)
        if n_tgt > 0:
            feats.append(targets)

        # one tiny lane-dense data slab per call
        d_rows = sum(f.shape[0] for f in feats)
        d_rows_pad = _round_up(d_rows, SUB)
        data = np.zeros((d_rows_pad, LANE), np.float32)
        r = 0
        for f in feats:
            data[r:r + f.shape[0], :f.shape[1]] = f
            r += f.shape[0]

        key = (tuple(group_meta), n_obs, n_tgt)
        fn = self._cache.get(key)
        if fn is None:
            fn = self._build(key)
            self._cache[key] = fn
        out = fn(self.w_slab, self.b_slab, jnp.asarray(data))  # [out_rows_pad, 128]

        # ---- unpack the single output slab, mirroring the torch q-dict -------
        q = {"ground": out[0, :self.num_ground_actions]}
        if blocks.shape[0] > 0:
            counts = dict(group_meta)
            row = 1
            for s, sh in enumerate(self.shapes):
                if s in counts:
                    n_s = counts[s]
                    q[sh.name] = out[row:row + n_s, :self.block_out_dims[s]]
                    row += n_s
                else:
                    q[sh.name] = jnp.array([-jnp.inf], dtype=jnp.float32)
        return q


# ----------------------------------------------------------------------------
if __name__ == "__main__":
    key = jax.random.PRNGKey(0)
    shapes = (Shape("cube"), Shape("brick"))
    n_receiving_faces = (2, 3)
    block_dim, obstacle_dim, target_dim = 6, 5, 4
    hidden_dim = 32
    num_rounds, num_heads = 2, 2
    num_ground_actions, num_block_actions_per_face = 4, 3

    k_par, k_blk, k_obs, k_tgt = jax.random.split(key, 4)
    params = init_params(k_par, n_receiving_faces, block_dim, obstacle_dim,
                         target_dim, hidden_dim, num_heads, num_ground_actions,
                         num_block_actions_per_face)

    net = GraphNetworkPallas(params, shapes, n_receiving_faces, num_rounds,
                             num_heads, num_ground_actions,
                             num_block_actions_per_face)

    n_blocks, n_obstacles, n_targets = 3, 2, 1
    block_feats = np.asarray(jax.random.normal(k_blk, (n_blocks, block_dim)),
                             np.float32)
    block_types = np.array([[0.0], [1.0], [0.0]], np.float32)  # last col = shape id
    x = {
        "blocks": np.concatenate([block_feats, block_types], axis=1),        # [3, 7]
        "obstacles": np.asarray(jax.random.normal(k_obs, (n_obstacles, obstacle_dim)),
                                np.float32),                                 # [2, 5]
        "targets": np.asarray(jax.random.normal(k_tgt, (n_targets, target_dim)),
                              np.float32),                                   # [1, 4]
    }

    q = net(x)
    q = jax.block_until_ready(q)

    assert q["ground"].shape == (num_ground_actions,)
    assert q["cube"].shape == (2, n_receiving_faces[0] * num_block_actions_per_face)
    assert q["brick"].shape == (1, n_receiving_faces[1] * num_block_actions_per_face)
    assert all(bool(jnp.all(jnp.isfinite(v))) for v in q.values())

    # second call with the same layout: reuses the cached compiled kernel,
    # only the tiny data slab is rebuilt host-side.
    q2 = jax.block_until_ready(net(x))
    assert q2["ground"].shape == (num_ground_actions,)

    print("KERNEL_OK")
</pallas_src>

<mosaic_0001>
module attributes {stable_mosaic.version = 11 : i64} {
  func.func @kernel(%arg0: memref<2560x128xf32, #tpu.memory_space<vmem>>, %arg1: memref<16x128xf32, #tpu.memory_space<vmem>>, %arg2: memref<8x128xf32, #tpu.memory_space<vmem>>, %arg3: memref<8x128xf32, #tpu.memory_space<vmem>>, %arg4: memref<7x128xf32, #tpu.memory_space<vmem>>) attributes {dimension_semantics = [], scalar_prefetch = 0 : i64, scratch_operands = 1 : i64, tpu.core_type = #tpu.core_type<tc>} {
    %c0 = arith.constant 0 : index
    %c0_0 = arith.constant 0 : index
    %0 = vector.load %arg1[%c0, %c0_0] : memref<16x128xf32, #tpu.memory_space<vmem>>, vector<1x128xf32>
    %c0_1 = arith.constant 0 : index
    %c0_2 = arith.constant 0 : index
    %1 = vector.load %arg4[%c0_1, %c0_2] : memref<7x128xf32, #tpu.memory_space<vmem>>, vector<1x128xf32>
    tpu.vector_store %arg4[%c0_1, %c0_2], %0 {strides = array<i32>} : memref<7x128xf32, #tpu.memory_space<vmem>>, vector<1x128xf32>,
    %c0_3 = arith.constant 0 : index
    %c0_4 = arith.constant 0 : index
    %2 = vector.load %arg2[%c0_3, %c0_4] : memref<8x128xf32, #tpu.memory_space<vmem>>, vector<2x128xf32>
    %c0_5 = arith.constant 0 : index
    %c0_6 = arith.constant 0 : index
    %3 = vector.load %arg0[%c0_5, %c0_6] : memref<2560x128xf32, #tpu.memory_space<vmem>>, vector<128x128xf32>
    %cst = arith.constant dense<0.000000e+00> : vector<2x128xf32>
    %4 = tpu.matmul %2, %3, %cst {dimension_numbers = #tpu.dot_dimension_numbers<[1], [0], [0], [1], [0, 0, 1, 1], [], []>} : vector<2x128xf32>, vector<128x128xf32>, vector<2x128xf32> -> vector<2x128xf32>
    %c1 = arith.constant 1 : index
    %c0_7 = arith.constant 0 : index
    %5 = vector.load %arg1[%c1, %c0_7] : memref<16x128xf32, #tpu.memory_space<vmem>>, vector<1x128xf32>
    %6 = vector.broadcast %5 : vector<1x128xf32> to vector<2x128xf32>
    %7 = arith.addf %4, %6 : vector<2x128xf32>
    %cst_8 = arith.constant 0.000000e+00 : f32
    %8 = vector.broadcast %cst_8 : f32 to vector<2x128xf32>
    %9 = arith.maximumf %7, %8 : vector<2x128xf32>
    %c128 = arith.constant 128 : index
    %c0_9 = arith.constant 0 : index
    %10 = vector.load %arg0[%c128, %c0_9] : memref<2560x128xf32, #tpu.memory_space<vmem>>, vector<128x128xf32>
    %cst_10 = arith.constant dense<0.000000e+00> : vector<2x128xf32>
    %11 = tpu.matmul %9, %10, %cst_10 {dimension_numbers = #tpu.dot_dimension_numbers<[1], [0], [0], [1], [0, 0, 1, 1], [], []>} : vector<2x128xf32>, vector<128x128xf32>, vector<2x128xf32> -> vector<2x128xf32>
    %c2 = arith.constant 2 : index
    %c0_11 = arith.constant 0 : index
    %12 = vector.load %arg1[%c2, %c0_11] : memref<16x128xf32, #tpu.memory_space<vmem>>, vector<1x128xf32>
    %13 = vector.broadcast %12 : vector<1x128xf32> to vector<2x128xf32>
    %14 = arith.addf %11, %13 : vector<2x128xf32>
    %c1_12 = arith.constant 1 : index
    %c0_13 = arith.constant 0 : index
    %15 = vector.load %arg4[%c1_12, %c0_13] : memref<7x128xf32, #tpu.memory_space<vmem>>, vector<2x128xf32>
    tpu.vector_store %arg4[%c1_12, %c0_13], %14 {strides = array<i32>} : memref<7x128xf32, #tpu.memory_space<vmem>>, vector<2x128xf32>,
    %c2_14 = arith.constant 2 : index
    %c0_15 = arith.constant 0 : index
    %16 = vector.load %arg2[%c2_14, %c0_15] : memref<8x128xf32, #tpu.memory_space<vmem>>, vector<1x128xf32>
    %c512 = arith.constant 512 : index
    %c0_16 = arith.constant 0 : index
    %17 = vector.load %arg0[%c512, %c0_16] : memref<2560x128xf32, #tpu.memory_space<vmem>>, vector<128x128xf32>
    %cst_17 = arith.constant dense<0.000000e+00> : vector<1x128xf32>
    %18 = tpu.matmul %16, %17, %cst_17 {dimension_numbers = #tpu.dot_dimension_numbers<[1], [0], [0], [1], [0, 0, 1, 1], [], []>} : vector<1x128xf32>, vector<128x128xf32>, vector<1x128xf32> -> vector<1x128xf32>
    %c4 = arith.constant 4 : index
    %c0_18 = arith.constant 0 : index
    %19 = vector.load %arg1[%c4, %c0_18] : memref<16x128xf32, #tpu.memory_space<vmem>>, vector<1x128xf32>
    %20 = arith.addf %18, %19 : vector<1x128xf32>
    %cst_19 = arith.constant 0.000000e+00 : f32
    %21 = vector.broadcast %cst_19 : f32 to vector<1x128xf32>
    %22 = arith.maximumf %20, %21 : vector<1x128xf32>
    %c640 = arith.constant 640 : index
    %c0_20 = arith.constant 0 : index
    %23 = vector.load %arg0[%c640, %c0_20] : memref<2560x128xf32, #tpu.memory_space<vmem>>, vector<128x128xf32>
    %cst_21 = arith.constant dense<0.000000e+00> : vector<1x128xf32>
    %24 = tpu.matmul %22, %23, %cst_21 {dimension_numbers = #tpu.dot_dimension_numbers<[1], [0], [0], [1], [0, 0, 1, 1], [], []>} : vector<1x128xf32>, vector<128x128xf32>, vector<1x128xf32> -> vector<1x128xf32>
    %c5 = arith.constant 5 : index
    %c0_22 = arith.constant 0 : index
    %25 = vector.load %arg1[%c5, %c0_22] : memref<16x128xf32, #tpu.memory_space<vmem>>, vector<1x128xf32>
    %26 = arith.addf %24, %25 : vector<1x128xf32>
    %c3 = arith.constant 3 : index
    %c0_23 = arith.constant 0 : index
    %27 = vector.load %arg4[%c3, %c0_23] : memref<7x128xf32, #tpu.memory_space<vmem>>, vector<1x128xf32>
    tpu.vector_store %arg4[%c3, %c0_23], %26 {strides = array<i32>} : memref<7x128xf32, #tpu.memory_space<vmem>>, vector<1x128xf32>,
    %c3_24 = arith.constant 3 : index
    %c0_25 = arith.constant 0 : index
    %28 = vector.load %arg2[%c3_24, %c0_25] : memref<8x128xf32, #tpu.memory_space<vmem>>, vector<2x128xf32>
    %c1024 = arith.constant 1024 : index
    %c0_26 = arith.constant 0 : index
    %29 = vector.load %arg0[%c1024, %c0_26] : memref<2560x128xf32, #tpu.memory_space<vmem>>, vector<128x128xf32>
    %cst_27 = arith.constant dense<0.000000e+00> : vector<2x128xf32>
    %30 = tpu.matmul %28, %29, %cst_27 {dimension_numbers = #tpu.dot_dimension_numbers<[1], [0], [0], [1], [0, 0, 1, 1], [], []>} : vector<2x128xf32>, vector<128x128xf32>, vector<2x128xf32> -> vector<2x128xf32>
    %c7 = arith.constant 7 : index
    %c0_28 = arith.constant 0 : index
    %31 = vector.load %arg1[%c7, %c0_28] : memref<16x128xf32, #tpu.memory_space<vmem>>, vector<1x128xf32>
    %32 = vector.broadcast %31 : vector<1x128xf32> to vector<2x128xf32>
    %33 = arith.addf %30, %32 : vector<2x128xf32>
    %cst_29 = arith.constant 0.000000e+00 : f32
    %34 = vector.broadcast %cst_29 : f32 to vector<2x128xf32>
    %35 = arith.maximumf %33, %34 : vector<2x128xf32>
    %c1152 = arith.constant 1152 : index
    %c0_30 = arith.constant 0 : index
    %36 = vector.load %arg0[%c1152, %c0_30] : memref<2560x128xf32, #tpu.memory_space<vmem>>, vector<128x128xf32>
    %cst_31 = arith.constant dense<0.000000e+00> : vector<2x128xf32>
    %37 = tpu.matmul %35, %36, %cst_31 {dimension_numbers = #tpu.dot_dimension_numbers<[1], [0], [0], [1], [0, 0, 1, 1], [], []>} : vector<2x128xf32>, vector<128x128xf32>, vector<2x128xf32> -> vector<2x128xf32>
    %c8 = arith.constant 8 : index
    %c0_32 = arith.constant 0 : index
    %38 = vector.load %arg1[%c8, %c0_32] : memref<16x128xf32, #tpu.memory_space<vmem>>, vector<1x128xf32>
    %39 = vector.broadcast %38 : vector<1x128xf32> to vector<2x128xf32>
    %40 = arith.addf %37, %39 : vector<2x128xf32>
    %c4_33 = arith.constant 4 : index
    %c0_34 = arith.constant 0 : index
    %41 = vector.load %arg4[%c4_33, %c0_34] : memref<7x128xf32, #tpu.memory_space<vmem>>, vector<2x128xf32>
    tpu.vector_store %arg4[%c4_33, %c0_34], %40 {strides = array<i32>} : memref<7x128xf32, #tpu.memory_space<vmem>>, vector<2x128xf32>,
    %c5_35 = arith.constant 5 : index
    %c0_36 = arith.constant 0 : index
    %42 = vector.load %arg2[%c5_35, %c0_36] : memref<8x128xf32, #tpu.memory_space<vmem>>, vector<1x128xf32>
    %c1280 = arith.constant 1280 : index
    %c0_37 = arith.constant 0 : index
    %43 = vector.load %arg0[%c1280, %c0_37] : memref<2560x128xf32, #tpu.memory_space<vmem>>, vector<128x128xf32>
    %cst_38 = arith.constant dense<0.000000e+00> : vector<1x128xf32>
    %44 = tpu.matmul %42, %43, %cst_38 {dimension_numbers = #tpu.dot_dimension_numbers<[1], [0], [0], [1], [0, 0, 1, 1], [], []>} : vector<1x128xf32>, vector<128x128xf32>, vector<1x128xf32> -> vector<1x128xf32>
    %c9 = arith.constant 9 : index
    %c0_39 = arith.constant 0 : index
    %45 = vector.load %arg1[%c9, %c0_39] : memref<16x128xf32, #tpu.memory_space<vmem>>, vector<1x128xf32>
    %46 = arith.addf %44, %45 : vector<1x128xf32>
    %cst_40 = arith.constant 0.000000e+00 : f32
    %47 = vector.broadcast %cst_40 : f32 to vector<1x128xf32>
    %48 = arith.maximumf %46, %47 : vector<1x128xf32>
    %c1408 = arith.constant 1408 : index
    %c0_41 = arith.constant 0 : index
    %49 = vector.load %arg0[%c1408, %c0_41] : memref<2560x128xf32, #tpu.memory_space<vmem>>, vector<128x128xf32>
    %cst_42 = arith.constant dense<0.000000e+00> : vector<1x128xf32>
    %50 = tpu.matmul %48, %49, %cst_42 {dimension_numbers = #tpu.dot_dimension_numbers<[1], [0], [0], [1], [0, 0, 1, 1], [], []>} : vector<1x128xf32>, vector<128x128xf32>, vector<1x128xf32> -> vector<1x128xf32>
    %c10 = arith.constant 10 : index
    %c0_43 = arith.constant 0 : index
    %51 = vector.load %arg1[%c10, %c0_43] : memref<16x128xf32, #tpu.memory_space<vmem>>, vector<1x128xf32>
    %52 = arith.addf %50, %51 : vector<1x128xf32>
    %c6 = arith.constant 6 : index
    %c0_44 = arith.constant 0 : index
    %53 = vector.load %arg4[%c6, %c0_44] : memref<7x128xf32, #tpu.memory_space<vmem>>, vector<1x128xf32>
    tpu.vector_store %arg4[%c6, %c0_44], %52 {strides = array<i32>} : memref<7x128xf32, #tpu.memory_space<vmem>>, vector<1x128xf32>,
    %c0_45 = arith.constant 0 : index
    %c0_46 = arith.constant 0 : index
    %54 = vector.load %arg4[%c0_45, %c0_46] : memref<7x128xf32, #tpu.memory_space<vmem>>, vector<7x128xf32>
    %cst_47 = arith.constant 0.000000e+00 : f32
    %55 = vector.broadcast %cst_47 : f32 to vector<7x128xf32>
    %c1536 = arith.constant 1536 : index
    %c0_48 = arith.constant 0 : index
    %56 = vector.load %arg0[%c1536, %c0_48] : memref<2560x128xf32, #tpu.memory_space<vmem>>, vector<128x128xf32>
    %cst_49 = arith.constant dense<0.000000e+00> : vector<7x128xf32>
    %57 = tpu.matmul %54, %56, %cst_49 {dimension_numbers = #tpu.dot_dimension_numbers<[1], [0], [0], [1], [0, 0, 1, 1], [], []>} : vector<7x128xf32>, vector<128x128xf32>, vector<7x128xf32> -> vector<7x128xf32>
    %cst_50 = arith.constant dense<0.000000e+00> : vector<7x7xf32>
    %58 = tpu.matmul %57, %54, %cst_50 {dimension_numbers = #tpu.dot_dimension_numbers<[1], [1], [0], [0], [0, 0, 1, 0], [], []>} : vector<7x128xf32>, vector<7x128xf32>, vector<7x7xf32> -> vector<7x7xf32>
    %cst_51 = arith.constant dense<0xFF800000> : vector<7xf32>
    %59 = vector.multi_reduction <maximumf>, %58, %cst_51 [1] : vector<7x7xf32> to vector<7xf32>
    %60 = vector.shape_cast %59 : vector<7xf32> to vector<7x1xf32>
    %61 = vector.broadcast %60 : vector<7x1xf32> to vector<7x7xf32>
    %62 = arith.subf %58, %61 : vector<7x7xf32>
    %63 = math.exp %62 : vector<7x7xf32>
    %cst_52 = arith.constant dense<0.000000e+00> : vector<7xf32>
    %64 = vector.multi_reduction <add>, %63, %cst_52 [1] : vector<7x7xf32> to vector<7xf32>
    %65 = vector.shape_cast %64 : vector<7xf32> to vector<7x1xf32>
    %66 = vector.broadcast %65 : vector<7x1xf32> to vector<7x7xf32>
    %67 = arith.divf %63, %66 : vector<7x7xf32>
    %c1664 = arith.constant 1664 : index
    %c0_53 = arith.constant 0 : index
    %68 = vector.load %arg0[%c1664, %c0_53] : memref<2560x128xf32, #tpu.memory_space<vmem>>, vector<128x128xf32>
    %cst_54 = arith.constant dense<0.000000e+00> : vector<7x128xf32>
    %69 = tpu.matmul %54, %68, %cst_54 {dimension_numbers = #tpu.dot_dimension_numbers<[1], [0], [0], [1], [0, 0, 1, 1], [], []>} : vector<7x128xf32>, vector<128x128xf32>, vector<7x128xf32> -> vector<7x128xf32>
    %cst_55 = arith.constant dense<0.000000e+00> : vector<7x128xf32>
    %70 = tpu.matmul %67, %69, %cst_55 {dimension_numbers = #tpu.dot_dimension_numbers<[1], [0], [0], [1], [0, 0, 1, 1], [], []>} : vector<7x7xf32>, vector<7x128xf32>, vector<7x128xf32> -> vector<7x128xf32>
    %71 = arith.addf %55, %70 : vector<7x128xf32>
    %c1792 = arith.constant 1792 : index
    %c0_56 = arith.constant 0 : index
    %72 = vector.load %arg0[%c1792, %c0_56] : memref<2560x128xf32, #tpu.memory_space<vmem>>, vector<128x128xf32>
    %cst_57 = arith.constant dense<0.000000e+00> : vector<7x128xf32>
    %73 = tpu.matmul %54, %72, %cst_57 {dimension_numbers = #tpu.dot_dimension_numbers<[1], [0], [0], [1], [0, 0, 1, 1], [], []>} : vector<7x128xf32>, vector<128x128xf32>, vector<7x128xf32> -> vector<7x128xf32>
    %cst_58 = arith.constant dense<0.000000e+00> : vector<7x7xf32>
    %74 = tpu.matmul %73, %54, %cst_58 {dimension_numbers = #tpu.dot_dimension_numbers<[1], [1], [0], [0], [0, 0, 1, 0], [], []>} : vector<7x128xf32>, vector<7x128xf32>, vector<7x7xf32> -> vector<7x7xf32>
    %cst_59 = arith.constant dense<0xFF800000> : vector<7xf32>
    %75 = vector.multi_reduction <maximumf>, %74, %cst_59 [1] : vector<7x7xf32> to vector<7xf32>
    %76 = vector.shape_cast %75 : vector<7xf32> to vector<7x1xf32>
    %77 = vector.broadcast %76 : vector<7x1xf32> to vector<7x7xf32>
    %78 = arith.subf %74, %77 : vector<7x7xf32>
    %79 = math.exp %78 : vector<7x7xf32>
    %cst_60 = arith.constant dense<0.000000e+00> : vector<7xf32>
    %80 = vector.multi_reduction <add>, %79, %cst_60 [1] : vector<7x7xf32> to vector<7xf32>
    %81 = vector.shape_cast %80 : vector<7xf32> to vector<7x1xf32>
    %82 = vector.broadcast %81 : vector<7x1xf32> to vector<7x7xf32>
    %83 = arith.divf %79, %82 : vector<7x7xf32>
    %c1920 = arith.constant 1920 : index
    %c0_61 = arith.constant 0 : index
    %84 = vector.load %arg0[%c1920, %c0_61] : memref<2560x128xf32, #tpu.memory_space<vmem>>, vector<128x128xf32>
    %cst_62 = arith.constant dense<0.000000e+00> : vector<7x128xf32>
    %85 = tpu.matmul %54, %84, %cst_62 {dimension_numbers = #tpu.dot_dimension_numbers<[1], [0], [0], [1], [0, 0, 1, 1], [], []>} : vector<7x128xf32>, vector<128x128xf32>, vector<7x128xf32> -> vector<7x128xf32>
    %cst_63 = arith.constant dense<0.000000e+00> : vector<7x128xf32>
    %86 = tpu.matmul %83, %85, %cst_63 {dimension_numbers = #tpu.dot_dimension_numbers<[1], [0], [0], [1], [0, 0, 1, 1], [], []>} : vector<7x7xf32>, vector<7x128xf32>, vector<7x128xf32> -> vector<7x128xf32>
    %87 = arith.addf %71, %86 : vector<7x128xf32>
    %88 = arith.addf %54, %87 : vector<7x128xf32>
    %c2048 = arith.constant 2048 : index
    %c0_64 = arith.constant 0 : index
    %89 = vector.load %arg0[%c2048, %c0_64] : memref<2560x128xf32, #tpu.memory_space<vmem>>, vector<128x128xf32>
    %cst_65 = arith.constant dense<0.000000e+00> : vector<7x128xf32>
    %90 = tpu.matmul %88, %89, %cst_65 {dimension_numbers = #tpu.dot_dimension_numbers<[1], [0], [0], [1], [0, 0, 1, 1], [], []>} : vector<7x128xf32>, vector<128x128xf32>, vector<7x128xf32> -> vector<7x128xf32>
    %c11 = arith.constant 11 : index
    %c0_66 = arith.constant 0 : index
    %91 = vector.load %arg1[%c11, %c0_66] : memref<16x128xf32, #tpu.memory_space<vmem>>, vector<1x128xf32>
    %92 = vector.broadcast %91 : vector<1x128xf32> to vector<7x128xf32>
    %93 = arith.addf %90, %92 : vector<7x128xf32>
    %cst_67 = arith.constant 0.000000e+00 : f32
    %94 = vector.broadcast %cst_67 : f32 to vector<7x128xf32>
    %95 = arith.maximumf %93, %94 : vector<7x128xf32>
    %96 = arith.addf %54, %95 : vector<7x128xf32>
    %cst_68 = arith.constant 0.000000e+00 : f32
    %97 = vector.broadcast %cst_68 : f32 to vector<7x128xf32>
    %c1536_69 = arith.constant 1536 : index
    %c0_70 = arith.constant 0 : index
    %98 = vector.load %arg0[%c1536_69, %c0_70] : memref<2560x128xf32, #tpu.memory_space<vmem>>, vector<128x128xf32>
    %cst_71 = arith.constant dense<0.000000e+00> : vector<7x128xf32>
    %99 = tpu.matmul %96, %98, %cst_71 {dimension_numbers = #tpu.dot_dimension_numbers<[1], [0], [0], [1], [0, 0, 1, 1], [], []>} : vector<7x128xf32>, vector<128x128xf32>, vector<7x128xf32> -> vector<7x128xf32>
    %cst_72 = arith.constant dense<0.000000e+00> : vector<7x7xf32>
    %100 = tpu.matmul %99, %96, %cst_72 {dimension_numbers = #tpu.dot_dimension_numbers<[1], [1], [0], [0], [0, 0, 1, 0], [], []>} : vector<7x128xf32>, vector<7x128xf32>, vector<7x7xf32> -> vector<7x7xf32>
    %cst_73 = arith.constant dense<0xFF800000> : vector<7xf32>
    %101 = vector.multi_reduction <maximumf>, %100, %cst_73 [1] : vector<7x7xf32> to vector<7xf32>
    %102 = vector.shape_cast %101 : vector<7xf32> to vector<7x1xf32>
    %103 = vector.broadcast %102 : vector<7x1xf32> to vector<7x7xf32>
    %104 = arith.subf %100, %103 : vector<7x7xf32>
    %105 = math.exp %104 : vector<7x7xf32>
    %cst_74 = arith.constant dense<0.000000e+00> : vector<7xf32>
    %106 = vector.multi_reduction <add>, %105, %cst_74 [1] : vector<7x7xf32> to vector<7xf32>
    %107 = vector.shape_cast %106 : vector<7xf32> to vector<7x1xf32>
    %108 = vector.broadcast %107 : vector<7x1xf32> to vector<7x7xf32>
    %109 = arith.divf %105, %108 : vector<7x7xf32>
    %c1664_75 = arith.constant 1664 : index
    %c0_76 = arith.constant 0 : index
    %110 = vector.load %arg0[%c1664_75, %c0_76] : memref<2560x128xf32, #tpu.memory_space<vmem>>, vector<128x128xf32>
    %cst_77 = arith.constant dense<0.000000e+00> : vector<7x128xf32>
    %111 = tpu.matmul %96, %110, %cst_77 {dimension_numbers = #tpu.dot_dimension_numbers<[1], [0], [0], [1], [0, 0, 1, 1], [], []>} : vector<7x128xf32>, vector<128x128xf32>, vector<7x128xf32> -> vector<7x128xf32>
    %cst_78 = arith.constant dense<0.000000e+00> : vector<7x128xf32>
    %112 = tpu.matmul %109, %111, %cst_78 {dimension_numbers = #tpu.dot_dimension_numbers<[1], [0], [0], [1], [0, 0, 1, 1], [], []>} : vector<7x7xf32>, vector<7x128xf32>, vector<7x128xf32> -> vector<7x128xf32>
    %113 = arith.addf %97, %112 : vector<7x128xf32>
    %c1792_79 = arith.constant 1792 : index
    %c0_80 = arith.constant 0 : index
    %114 = vector.load %arg0[%c1792_79, %c0_80] : memref<2560x128xf32, #tpu.memory_space<vmem>>, vector<128x128xf32>
    %cst_81 = arith.constant dense<0.000000e+00> : vector<7x128xf32>
    %115 = tpu.matmul %96, %114, %cst_81 {dimension_numbers = #tpu.dot_dimension_numbers<[1], [0], [0], [1], [0, 0, 1, 1], [], []>} : vector<7x128xf32>, vector<128x128xf32>, vector<7x128xf32> -> vector<7x128xf32>
    %cst_82 = arith.constant dense<0.000000e+00> : vector<7x7xf32>
    %116 = tpu.matmul %115, %96, %cst_82 {dimension_numbers = #tpu.dot_dimension_numbers<[1], [1], [0], [0], [0, 0, 1, 0], [], []>} : vector<7x128xf32>, vector<7x128xf32>, vector<7x7xf32> -> vector<7x7xf32>
    %cst_83 = arith.constant dense<0xFF800000> : vector<7xf32>
    %117 = vector.multi_reduction <maximumf>, %116, %cst_83 [1] : vector<7x7xf32> to vector<7xf32>
    %118 = vector.shape_cast %117 : vector<7xf32> to vector<7x1xf32>
    %119 = vector.broadcast %118 : vector<7x1xf32> to vector<7x7xf32>
    %120 = arith.subf %116, %119 : vector<7x7xf32>
    %121 = math.exp %120 : vector<7x7xf32>
    %cst_84 = arith.constant dense<0.000000e+00> : vector<7xf32>
    %122 = vector.multi_reduction <add>, %121, %cst_84 [1] : vector<7x7xf32> to vector<7xf32>
    %123 = vector.shape_cast %122 : vector<7xf32> to vector<7x1xf32>
    %124 = vector.broadcast %123 : vector<7x1xf32> to vector<7x7xf32>
    %125 = arith.divf %121, %124 : vector<7x7xf32>
    %c1920_85 = arith.constant 1920 : index
    %c0_86 = arith.constant 0 : index
    %126 = vector.load %arg0[%c1920_85, %c0_86] : memref<2560x128xf32, #tpu.memory_space<vmem>>, vector<128x128xf32>
    %cst_87 = arith.constant dense<0.000000e+00> : vector<7x128xf32>
    %127 = tpu.matmul %96, %126, %cst_87 {dimension_numbers = #tpu.dot_dimension_numbers<[1], [0], [0], [1], [0, 0, 1, 1], [], []>} : vector<7x128xf32>, vector<128x128xf32>, vector<7x128xf32> -> vector<7x128xf32>
    %cst_88 = arith.constant dense<0.000000e+00> : vector<7x128xf32>
    %128 = tpu.matmul %125, %127, %cst_88 {dimension_numbers = #tpu.dot_dimension_numbers<[1], [0], [0], [1], [0, 0, 1, 1], [], []>} : vector<7x7xf32>, vector<7x128xf32>, vector<7x128xf32> -> vector<7x128xf32>
    %129 = arith.addf %113, %128 : vector<7x128xf32>
    %130 = arith.addf %96, %129 : vector<7x128xf32>
    %c2048_89 = arith.constant 2048 : index
    %c0_90 = arith.constant 0 : index
    %131 = vector.load %arg0[%c2048_89, %c0_90] : memref<2560x128xf32, #tpu.memory_space<vmem>>, vector<128x128xf32>
    %cst_91 = arith.constant dense<0.000000e+00> : vector<7x128xf32>
    %132 = tpu.matmul %130, %131, %cst_91 {dimension_numbers = #tpu.dot_dimension_numbers<[1], [0], [0], [1], [0, 0, 1, 1], [], []>} : vector<7x128xf32>, vector<128x128xf32>, vector<7x128xf32> -> vector<7x128xf32>
    %c11_92 = arith.constant 11 : index
    %c0_93 = arith.constant 0 : index
    %133 = vector.load %arg1[%c11_92, %c0_93] : memref<16x128xf32, #tpu.memory_space<vmem>>, vector<1x128xf32>
    %134 = vector.broadcast %133 : vector<1x128xf32> to vector<7x128xf32>
    %135 = arith.addf %132, %134 : vector<7x128xf32>
    %cst_94 = arith.constant 0.000000e+00 : f32
    %136 = vector.broadcast %cst_94 : f32 to vector<7x128xf32>
    %137 = arith.maximumf %135, %136 : vector<7x128xf32>
    %138 = arith.addf %96, %137 : vector<7x128xf32>
    %cst_95 = arith.constant dense<0.000000e+00> : vector<128xf32>
    %139 = vector.multi_reduction <add>, %138, %cst_95 [0] : vector<7x128xf32> to vector<128xf32>
    %140 = vector.shape_cast %139 : vector<128xf32> to vector<1x128xf32>
    %cst_96 = arith.constant 7.000000e+00 : f32
    %141 = vector.broadcast %cst_96 : f32 to vector<1x128xf32>
    %142 = arith.divf %140, %141 : vector<1x128xf32>
    %c2176 = arith.constant 2176 : index
    %c0_97 = arith.constant 0 : index
    %143 = vector.load %arg0[%c2176, %c0_97] : memref<2560x128xf32, #tpu.memory_space<vmem>>, vector<128x128xf32>
    %cst_98 = arith.constant dense<0.000000e+00> : vector<1x128xf32>
    %144 = tpu.matmul %142, %143, %cst_98 {dimension_numbers = #tpu.dot_dimension_numbers<[1], [0], [0], [1], [0, 0, 1, 1], [], []>} : vector<1x128xf32>, vector<128x128xf32>, vector<1x128xf32> -> vector<1x128xf32>
    %c12 = arith.constant 12 : index
    %c0_99 = arith.constant 0 : index
    %145 = vector.load %arg1[%c12, %c0_99] : memref<16x128xf32, #tpu.memory_space<vmem>>, vector<1x128xf32>
    %146 = arith.addf %144, %145 : vector<1x128xf32>
    %147 = vector.extract_strided_slice %138 {offsets = [0, 0], sizes = [1, 128], strides = [1, 1]} : vector<7x128xf32> to vector<1x128xf32>
    %c2304 = arith.constant 2304 : index
    %c0_100 = arith.constant 0 : index
    %148 = vector.load %arg0[%c2304, %c0_100] : memref<2560x128xf32, #tpu.memory_space<vmem>>, vector<128x128xf32>
    %cst_101 = arith.constant dense<0.000000e+00> : vector<1x128xf32>
    %149 = tpu.matmul %147, %148, %cst_101 {dimension_numbers = #tpu.dot_dimension_numbers<[1], [0], [0], [1], [0, 0, 1, 1], [], []>} : vector<1x128xf32>, vector<128x128xf32>, vector<1x128xf32> -> vector<1x128xf32>
    %c2432 = arith.constant 2432 : index
    %c0_102 = arith.constant 0 : index
    %150 = vector.load %arg0[%c2432, %c0_102] : memref<2560x128xf32, #tpu.memory_space<vmem>>, vector<128x128xf32>
    %cst_103 = arith.constant dense<0.000000e+00> : vector<1x128xf32>
    %151 = tpu.matmul %146, %150, %cst_103 {dimension_numbers = #tpu.dot_dimension_numbers<[1], [0], [0], [1], [0, 0, 1, 1], [], []>} : vector<1x128xf32>, vector<128x128xf32>, vector<1x128xf32> -> vector<1x128xf32>
    %152 = arith.addf %149, %151 : vector<1x128xf32>
    %c13 = arith.constant 13 : index
    %c0_104 = arith.constant 0 : index
    %153 = vector.load %arg1[%c13, %c0_104] : memref<16x128xf32, #tpu.memory_space<vmem>>, vector<1x128xf32>
    %154 = arith.addf %152, %153 : vector<1x128xf32>
    %c0_105 = arith.constant 0 : index
    %c0_106 = arith.constant 0 : index
    %155 = vector.load %arg3[%c0_105, %c0_106] : memref<8x128xf32, #tpu.memory_space<vmem>>, vector<1x128xf32>
    tpu.vector_store %arg3[%c0_105, %c0_106], %154 {strides = array<i32>} : memref<8x128xf32, #tpu.memory_space<vmem>>, vector<1x128xf32>,
    %c384 = arith.constant 384 : index
    %c0_107 = arith.constant 0 : index
    %156 = vector.load %arg0[%c384, %c0_107] : memref<2560x128xf32, #tpu.memory_space<vmem>>, vector<128x128xf32>
    %cst_108 = arith.constant dense<0.000000e+00> : vector<1x128xf32>
    %157 = tpu.matmul %146, %156, %cst_108 {dimension_numbers = #tpu.dot_dimension_numbers<[1], [0], [0], [1], [0, 0, 1, 1], [], []>} : vector<1x128xf32>, vector<128x128xf32>, vector<1x128xf32> -> vector<1x128xf32>
    %c3_109 = arith.constant 3 : index
    %c0_110 = arith.constant 0 : index
    %158 = vector.load %arg1[%c3_109, %c0_110] : memref<16x128xf32, #tpu.memory_space<vmem>>, vector<1x128xf32>
    %159 = arith.addf %157, %158 : vector<1x128xf32>
    %160 = vector.extract_strided_slice %138 {offsets = [1, 0], sizes = [2, 128], strides = [1, 1]} : vector<7x128xf32> to vector<2x128xf32>
    %c256 = arith.constant 256 : index
    %c0_111 = arith.constant 0 : index
    %161 = vector.load %arg0[%c256, %c0_111] : memref<2560x128xf32, #tpu.memory_space<vmem>>, vector<128x128xf32>
    %cst_112 = arith.constant dense<0.000000e+00> : vector<2x128xf32>
    %162 = tpu.matmul %160, %161, %cst_112 {dimension_numbers = #tpu.dot_dimension_numbers<[1], [0], [0], [1], [0, 0, 1, 1], [], []>} : vector<2x128xf32>, vector<128x128xf32>, vector<2x128xf32> -> vector<2x128xf32>
    %163 = vector.broadcast %159 : vector<1x128xf32> to vector<2x128xf32>
    %164 = arith.addf %162, %163 : vector<2x128xf32>
    %c1_113 = arith.constant 1 : index
    %c0_114 = arith.constant 0 : index
    %165 = vector.load %arg3[%c1_113, %c0_114] : memref<8x128xf32, #tpu.memory_space<vmem>>, vector<2x128xf32>
    tpu.vector_store %arg3[%c1_113, %c0_114], %164 {strides = array<i32>} : memref<8x128xf32, #tpu.memory_space<vmem>>, vector<2x128xf32>,
    %c896 = arith.constant 896 : index
    %c0_115 = arith.constant 0 : index
    %166 = vector.load %arg0[%c896, %c0_115] : memref<2560x128xf32, #tpu.memory_space<vmem>>, vector<128x128xf32>
    %cst_116 = arith.constant dense<0.000000e+00> : vector<1x128xf32>
    %167 = tpu.matmul %146, %166, %cst_116 {dimension_numbers = #tpu.dot_dimension_numbers<[1], [0], [0], [1], [0, 0, 1, 1], [], []>} : vector<1x128xf32>, vector<128x128xf32>, vector<1x128xf32> -> vector<1x128xf32>
    %c6_117 = arith.constant 6 : index
    %c0_118 = arith.constant 0 : index
    %168 = vector.load %arg1[%c6_117, %c0_118] : memref<16x128xf32, #tpu.memory_space<vmem>>, vector<1x128xf32>
    %169 = arith.addf %167, %168 : vector<1x128xf32>
    %170 = vector.extract_strided_slice %138 {offsets = [3, 0], sizes = [1, 128], strides = [1, 1]} : vector<7x128xf32> to vector<1x128xf32>
    %c768 = arith.constant 768 : index
    %c0_119 = arith.constant 0 : index
    %171 = vector.load %arg0[%c768, %c0_119] : memref<2560x128xf32, #tpu.memory_space<vmem>>, vector<128x128xf32>
    %cst_120 = arith.constant dense<0.000000e+00> : vector<1x128xf32>
    %172 = tpu.matmul %170, %171, %cst_120 {dimension_numbers = #tpu.dot_dimension_numbers<[1], [0], [0], [1], [0, 0, 1, 1], [], []>} : vector<1x128xf32>, vector<128x128xf32>, vector<1x128xf32> -> vector<1x128xf32>
    %173 = arith.addf %172, %169 : vector<1x128xf32>
    %c3_121 = arith.constant 3 : index
    %c0_122 = arith.constant 0 : index
    %174 = vector.load %arg3[%c3_121, %c0_122] : memref<8x128xf32, #tpu.memory_space<vmem>>, vector<1x128xf32>
    tpu.vector_store %arg3[%c3_121, %c0_122], %173 {strides = array<i32>} : memref<8x128xf32, #tpu.memory_space<vmem>>, vector<1x128xf32>,
    %cst_123 = arith.constant 0.000000e+00 : f32
    %175 = vector.broadcast %cst_123 : f32 to vector<4x128xf32>
    %c4_124 = arith.constant 4 : index
    %c0_125 = arith.constant 0 : index
    %176 = vector.load %arg3[%c4_124, %c0_125] : memref<8x128xf32, #tpu.memory_space<vmem>>, vector<4x128xf32>
    tpu.vector_store %arg3[%c4_124, %c0_125], %175 {strides = array<i32>} : memref<8x128xf32, #tpu.memory_space<vmem>>, vector<4x128xf32>,
    return
  }
}

</mosaic_0001>

<llo_original>
// kernel: tpu_custom_call.1
$region0: #{tpu_custom_call.1}
  #allocation0 [shape = 'u32[]', space=smem, size = 0x4, offset = 0x4, fixed_abs, tag = 'smem constant byte address 0x4 - core index']
  #allocation1 [shape = 'u32[144,128]{1,0:T(1,128)}', space=vmem, size = 0x12000, scoped, tag = 'internal scratch']
  #allocation2 [shape = 'f32[7,128]{1,0:T(8,128)}', space=vmem, size = 0x1000, scoped, tag = 'scratch operand']
  %s0 = inlined_call_operand.hbm [shape: f32[2560,128], index: 0, kind: input, shape index: {}]
  %s1 = inlined_call_operand.hbm [shape: f32[16,128], index: 1, kind: input, shape index: {}]
  %s2 = inlined_call_operand.hbm [shape: f32[8,128], index: 2, kind: input, shape index: {}]
  %s3 = inlined_call_operand.hbm [shape: f32[8,128], index: 3, kind: output, shape index: {}]
  %s4 = sld [smem:[#allocation0]]
  $region34: #{tpu_custom_call.1} parent=0
    _
  %s6 = ssub.s32 1, %s4
  %s7 = scalar_select 0, %s6, %s4
  $region1: #{tpu_custom_call.1} parent=0
    #allocation3 [shape = 'u8[1310720]{0}', space=vmem, size = 0x140000, scoped, tag = 'input window, operand 0, single buffered']
    #allocation4 [shape = 's32[1]{0}', space=sflag, size = 0x4, scoped, tag = 'scoped memory for tpu_custom_call.1']
    #allocation5 [shape = 's32[1]{0}', space=sflag, size = 0x4, scoped, tag = 'scoped memory for tpu_custom_call.1']
    #allocation6 [shape = 'u8[8192]{0}', space=vmem, size = 0x2000, scoped, tag = 'input window, operand 1, single buffered']
    #allocation7 [shape = 's32[1]{0}', space=sflag, size = 0x4, scoped, tag = 'scoped memory for tpu_custom_call.1']
    #allocation8 [shape = 'u8[4096]{0}', space=vmem, size = 0x1000, scoped, tag = 'input window, operand 2, single buffered']
    #allocation9 [shape = 'u8[4096]{0}', space=vmem, size = 0x1000, scoped, tag = 'output window, operand 0, single buffered']
    %8 = vsyncpa [#allocation4], 0
    %9 = vsyncpa [#allocation7], 0
    %10 = vsyncpa [#allocation5], 0
    // Predicated region
    $region2: #{tpu_custom_call.1} parent=1 // pred_check
      _
    $region3: #{tpu_custom_call.1} parent=1 // pred_check_branch
      %12 = sbr.rel (0) target = $region5
    $region4: #{tpu_custom_call.1} parent=1 // pred_region
      %s14 = ssub.s32 40960, 40960
      %15 = vsyncadd [#allocation4], %s14
      %s16 = sshll.u32 [#allocation3], 4
      %s17 = int_to_ptr.vmem [resolvable:$true] %s16
      %22 = dma.hbm_to_vmem [thread:$0]  %s0, 40960, %s17, [#allocation4], 128, 128, 8
    $region5: #{tpu_custom_call.1} parent=1 // pred_fallthru
      _
    // Predicated region
    $region6: #{tpu_custom_call.1} parent=1 // pred_check
      _
    $region7: #{tpu_custom_call.1} parent=1 // pred_check_branch
      %24 = sbr.rel (0) target = $region9
    $region8: #{tpu_custom_call.1} parent=1 // pred_region
      %s26 = ssub.s32 256, 256
      %27 = vsyncadd [#allocation7], %s26
      %s28 = sshll.u32 [#allocation6], 4
      %s29 = int_to_ptr.vmem [resolvable:$true] %s28
      %34 = dma.hbm_to_vmem [thread:$0]  %s1, 256, %s29, [#allocation7], 128, 128, 8
    $region9: #{tpu_custom_call.1} parent=1 // pred_fallthru
      _
    // Predicated region
    $region10: #{tpu_custom_call.1} parent=1 // pred_check
      _
    $region11: #{tpu_custom_call.1} parent=1 // pred_check_branch
      %36 = sbr.rel (0) target = $region13
    $region12: #{tpu_custom_call.1} parent=1 // pred_region
      %s38 = ssub.s32 128, 128
      %39 = vsyncadd [#allocation7], %s38
      %s41 = sshll.u32 [#allocation8], 4
      %s42 = int_to_ptr.vmem [resolvable:$true] %s41
      %44 = dma.hbm_to_vmem [thread:$0]  %s2, 128, %s42, [#allocation7]
    $region13: #{tpu_custom_call.1} parent=1 // pred_fallthru
      _
    // Predicated region
    $region14: #{tpu_custom_call.1} parent=1 // pred_check
      _
    $region15: #{tpu_custom_call.1} parent=1 // pred_check_branch
      %46 = sbr.rel (0) target = $region17
    $region16: #{tpu_custom_call.1} parent=1 // pred_region
      %47 = dma.done [#allocation4], 40960
    $region17: #{tpu_custom_call.1} parent=1 // pred_fallthru
      _
    // Predicated region
    $region18: #{tpu_custom_call.1} parent=1 // pred_check
      _
    $region19: #{tpu_custom_call.1} parent=1 // pred_check_branch
      %49 = sbr.rel (0) target = $region21
    $region20: #{tpu_custom_call.1} parent=1 // pred_region
      %50 = dma.done [#allocation7], 256
    $region21: #{tpu_custom_call.1} parent=1 // pred_fallthru
      _
    // Predicated region
    $region22: #{tpu_custom_call.1} parent=1 // pred_check
      _
    $region23: #{tpu_custom_call.1} parent=1 // pred_check_branch
      %52 = sbr.rel (0) target = $region25
    $region24: #{tpu_custom_call.1} parent=1 // pred_region
      %53 = dma.done [#allocation7], 128
    $region25: #{tpu_custom_call.1} parent=1 // pred_fallthru
      _
    %v54 = vld [vmem:[#allocation6] sm:$0x1]
    %55 = vst [vmem:[#allocation2] sm:$0x1] %v54
    %v56 = vld [vmem:[#allocation8] sm:$0x3]
    %v57 = vld [vmem:[#allocation3] sm:$0xff]
    %v58 = vld [vmem:[#allocation3 + $0x8] sm:$0xff]
    %v59 = vld [vmem:[#allocation3 + $0x10] sm:$0xff]
    %v60 = vld [vmem:[#allocation3 + $0x18] sm:$0xff]
    %v61 = vld [vmem:[#allocation3 + $0x20] sm:$0xff]
    %v62 = vld [vmem:[#allocation3 + $0x28] sm:$0xff]
    %v63 = vld [vmem:[#allocation3 + $0x30] sm:$0xff]
    %v64 = vld [vmem:[#allocation3 + $0x38] sm:$0xff]
    %v65 = vld [vmem:[#allocation3 + $0x40] sm:$0xff]
    %v66 = vld [vmem:[#allocation3 + $0x48] sm:$0xff]
    %v67 = vld [vmem:[#allocation3 + $0x50] sm:$0xff]
    %v68 = vld [vmem:[#allocation3 + $0x58] sm:$0xff]
    %v69 = vld [vmem:[#allocation3 + $0x60] sm:$0xff]
    %v70 = vld [vmem:[#allocation3 + $0x68] sm:$0xff]
    %v71 = vld [vmem:[#allocation3 + $0x70] sm:$0xff]
    %v72 = vld [vmem:[#allocation3 + $0x78] sm:$0xff]
    %v73 = vld [vmem:[#allocation6 + $0x1] sm:$0x1]
    %v74 = vlaneseq
    %v75 = vshrl.u32 %v74, 7
    %v76 = vsub.s32 0, %v75
    %v77 = vrot.slane %v73, %v76
    %78 = vmatprep.subr.mxu0 0.0
    %79 = vmatpush1.msra.mxu0 %v57
    %80 = vmatprep.subr.mxu0 0.0
    %81 = vmatpush1.msra.mxu0 %v58
    %82 = vmatprep.subr.mxu0 0.0
    %83 = vmatpush1.msra.mxu0 %v59
    %84 = vmatprep.subr.mxu0 0.0
    %85 = vmatpush1.msra.mxu0 %v60
    %86 = vmatprep.subr.mxu0 0.0
    %87 = vmatpush1.msra.mxu0 %v61
    %88 = vmatprep.subr.mxu0 0.0
    %89 = vmatpush1.msra.mxu0 %v62
    %90 = vmatprep.subr.mxu0 0.0
    %91 = vmatpush1.msra.mxu0 %v63
    %92 = vmatprep.subr.mxu0 0.0
    %93 = vmatpush1.msra.mxu0 %v64
    %94 = vmatprep.subr.mxu0 0.0
    %95 = vmatpush1.msra.mxu0 %v65
    %96 = vmatprep.subr.mxu0 0.0
    %97 = vmatpush1.msra.mxu0 %v66
    %98 = vmatprep.subr.mxu0 0.0
    %99 = vmatpush1.msra.mxu0 %v67
    %100 = vmatprep.subr.mxu0 0.0
    %101 = vmatpush1.msra.mxu0 %v68
    %102 = vmatprep.subr.mxu0 0.0
    %103 = vmatpush1.msra.mxu0 %v69
    %104 = vmatprep.subr.mxu0 0.0
    %105 = vmatpush1.msra.mxu0 %v70
    %106 = vmatprep.subr.mxu0 0.0
    %107 = vmatpush1.msra.mxu0 %v71
    %108 = vmatprep.subr.mxu0 0.0
    %109 = vmatpush1.msra.mxu0 %v72
    %110 = vmatprep.subr.mxu0 0.0
    %111 = vmatpush1.msra.mxu0 0.0
    %112 = vmatprep.subr.mxu0 0.0
    %113 = vmatpush1.msra.mxu0 0.0
    %114 = vmatprep.subr.mxu0 0.0
    %115 = vmatpush1.msra.mxu0 0.0
    %116 = vmatprep.subr.mxu0 0.0
    %117 = vmatpush1.msra.mxu0 0.0
    %118 = vmatprep.subr.mxu0 0.0
    %119 = vmatpush1.msra.mxu0 0.0
    %120 = vmatprep.subr.mxu0 0.0
    %121 = vmatpush1.msra.mxu0 0.0
    %122 = vmatprep.subr.mxu0 0.0
    %123 = vmatpush1.msra.mxu0 0.0
    %124 = vmatprep.subr.mxu0 0.0
    %125 = vmatpush1.msra.mxu0 0.0
    %126 = vmatprep.subr.mxu0 0.0
    %127 = vmatpush1.msra.mxu0 0.0
    %128 = vmatprep.subr.mxu0 0.0
    %129 = vmatpush1.msra.mxu0 0.0
    %130 = vmatprep.subr.mxu0 0.0
    %131 = vmatpush1.msra.mxu0 0.0
    %132 = vmatprep.subr.mxu0 0.0
    %133 = vmatpush1.msra.mxu0 0.0
    %134 = vmatprep.subr.mxu0 0.0
    %135 = vmatpush1.msra.mxu0 0.0
    %136 = vmatprep.subr.mxu0 0.0
    %137 = vmatpush1.msra.mxu0 0.0
    %138 = vmatprep.subr.mxu0 0.0
    %139 = vmatpush1.msra.mxu0 0.0
    %140 = vmatprep.subr.mxu0 0.0
    %141 = vmatpush1.msra.mxu0 0.0
    %142 = vmatprep.mubr.f32.mxu0 0.0
    %143 = vmatmul.mubr.f32.gmra.mrb[0].mxu0 %v56
    %v144 = vpop.f32.mrb[0].mxu0
    %v145 = vadd.f32 %v77, %v144
    %v146 = vpop.f32.mrb[0].mxu0
    %147 = vdwg.mxu0
    %v148 = vmax.f32 %v145, 0.0
    %v149 = vld [vmem:[#allocation3 + $0x80] sm:$0xff]
    %v150 = vld [vmem:[#allocation3 + $0x88] sm:$0xff]
    %v151 = vld [vmem:[#allocation3 + $0x90] sm:$0xff]
    %v152 = vld [vmem:[#allocation3 + $0x98] sm:$0xff]
    %v153 = vld [vmem:[#allocation3 + $0xa0] sm:$0xff]
    %v154 = vld [vmem:[#allocation3 + $0xa8] sm:$0xff]
    %v155 = vld [vmem:[#allocation3 + $0xb0] sm:$0xff]
    %v156 = vld [vmem:[#allocation3 + $0xb8] sm:$0xff]
    %v157 = vld [vmem:[#allocation3 + $0xc0] sm:$0xff]
    %v158 = vld [vmem:[#allocation3 + $0xc8] sm:$0xff]
    %v159 = vld [vmem:[#allocation3 + $0xd0] sm:$0xff]
    %v160 = vld [vmem:[#allocation3 + $0xd8] sm:$0xff]
    %v161 = vld [vmem:[#allocation3 + $0xe0] sm:$0xff]
    %v162 = vld [vmem:[#allocation3 + $0xe8] sm:$0xff]
    %v163 = vld [vmem:[#allocation3 + $0xf0] sm:$0xff]
    %v164 = vld [vmem:[#allocation3 + $0xf8] sm:$0xff]
    %v165 = vld [vmem:[#allocation6 + $0x2] sm:$0x1]
    %v166 = vlaneseq
    %v167 = vshrl.u32 %v166, 7
    %v168 = vsub.s32 0, %v167
    %v169 = vrot.slane %v165, %v168
    %170 = vmatprep.subr.mxu0 0.0
    %171 = vmatpush1.msra.mxu0 %v149
    %172 = vmatprep.subr.mxu0 0.0
    %173 = vmatpush1.msra.mxu0 %v150
    %174 = vmatprep.subr.mxu0 0.0
    %175 = vmatpush1.msra.mxu0 %v151
    %176 = vmatprep.subr.mxu0 0.0
    %177 = vmatpush1.msra.mxu0 %v152
    %178 = vmatprep.subr.mxu0 0.0
    %179 = vmatpush1.msra.mxu0 %v153
    %180 = vmatprep.subr.mxu0 0.0
    %181 = vmatpush1.msra.mxu0 %v154
    %182 = vmatprep.subr.mxu0 0.0
    %183 = vmatpush1.msra.mxu0 %v155
    %184 = vmatprep.subr.mxu0 0.0
    %185 = vmatpush1.msra.mxu0 %v156
    %186 = vmatprep.subr.mxu0 0.0
    %187 = vmatpush1.msra.mxu0 %v157
    %188 = vmatprep.subr.mxu0 0.0
    %189 = vmatpush1.msra.mxu0 %v158
    %190 = vmatprep.subr.mxu0 0.0
    %191 = vmatpush1.msra.mxu0 %v159
    %192 = vmatprep.subr.mxu0 0.0
    %193 = vmatpush1.msra.mxu0 %v160
    %194 = vmatprep.subr.mxu0 0.0
    %195 = vmatpush1.msra.mxu0 %v161
    %196 = vmatprep.subr.mxu0 0.0
    %197 = vmatpush1.msra.mxu0 %v162
    %198 = vmatprep.subr.mxu0 0.0
    %199 = vmatpush1.msra.mxu0 %v163
    %200 = vmatprep.subr.mxu0 0.0
    %201 = vmatpush1.msra.mxu0 %v164
    %202 = vmatprep.subr.mxu0 0.0
    %203 = vmatpush1.msra.mxu0 0.0
    %204 = vmatprep.subr.mxu0 0.0
    %205 = vmatpush1.msra.mxu0 0.0
    %206 = vmatprep.subr.mxu0 0.0
    %207 = vmatpush1.msra.mxu0 0.0
    %208 = vmatprep.subr.mxu0 0.0
    %209 = vmatpush1.msra.mxu0 0.0
    %210 = vmatprep.subr.mxu0 0.0
    %211 = vmatpush1.msra.mxu0 0.0
    %212 = vmatprep.subr.mxu0 0.0
    %213 = vmatpush1.msra.mxu0 0.0
    %214 = vmatprep.subr.mxu0 0.0
    %215 = vmatpush1.msra.mxu0 0.0
    %216 = vmatprep.subr.mxu0 0.0
    %217 = vmatpush1.msra.mxu0 0.0
    %218 = vmatprep.subr.mxu0 0.0
    %219 = vmatpush1.msra.mxu0 0.0
    %220 = vmatprep.subr.mxu0 0.0
    %221 = vmatpush1.msra.mxu0 0.0
    %222 = vmatprep.subr.mxu0 0.0
    %223 = vmatpush1.msra.mxu0 0.0
    %224 = vmatprep.subr.mxu0 0.0
    %225 = vmatpush1.msra.mxu0 0.0
    %226 = vmatprep.subr.mxu0 0.0
    %227 = vmatpush1.msra.mxu0 0.0
    %228 = vmatprep.subr.mxu0 0.0
    %229 = vmatpush1.msra.mxu0 0.0
    %230 = vmatprep.subr.mxu0 0.0
    %231 = vmatpush1.msra.mxu0 0.0
    %232 = vmatprep.subr.mxu0 0.0
    %233 = vmatpush1.msra.mxu0 0.0
    %234 = vmatprep.mubr.f32.mxu0 0.0
    %235 = vmatmul.mubr.f32.gmra.mrb[0].mxu0 %v148
    %v236 = vpop.f32.mrb[0].mxu0
    %v237 = vadd.f32 %v169, %v236
    %v238 = vpop.f32.mrb[0].mxu0
    %239 = vdwg.mxu0
    %240 = vst [vmem:[#allocation2 + $0x1] sm:$0x3] %v237
    %v241 = vld [vmem:[#allocation8 + $0x2] sm:$0x1]
    %v242 = vld [vmem:[#allocation3 + $0x200] sm:$0xff]
    %v243 = vld [vmem:[#allocation3 + $0x208] sm:$0xff]
    %v244 = vld [vmem:[#allocation3 + $0x210] sm:$0xff]
    %v245 = vld [vmem:[#allocation3 + $0x218] sm:$0xff]
    %v246 = vld [vmem:[#allocation3 + $0x220] sm:$0xff]
    %v247 = vld [vmem:[#allocation3 + $0x228] sm:$0xff]
    %v248 = vld [vmem:[#allocation3 + $0x230] sm:$0xff]
    %v249 = vld [vmem:[#allocation3 + $0x238] sm:$0xff]
    %v250 = vld [vmem:[#allocation3 + $0x240] sm:$0xff]
    %v251 = vld [vmem:[#allocation3 + $0x248] sm:$0xff]
    %v252 = vld [vmem:[#allocation3 + $0x250] sm:$0xff]
    %v253 = vld [vmem:[#allocation3 + $0x258] sm:$0xff]
    %v254 = vld [vmem:[#allocation3 + $0x260] sm:$0xff]
    %v255 = vld [vmem:[#allocation3 + $0x268] sm:$0xff]
    %v256 = vld [vmem:[#allocation3 + $0x270] sm:$0xff]
    %v257 = vld [vmem:[#allocation3 + $0x278] sm:$0xff]
    %v258 = vld [vmem:[#allocation6 + $0x4] sm:$0x1]
    %259 = vmatprep.subr.mxu0 0.0
    %260 = vmatpush1.msra.mxu0 %v242
    %261 = vmatprep.subr.mxu0 0.0
    %262 = vmatpush1.msra.mxu0 %v243
    %263 = vmatprep.subr.mxu0 0.0
    %264 = vmatpush1.msra.mxu0 %v244
    %265 = vmatprep.subr.mxu0 0.0
    %266 = vmatpush1.msra.mxu0 %v245
    %267 = vmatprep.subr.mxu0 0.0
    %268 = vmatpush1.msra.mxu0 %v246
    %269 = vmatprep.subr.mxu0 0.0
    %270 = vmatpush1.msra.mxu0 %v247
    %271 = vmatprep.subr.mxu0 0.0
    %272 = vmatpush1.msra.mxu0 %v248
    %273 = vmatprep.subr.mxu0 0.0
    %274 = vmatpush1.msra.mxu0 %v249
    %275 = vmatprep.subr.mxu0 0.0
    %276 = vmatpush1.msra.mxu0 %v250
    %277 = vmatprep.subr.mxu0 0.0
    %278 = vmatpush1.msra.mxu0 %v251
    %279 = vmatprep.subr.mxu0 0.0
    %280 = vmatpush1.msra.mxu0 %v252
    %281 = vmatprep.subr.mxu0 0.0
    %282 = vmatpush1.msra.mxu0 %v253
    %283 = vmatprep.subr.mxu0 0.0
    %284 = vmatpush1.msra.mxu0 %v254
    %285 = vmatprep.subr.mxu0 0.0
    %286 = vmatpush1.msra.mxu0 %v255
    %287 = vmatprep.subr.mxu0 0.0
    %288 = vmatpush1.msra.mxu0 %v256
    %289 = vmatprep.subr.mxu0 0.0
    %290 = vmatpush1.msra.mxu0 %v257
    %291 = vmatprep.subr.mxu0 0.0
    %292 = vmatpush1.msra.mxu0 0.0
    %293 = vmatprep.subr.mxu0 0.0
    %294 = vmatpush1.msra.mxu0 0.0
    %295 = vmatprep.subr.mxu0 0.0
    %296 = vmatpush1.msra.mxu0 0.0
    %297 = vmatprep.subr.mxu0 0.0
    %298 = vmatpush1.msra.mxu0 0.0
    %299 = vmatprep.subr.mxu0 0.0
    %300 = vmatpush1.msra.mxu0 0.0
    %301 = vmatprep.subr.mxu0 0.0
    %302 = vmatpush1.msra.mxu0 0.0
    %303 = vmatprep.subr.mxu0 0.0
    %304 = vmatpush1.msra.mxu0 0.0
    %305 = vmatprep.subr.mxu0 0.0
    %306 = vmatpush1.msra.mxu0 0.0
    %307 = vmatprep.subr.mxu0 0.0
    %308 = vmatpush1.msra.mxu0 0.0
    %309 = vmatprep.subr.mxu0 0.0
    %310 = vmatpush1.msra.mxu0 0.0
    %311 = vmatprep.subr.mxu0 0.0
    %312 = vmatpush1.msra.mxu0 0.0
    %313 = vmatprep.subr.mxu0 0.0
    %314 = vmatpush1.msra.mxu0 0.0
    %315 = vmatprep.subr.mxu0 0.0
    %316 = vmatpush1.msra.mxu0 0.0
    %317 = vmatprep.subr.mxu0 0.0
    %318 = vmatpush1.msra.mxu0 0.0
    %319 = vmatprep.subr.mxu0 0.0
    %320 = vmatpush1.msra.mxu0 0.0
    %321 = vmatprep.subr.mxu0 0.0
    %322 = vmatpush1.msra.mxu0 0.0
    %323 = vmatprep.mubr.f32.mxu0 0.0
    %324 = vmatmul.mubr.f32.gmra.mrb[0].mxu0 %v241
    %v325 = vpop.f32.mrb[0].mxu0
    %v326 = vadd.f32 %v258, %v325
    %v327 = vpop.f32.mrb[0].mxu0
    %328 = vdwg.mxu0
    %v329 = vmax.f32 %v326, 0.0
    %v330 = vld [vmem:[#allocation3 + $0x280] sm:$0xff]
    %v331 = vld [vmem:[#allocation3 + $0x288] sm:$0xff]
    %v332 = vld [vmem:[#allocation3 + $0x290] sm:$0xff]
    %v333 = vld [vmem:[#allocation3 + $0x298] sm:$0xff]
    %v334 = vld [vmem:[#allocation3 + $0x2a0] sm:$0xff]
    %v335 = vld [vmem:[#allocation3 + $0x2a8] sm:$0xff]
    %v336 = vld [vmem:[#allocation3 + $0x2b0] sm:$0xff]
    %v337 = vld [vmem:[#allocation3 + $0x2b8] sm:$0xff]
    %v338 = vld [vmem:[#allocation3 + $0x2c0] sm:$0xff]
    %v339 = vld [vmem:[#allocation3 + $0x2c8] sm:$0xff]
    %v340 = vld [vmem:[#allocation3 + $0x2d0] sm:$0xff]
    %v341 = vld [vmem:[#allocation3 + $0x2d8] sm:$0xff]
    %v342 = vld [vmem:[#allocation3 + $0x2e0] sm:$0xff]
    %v343 = vld [vmem:[#allocation3 + $0x2e8] sm:$0xff]
    %v344 = vld [vmem:[#allocation3 + $0x2f0] sm:$0xff]
    %v345 = vld [vmem:[#allocation3 + $0x2f8] sm:$0xff]
    %v346 = vld [vmem:[#allocation6 + $0x5] sm:$0x1]
    %347 = vmatprep.subr.mxu0 0.0
    %348 = vmatpush1.msra.mxu0 %v330
    %349 = vmatprep.subr.mxu0 0.0
    %350 = vmatpush1.msra.mxu0 %v331
    %351 = vmatprep.subr.mxu0 0.0
    %352 = vmatpush1.msra.mxu0 %v332
    %353 = vmatprep.subr.mxu0 0.0
    %354 = vmatpush1.msra.mxu0 %v333
    %355 = vmatprep.subr.mxu0 0.0
    %356 = vmatpush1.msra.mxu0 %v334
    %357 = vmatprep.subr.mxu0 0.0
    %358 = vmatpush1.msra.mxu0 %v335
    %359 = vmatprep.subr.mxu0 0.0
    %360 = vmatpush1.msra.mxu0 %v336
    %361 = vmatprep.subr.mxu0 0.0
    %362 = vmatpush1.msra.mxu0 %v337
    %363 = vmatprep.subr.mxu0 0.0
    %364 = vmatpush1.msra.mxu0 %v338
    %365 = vmatprep.subr.mxu0 0.0
    %366 = vmatpush1.msra.mxu0 %v339
    %367 = vmatprep.subr.mxu0 0.0
    %368 = vmatpush1.msra.mxu0 %v340
    %369 = vmatprep.subr.mxu0 0.0
    %370 = vmatpush1.msra.mxu0 %v341
    %371 = vmatprep.subr.mxu0 0.0
    %372 = vmatpush1.msra.mxu0 %v342
    %373 = vmatprep.subr.mxu0 0.0
    %374 = vmatpush1.msra.mxu0 %v343
    %375 = vmatprep.subr.mxu0 0.0
    %376 = vmatpush1.msra.mxu0 %v344
    %377 = vmatprep.subr.mxu0 0.0
    %378 = vmatpush1.msra.mxu0 %v345
    %379 = vmatprep.subr.mxu0 0.0
    %380 = vmatpush1.msra.mxu0 0.0
    %381 = vmatprep.subr.mxu0 0.0
    %382 = vmatpush1.msra.mxu0 0.0
    %383 = vmatprep.subr.mxu0 0.0
    %384 = vmatpush1.msra.mxu0 0.0
    %385 = vmatprep.subr.mxu0 0.0
    %386 = vmatpush1.msra.mxu0 0.0
    %387 = vmatprep.subr.mxu0 0.0
    %388 = vmatpush1.msra.mxu0 0.0
    %389 = vmatprep.subr.mxu0 0.0
    %390 = vmatpush1.msra.mxu0 0.0
    %391 = vmatprep.subr.mxu0 0.0
    %392 = vmatpush1.msra.mxu0 0.0
    %393 = vmatprep.subr.mxu0 0.0
    %394 = vmatpush1.msra.mxu0 0.0
    %395 = vmatprep.subr.mxu0 0.0
    %396 = vmatpush1.msra.mxu0 0.0
    %397 = vmatprep.subr.mxu0 0.0
    %398 = vmatpush1.msra.mxu0 0.0
    %399 = vmatprep.subr.mxu0 0.0
    %400 = vmatpush1.msra.mxu0 0.0
    %401 = vmatprep.subr.mxu0 0.0
    %402 = vmatpush1.msra.mxu0 0.0
    %403 = vmatprep.subr.mxu0 0.0
    %404 = vmatpush1.msra.mxu0 0.0
    %405 = vmatprep.subr.mxu0 0.0
    %406 = vmatpush1.msra.mxu0 0.0
    %407 = vmatprep.subr.mxu0 0.0
    %408 = vmatpush1.msra.mxu0 0.0
    %409 = vmatprep.subr.mxu0 0.0
    %410 = vmatpush1.msra.mxu0 0.0
    %411 = vmatprep.mubr.f32.mxu0 0.0
    %412 = vmatmul.mubr.f32.gmra.mrb[0].mxu0 %v329
    %v413 = vpop.f32.mrb[0].mxu0
    %v414 = vadd.f32 %v346, %v413
    %v415 = vpop.f32.mrb[0].mxu0
    %416 = vdwg.mxu0
    %417 = vst [vmem:[#allocation2 + $0x3] sm:$0x1] %v414
    %v418 = vld [vmem:[#allocation8 + $0x3] sm:$0x3]
    %v419 = vld [vmem:[#allocation3 + $0x400] sm:$0xff]
    %v420 = vld [vmem:[#allocation3 + $0x408] sm:$0xff]
    %v421 = vld [vmem:[#allocation3 + $0x410] sm:$0xff]
    %v422 = vld [vmem:[#allocation3 + $0x418] sm:$0xff]
    %v423 = vld [vmem:[#allocation3 + $0x420] sm:$0xff]
    %v424 = vld [vmem:[#allocation3 + $0x428] sm:$0xff]
    %v425 = vld [vmem:[#allocation3 + $0x430] sm:$0xff]
    %v426 = vld [vmem:[#allocation3 + $0x438] sm:$0xff]
    %v427 = vld [vmem:[#allocation3 + $0x440] sm:$0xff]
    %v428 = vld [vmem:[#allocation3 + $0x448] sm:$0xff]
    %v429 = vld [vmem:[#allocation3 + $0x450] sm:$0xff]
    %v430 = vld [vmem:[#allocation3 + $0x458] sm:$0xff]
    %v431 = vld [vmem:[#allocation3 + $0x460] sm:$0xff]
    %v432 = vld [vmem:[#allocation3 + $0x468] sm:$0xff]
    %v433 = vld [vmem:[#allocation3 + $0x470] sm:$0xff]
    %v434 = vld [vmem:[#allocation3 + $0x478] sm:$0xff]
    %v435 = vld [vmem:[#allocation6 + $0x7] sm:$0x1]
    %v436 = vlaneseq
    %v437 = vshrl.u32 %v436, 7
    %v438 = vsub.s32 0, %v437
    %v439 = vrot.slane %v435, %v438
    %440 = vmatprep.subr.mxu0 0.0
    %441 = vmatpush1.msra.mxu0 %v419
    %442 = vmatprep.subr.mxu0 0.0
    %443 = vmatpush1.msra.mxu0 %v420
    %444 = vmatprep.subr.mxu0 0.0
    %445 = vmatpush1.msra.mxu0 %v421
    %446 = vmatprep.subr.mxu0 0.0
    %447 = vmatpush1.msra.mxu0 %v422
    %448 = vmatprep.subr.mxu0 0.0
    %449 = vmatpush1.msra.mxu0 %v423
    %450 = vmatprep.subr.mxu0 0.0
    %451 = vmatpush1.msra.mxu0 %v424
    %452 = vmatprep.subr.mxu0 0.0
    %453 = vmatpush1.msra.mxu0 %v425
    %454 = vmatprep.subr.mxu0 0.0
    %455 = vmatpush1.msra.mxu0 %v426
    %456 = vmatprep.subr.mxu0 0.0
    %457 = vmatpush1.msra.mxu0 %v427
    %458 = vmatprep.subr.mxu0 0.0
    %459 = vmatpush1.msra.mxu0 %v428
    %460 = vmatprep.subr.mxu0 0.0
    %461 = vmatpush1.msra.mxu0 %v429
    %462 = vmatprep.subr.mxu0 0.0
    %463 = vmatpush1.msra.mxu0 %v430
    %464 = vmatprep.subr.mxu0 0.0
    %465 = vmatpush1.msra.mxu0 %v431
    %466 = vmatprep.subr.mxu0 0.0
    %467 = vmatpush1.msra.mxu0 %v432
    %468 = vmatprep.subr.mxu0 0.0
    %469 = vmatpush1.msra.mxu0 %v433
    %470 = vmatprep.subr.mxu0 0.0
    %471 = vmatpush1.msra.mxu0 %v434
    %472 = vmatprep.subr.mxu0 0.0
    %473 = vmatpush1.msra.mxu0 0.0
    %474 = vmatprep.subr.mxu0 0.0
    %475 = vmatpush1.msra.mxu0 0.0
    %476 = vmatprep.subr.mxu0 0.0
    %477 = vmatpush1.msra.mxu0 0.0
    %478 = vmatprep.subr.mxu0 0.0
    %479 = vmatpush1.msra.mxu0 0.0
    %480 = vmatprep.subr.mxu0 0.0
    %481 = vmatpush1.msra.mxu0 0.0
    %482 = vmatprep.subr.mxu0 0.0
    %483 = vmatpush1.msra.mxu0 0.0
    %484 = vmatprep.subr.mxu0 0.0
    %485 = vmatpush1.msra.mxu0 0.0
    %486 = vmatprep.subr.mxu0 0.0
    %487 = vmatpush1.msra.mxu0 0.0
    %488 = vmatprep.subr.mxu0 0.0
    %489 = vmatpush1.msra.mxu0 0.0
    %490 = vmatprep.subr.mxu0 0.0
    %491 = vmatpush1.msra.mxu0 0.0
    %492 = vmatprep.subr.mxu0 0.0
    %493 = vmatpush1.msra.mxu0 0.0
    %494 = vmatprep.subr.mxu0 0.0
    %495 = vmatpush1.msra.mxu0 0.0
    %496 = vmatprep.subr.mxu0 0.0
    %497 = vmatpush1.msra.mxu0 0.0
    %498 = vmatprep.subr.mxu0 0.0
    %499 = vmatpush1.msra.mxu0 0.0
    %500 = vmatprep.subr.mxu0 0.0
    %501 = vmatpush1.msra.mxu0 0.0
    %502 = vmatprep.subr.mxu0 0.0
    %503 = vmatpush1.msra.mxu0 0.0
    %504 = vmatprep.mubr.f32.mxu0 0.0
    %505 = vmatmul.mubr.f32.gmra.mrb[0].mxu0 %v418
    %v506 = vpop.f32.mrb[0].mxu0
    %v507 = vadd.f32 %v439, %v506
    %v508 = vpop.f32.mrb[0].mxu0
    %509 = vdwg.mxu0
    %v510 = vmax.f32 %v507, 0.0
    %v511 = vld [vmem:[#allocation3 + $0x480] sm:$0xff]
    %v512 = vld [vmem:[#allocation3 + $0x488] sm:$0xff]
    %v513 = vld [vmem:[#allocation3 + $0x490] sm:$0xff]
    %v514 = vld [vmem:[#allocation3 + $0x498] sm:$0xff]
    %v515 = vld [vmem:[#allocation3 + $0x4a0] sm:$0xff]
    %v516 = vld [vmem:[#allocation3 + $0x4a8] sm:$0xff]
    %v517 = vld [vmem:[#allocation3 + $0x4b0] sm:$0xff]
    %v518 = vld [vmem:[#allocation3 + $0x4b8] sm:$0xff]
    %v519 = vld [vmem:[#allocation3 + $0x4c0] sm:$0xff]
    %v520 = vld [vmem:[#allocation3 + $0x4c8] sm:$0xff]
    %v521 = vld [vmem:[#allocation3 + $0x4d0] sm:$0xff]
    %v522 = vld [vmem:[#allocation3 + $0x4d8] sm:$0xff]
    %v523 = vld [vmem:[#allocation3 + $0x4e0] sm:$0xff]
    %v524 = vld [vmem:[#allocation3 + $0x4e8] sm:$0xff]
    %v525 = vld [vmem:[#allocation3 + $0x4f0] sm:$0xff]
    %v526 = vld [vmem:[#allocation3 + $0x4f8] sm:$0xff]
    %v527 = vld [vmem:[#allocation6 + $0x8] sm:$0x1]
    %v528 = vlaneseq
    %v529 = vshrl.u32 %v528, 7
    %v530 = vsub.s32 0, %v529
    %v531 = vrot.slane %v527, %v530
    %532 = vmatprep.subr.mxu0 0.0
    %533 = vmatpush1.msra.mxu0 %v511
    %534 = vmatprep.subr.mxu0 0.0
    %535 = vmatpush1.msra.mxu0 %v512
    %536 = vmatprep.subr.mxu0 0.0
    %537 = vmatpush1.msra.mxu0 %v513
    %538 = vmatprep.subr.mxu0 0.0
    %539 = vmatpush1.msra.mxu0 %v514
    %540 = vmatprep.subr.mxu0 0.0
    %541 = vmatpush1.msra.mxu0 %v515
    %542 = vmatprep.subr.mxu0 0.0
    %543 = vmatpush1.msra.mxu0 %v516
    %544 = vmatprep.subr.mxu0 0.0
    %545 = vmatpush1.msra.mxu0 %v517
    %546 = vmatprep.subr.mxu0 0.0
    %547 = vmatpush1.msra.mxu0 %v518
    %548 = vmatprep.subr.mxu0 0.0
    %549 = vmatpush1.msra.mxu0 %v519
    %550 = vmatprep.subr.mxu0 0.0
    %551 = vmatpush1.msra.mxu0 %v520
    %552 = vmatprep.subr.mxu0 0.0
    %553 = vmatpush1.msra.mxu0 %v521
    %554 = vmatprep.subr.mxu0 0.0
    %555 = vmatpush1.msra.mxu0 %v522
    %556 = vmatprep.subr.mxu0 0.0
    %557 = vmatpush1.msra.mxu0 %v523
    %558 = vmatprep.subr.mxu0 0.0
    %559 = vmatpush1.msra.mxu0 %v524
    %560 = vmatprep.subr.mxu0 0.0
    %561 = vmatpush1.msra.mxu0 %v525
    %562 = vmatprep.subr.mxu0 0.0
    %563 = vmatpush1.msra.mxu0 %v526
    %564 = vmatprep.subr.mxu0 0.0
    %565 = vmatpush1.msra.mxu0 0.0
    %566 = vmatprep.subr.mxu0 0.0
    %567 = vmatpush1.msra.mxu0 0.0
    %568 = vmatprep.subr.mxu0 0.0
    %569 = vmatpush1.msra.mxu0 0.0
    %570 = vmatprep.subr.mxu0 0.0
    %571 = vmatpush1.msra.mxu0 0.0
    %572 = vmatprep.subr.mxu0 0.0
    %573 = vmatpush1.msra.mxu0 0.0
    %574 = vmatprep.subr.mxu0 0.0
    %575 = vmatpush1.msra.mxu0 0.0
    %576 = vmatprep.subr.mxu0 0.0
    %577 = vmatpush1.msra.mxu0 0.0
    %578 = vmatprep.subr.mxu0 0.0
    %579 = vmatpush1.msra.mxu0 0.0
    %580 = vmatprep.subr.mxu0 0.0
    %581 = vmatpush1.msra.mxu0 0.0
    %582 = vmatprep.subr.mxu0 0.0
    %583 = vmatpush1.msra.mxu0 0.0
    %584 = vmatprep.subr.mxu0 0.0
    %585 = vmatpush1.msra.mxu0 0.0
    %586 = vmatprep.subr.mxu0 0.0
    %587 = vmatpush1.msra.mxu0 0.0
    %588 = vmatprep.subr.mxu0 0.0
    %589 = vmatpush1.msra.mxu0 0.0
    %590 = vmatprep.subr.mxu0 0.0
    %591 = vmatpush1.msra.mxu0 0.0
    %592 = vmatprep.subr.mxu0 0.0
    %593 = vmatpush1.msra.mxu0 0.0
    %594 = vmatprep.subr.mxu0 0.0
    %595 = vmatpush1.msra.mxu0 0.0
    %596 = vmatprep.mubr.f32.mxu0 0.0
    %597 = vmatmul.mubr.f32.gmra.mrb[0].mxu0 %v510
    %v598 = vpop.f32.mrb[0].mxu0
    %v599 = vadd.f32 %v531, %v598
    %v600 = vpop.f32.mrb[0].mxu0
    %601 = vdwg.mxu0
    %602 = vst [vmem:[#allocation2 + $0x4] sm:$0x3] %v599
    %v603 = vld [vmem:[#allocation8 + $0x5] sm:$0x1]
    %v604 = vld [vmem:[#allocation3 + $0x500] sm:$0xff]
    %v605 = vld [vmem:[#allocation3 + $0x508] sm:$0xff]
    %v606 = vld [vmem:[#allocation3 + $0x510] sm:$0xff]
    %v607 = vld [vmem:[#allocation3 + $0x518] sm:$0xff]
    %v608 = vld [vmem:[#allocation3 + $0x520] sm:$0xff]
    %v609 = vld [vmem:[#allocation3 + $0x528] sm:$0xff]
    %v610 = vld [vmem:[#allocation3 + $0x530] sm:$0xff]
    %v611 = vld [vmem:[#allocation3 + $0x538] sm:$0xff]
    %v612 = vld [vmem:[#allocation3 + $0x540] sm:$0xff]
    %v613 = vld [vmem:[#allocation3 + $0x548] sm:$0xff]
    %v614 = vld [vmem:[#allocation3 + $0x550] sm:$0xff]
    %v615 = vld [vmem:[#allocation3 + $0x558] sm:$0xff]
    %v616 = vld [vmem:[#allocation3 + $0x560] sm:$0xff]
    %v617 = vld [vmem:[#allocation3 + $0x568] sm:$0xff]
    %v618 = vld [vmem:[#allocation3 + $0x570] sm:$0xff]
    %v619 = vld [vmem:[#allocation3 + $0x578] sm:$0xff]
    %v620 = vld [vmem:[#allocation6 + $0x9] sm:$0x1]
    %621 = vmatprep.subr.mxu0 0.0
    %622 = vmatpush1.msra.mxu0 %v604
    %623 = vmatprep.subr.mxu0 0.0
    %624 = vmatpush1.msra.mxu0 %v605
    %625 = vmatprep.subr.mxu0 0.0
    %626 = vmatpush1.msra.mxu0 %v606
    %627 = vmatprep.subr.mxu0 0.0
    %628 = vmatpush1.msra.mxu0 %v607
    %629 = vmatprep.subr.mxu0 0.0
    %630 = vmatpush1.msra.mxu0 %v608
    %631 = vmatprep.subr.mxu0 0.0
    %632 = vmatpush1.msra.mxu0 %v609
    %633 = vmatprep.subr.mxu0 0.0
    %634 = vmatpush1.msra.mxu0 %v610
    %635 = vmatprep.subr.mxu0 0.0
    %636 = vmatpush1.msra.mxu0 %v611
    %637 = vmatprep.subr.mxu0 0.0
    %638 = vmatpush1.msra.mxu0 %v612
    %639 = vmatprep.subr.mxu0 0.0
    %640 = vmatpush1.msra.mxu0 %v613
    %641 = vmatprep.subr.mxu0 0.0
    %642 = vmatpush1.msra.mxu0 %v614
    %643 = vmatprep.subr.mxu0 0.0
    %644 = vmatpush1.msra.mxu0 %v615
    %645 = vmatprep.subr.mxu0 0.0
    %646 = vmatpush1.msra.mxu0 %v616
    %647 = vmatprep.subr.mxu0 0.0
    %648 = vmatpush1.msra.mxu0 %v617
    %649 = vmatprep.subr.mxu0 0.0
    %650 = vmatpush1.msra.mxu0 %v618
    %651 = vmatprep.subr.mxu0 0.0
    %652 = vmatpush1.msra.mxu0 %v619
    %653 = vmatprep.subr.mxu0 0.0
    %654 = vmatpush1.msra.mxu0 0.0
    %655 = vmatprep.subr.mxu0 0.0
    %656 = vmatpush1.msra.mxu0 0.0
    %657 = vmatprep.subr.mxu0 0.0
    %658 = vmatpush1.msra.mxu0 0.0
    %659 = vmatprep.subr.mxu0 0.0
    %660 = vmatpush1.msra.mxu0 0.0
    %661 = vmatprep.subr.mxu0 0.0
    %662 = vmatpush1.msra.mxu0 0.0
    %663 = vmatprep.subr.mxu0 0.0
    %664 = vmatpush1.msra.mxu0 0.0
    %665 = vmatprep.subr.mxu0 0.0
    %666 = vmatpush1.msra.mxu0 0.0
    %667 = vmatprep.subr.mxu0 0.0
    %668 = vmatpush1.msra.mxu0 0.0
    %669 = vmatprep.subr.mxu0 0.0
    %670 = vmatpush1.msra.mxu0 0.0
    %671 = vmatprep.subr.mxu0 0.0
    %672 = vmatpush1.msra.mxu0 0.0
    %673 = vmatprep.subr.mxu0 0.0
    %674 = vmatpush1.msra.mxu0 0.0
    %675 = vmatprep.subr.mxu0 0.0
    %676 = vmatpush1.msra.mxu0 0.0
    %677 = vmatprep.subr.mxu0 0.0
    %678 = vmatpush1.msra.mxu0 0.0
    %679 = vmatprep.subr.mxu0 0.0
    %680 = vmatpush1.msra.mxu0 0.0
    %681 = vmatprep.subr.mxu0 0.0
    %682 = vmatpush1.msra.mxu0 0.0
    %683 = vmatprep.subr.mxu0 0.0
    %684 = vmatpush1.msra.mxu0 0.0
    %685 = vmatprep.mubr.f32.mxu0 0.0
    %686 = vmatmul.mubr.f32.gmra.mrb[0].mxu0 %v603
    %v687 = vpop.f32.mrb[0].mxu0
    %v688 = vadd.f32 %v620, %v687
    %v689 = vpop.f32.mrb[0].mxu0
    %690 = vdwg.mxu0
    %v691 = vmax.f32 %v688, 0.0
    %v692 = vld [vmem:[#allocation3 + $0x580] sm:$0xff]
    %v693 = vld [vmem:[#allocation3 + $0x588] sm:$0xff]
    %v694 = vld [vmem:[#allocation3 + $0x590] sm:$0xff]
    %v695 = vld [vmem:[#allocation3 + $0x598] sm:$0xff]
    %v696 = vld [vmem:[#allocation3 + $0x5a0] sm:$0xff]
    %v697 = vld [vmem:[#allocation3 + $0x5a8] sm:$0xff]
    %v698 = vld [vmem:[#allocation3 + $0x5b0] sm:$0xff]
    %v699 = vld [vmem:[#allocation3 + $0x5b8] sm:$0xff]
    %v700 = vld [vmem:[#allocation3 + $0x5c0] sm:$0xff]
    %v701 = vld [vmem:[#allocation3 + $0x5c8] sm:$0xff]
    %v702 = vld [vmem:[#allocation3 + $0x5d0] sm:$0xff]
    %v703 = vld [vmem:[#allocation3 + $0x5d8] sm:$0xff]
    %v704 = vld [vmem:[#allocation3 + $0x5e0] sm:$0xff]
    %v705 = vld [vmem:[#allocation3 + $0x5e8] sm:$0xff]
    %v706 = vld [vmem:[#allocation3 + $0x5f0] sm:$0xff]
    %v707 = vld [vmem:[#allocation3 + $0x5f8] sm:$0xff]
    %v708 = vld [vmem:[#allocation6 + $0xa] sm:$0x1]
    %709 = vmatprep.subr.mxu0 0.0
    %710 = vmatpush1.msra.mxu0 %v692
    %711 = vmatprep.subr.mxu0 0.0
    %712 = vmatpush1.msra.mxu0 %v693
    %713 = vmatprep.subr.mxu0 0.0
    %714 = vmatpush1.msra.mxu0 %v694
    %715 = vmatprep.subr.mxu0 0.0
    %716 = vmatpush1.msra.mxu0 %v695
    %717 = vmatprep.subr.mxu0 0.0
    %718 = vmatpush1.msra.mxu0 %v696
    %719 = vmatprep.subr.mxu0 0.0
    %720 = vmatpush1.msra.mxu0 %v697
    %721 = vmatprep.subr.mxu0 0.0
    %722 = vmatpush1.msra.mxu0 %v698
    %723 = vmatprep.subr.mxu0 0.0
    %724 = vmatpush1.msra.mxu0 %v699
    %725 = vmatprep.subr.mxu0 0.0
    %726 = vmatpush1.msra.mxu0 %v700
    %727 = vmatprep.subr.mxu0 0.0
    %728 = vmatpush1.msra.mxu0 %v701
    %729 = vmatprep.subr.mxu0 0.0
    %730 = vmatpush1.msra.mxu0 %v702
    %731 = vmatprep.subr.mxu0 0.0
    %732 = vmatpush1.msra.mxu0 %v703
    %733 = vmatprep.subr.mxu0 0.0
    %734 = vmatpush1.msra.mxu0 %v704
    %735 = vmatprep.subr.mxu0 0.0
    %736 = vmatpush1.msra.mxu0 %v705
    %737 = vmatprep.subr.mxu0 0.0
    %738 = vmatpush1.msra.mxu0 %v706
    %739 = vmatprep.subr.mxu0 0.0
    %740 = vmatpush1.msra.mxu0 %v707
    %741 = vmatprep.subr.mxu0 0.0
    %742 = vmatpush1.msra.mxu0 0.0
    %743 = vmatprep.subr.mxu0 0.0
    %744 = vmatpush1.msra.mxu0 0.0
    %745 = vmatprep.subr.mxu0 0.0
    %746 = vmatpush1.msra.mxu0 0.0
    %747 = vmatprep.subr.mxu0 0.0
    %748 = vmatpush1.msra.mxu0 0.0
    %749 = vmatprep.subr.mxu0 0.0
    %750 = vmatpush1.msra.mxu0 0.0
    %751 = vmatprep.subr.mxu0 0.0
    %752 = vmatpush1.msra.mxu0 0.0
    %753 = vmatprep.subr.mxu0 0.0
    %754 = vmatpush1.msra.mxu0 0.0
    %755 = vmatprep.subr.mxu0 0.0
    %756 = vmatpush1.msra.mxu0 0.0
    %757 = vmatprep.subr.mxu0 0.0
    %758 = vmatpush1.msra.mxu0 0.0
    %759 = vmatprep.subr.mxu0 0.0
    %760 = vmatpush1.msra.mxu0 0.0
    %761 = vmatprep.subr.mxu0 0.0
    %762 = vmatpush1.msra.mxu0 0.0
    %763 = vmatprep.subr.mxu0 0.0
    %764 = vmatpush1.msra.mxu0 0.0
    %765 = vmatprep.subr.mxu0 0.0
    %766 = vmatpush1.msra.mxu0 0.0
    %767 = vmatprep.subr.mxu0 0.0
    %768 = vmatpush1.msra.mxu0 0.0
    %769 = vmatprep.subr.mxu0 0.0
    %770 = vmatpush1.msra.mxu0 0.0
    %771 = vmatprep.subr.mxu0 0.0
    %772 = vmatpush1.msra.mxu0 0.0
    %773 = vmatprep.mubr.f32.mxu0 0.0
    %774 = vmatmul.mubr.f32.gmra.mrb[0].mxu0 %v691
    %v775 = vpop.f32.mrb[0].mxu0
    %v776 = vadd.f32 %v708, %v775
    %v777 = vpop.f32.mrb[0].mxu0
    %778 = vdwg.mxu0
    %779 = vst [vmem:[#allocation2 + $0x6] sm:$0x1] %v776
    %v780 = vld [vmem:[#allocation2] sm:$0x7f]
    %v781 = vld [vmem:[#allocation3 + $0x600] sm:$0xff]
    %v782 = vld [vmem:[#allocation3 + $0x608] sm:$0xff]
    %v783 = vld [vmem:[#allocation3 + $0x610] sm:$0xff]
    %v784 = vld [vmem:[#allocation3 + $0x618] sm:$0xff]
    %v785 = vld [vmem:[#allocation3 + $0x620] sm:$0xff]
    %v786 = vld [vmem:[#allocation3 + $0x628] sm:$0xff]
    %v787 = vld [vmem:[#allocation3 + $0x630] sm:$0xff]
    %v788 = vld [vmem:[#allocation3 + $0x638] sm:$0xff]
    %v789 = vld [vmem:[#allocation3 + $0x640] sm:$0xff]
    %v790 = vld [vmem:[#allocation3 + $0x648] sm:$0xff]
    %v791 = vld [vmem:[#allocation3 + $0x650] sm:$0xff]
    %v792 = vld [vmem:[#allocation3 + $0x658] sm:$0xff]
    %v793 = vld [vmem:[#allocation3 + $0x660] sm:$0xff]
    %v794 = vld [vmem:[#allocation3 + $0x668] sm:$0xff]
    %v795 = vld [vmem:[#allocation3 + $0x670] sm:$0xff]
    %v796 = vld [vmem:[#allocation3 + $0x678] sm:$0xff]
    %797 = vmatprep.subr.mxu0 0.0
    %798 = vmatpush1.msra.mxu0 %v781
    %799 = vmatprep.subr.mxu0 0.0
    %800 = vmatpush1.msra.mxu0 %v782
    %801 = vmatprep.subr.mxu0 0.0
    %802 = vmatpush1.msra.mxu0 %v783
    %803 = vmatprep.subr.mxu0 0.0
    %804 = vmatpush1.msra.mxu0 %v784
    %805 = vmatprep.subr.mxu0 0.0
    %806 = vmatpush1.msra.mxu0 %v785
    %807 = vmatprep.subr.mxu0 0.0
    %808 = vmatpush1.msra.mxu0 %v786
    %809 = vmatprep.subr.mxu0 0.0
    %810 = vmatpush1.msra.mxu0 %v787
    %811 = vmatprep.subr.mxu0 0.0
    %812 = vmatpush1.msra.mxu0 %v788
    %813 = vmatprep.subr.mxu0 0.0
    %814 = vmatpush1.msra.mxu0 %v789
    %815 = vmatprep.subr.mxu0 0.0
    %816 = vmatpush1.msra.mxu0 %v790
    %817 = vmatprep.subr.mxu0 0.0
    %818 = vmatpush1.msra.mxu0 %v791
    %819 = vmatprep.subr.mxu0 0.0
    %820 = vmatpush1.msra.mxu0 %v792
    %821 = vmatprep.subr.mxu0 0.0
    %822 = vmatpush1.msra.mxu0 %v793
    %823 = vmatprep.subr.mxu0 0.0
    %824 = vmatpush1.msra.mxu0 %v794
    %825 = vmatprep.subr.mxu0 0.0
    %826 = vmatpush1.msra.mxu0 %v795
    %827 = vmatprep.subr.mxu0 0.0
    %828 = vmatpush1.msra.mxu0 %v796
    %829 = vmatprep.subr.mxu0 0.0
    %830 = vmatpush1.msra.mxu0 0.0
    %831 = vmatprep.subr.mxu0 0.0
    %832 = vmatpush1.msra.mxu0 0.0
    %833 = vmatprep.subr.mxu0 0.0
    %834 = vmatpush1.msra.mxu0 0.0
    %835 = vmatprep.subr.mxu0 0.0
    %836 = vmatpush1.msra.mxu0 0.0
    %837 = vmatprep.subr.mxu0 0.0
    %838 = vmatpush1.msra.mxu0 0.0
    %839 = vmatprep.subr.mxu0 0.0
    %840 = vmatpush1.msra.mxu0 0.0
    %841 = vmatprep.subr.mxu0 0.0
    %842 = vmatpush1.msra.mxu0 0.0
    %843 = vmatprep.subr.mxu0 0.0
    %844 = vmatpush1.msra.mxu0 0.0
    %845 = vmatprep.subr.mxu0 0.0
    %846 = vmatpush1.msra.mxu0 0.0
    %847 = vmatprep.subr.mxu0 0.0
    %848 = vmatpush1.msra.mxu0 0.0
    %849 = vmatprep.subr.mxu0 0.0
    %850 = vmatpush1.msra.mxu0 0.0
    %851 = vmatprep.subr.mxu0 0.0
    %852 = vmatpush1.msra.mxu0 0.0
    %853 = vmatprep.subr.mxu0 0.0
    %854 = vmatpush1.msra.mxu0 0.0
    %855 = vmatprep.subr.mxu0 0.0
    %856 = vmatpush1.msra.mxu0 0.0
    %857 = vmatprep.subr.mxu0 0.0
    %858 = vmatpush1.msra.mxu0 0.0
    %859 = vmatprep.subr.mxu0 0.0
    %860 = vmatpush1.msra.mxu0 0.0
    %861 = vmatprep.mubr.f32.mxu0 0.0
    %862 = vmatmul.mubr.f32.gmra.mrb[0].mxu0 %v780
    %v863 = vpop.f32.mrb[0].mxu0
    %v864 = vadd.f32 0.0, %v863
    %v865 = vpop.f32.mrb[0].mxu0
    %866 = vdwg.mxu0
    %867 = vmatprep.subr.mxu0 0.0
    %868 = vmatpush1.xpose.msra.mxu0 %v780
    %869 = vmatprep.subr.mxu0 0.0
    %870 = vmatpush1.xpose.msra.mxu0 0.0
    %871 = vmatprep.subr.mxu0 0.0
    %872 = vmatpush1.xpose.msra.mxu0 0.0
    %873 = vmatprep.subr.mxu0 0.0
    %874 = vmatpush1.xpose.msra.mxu0 0.0
    %875 = vmatprep.subr.mxu0 0.0
    %876 = vmatpush1.xpose.msra.mxu0 0.0
    %877 = vmatprep.subr.mxu0 0.0
    %878 = vmatpush1.xpose.msra.mxu0 0.0
    %879 = vmatprep.subr.mxu0 0.0
    %880 = vmatpush1.xpose.msra.mxu0 0.0
    %881 = vmatprep.subr.mxu0 0.0
    %882 = vmatpush1.xpose.msra.mxu0 0.0
    %883 = vmatprep.subr.mxu0 0.0
    %884 = vmatpush1.xpose.msra.mxu0 0.0
    %885 = vmatprep.subr.mxu0 0.0
    %886 = vmatpush1.xpose.msra.mxu0 0.0
    %887 = vmatprep.subr.mxu0 0.0
    %888 = vmatpush1.xpose.msra.mxu0 0.0
    %889 = vmatprep.subr.mxu0 0.0
    %890 = vmatpush1.xpose.msra.mxu0 0.0
    %891 = vmatprep.subr.mxu0 0.0
    %892 = vmatpush1.xpose.msra.mxu0 0.0
    %893 = vmatprep.subr.mxu0 0.0
    %894 = vmatpush1.xpose.msra.mxu0 0.0
    %895 = vmatprep.subr.mxu0 0.0
    %896 = vmatpush1.xpose.msra.mxu0 0.0
    %897 = vmatprep.subr.mxu0 0.0
    %898 = vmatpush1.xpose.msra.mxu0 0.0
    %899 = vmatprep.subr.mxu0 0.0
    %900 = vmatpush1.xpose.msra.mxu0 0.0
    %901 = vmatprep.subr.mxu0 0.0
    %902 = vmatpush1.xpose.msra.mxu0 0.0
    %903 = vmatprep.subr.mxu0 0.0
    %904 = vmatpush1.xpose.msra.mxu0 0.0
    %905 = vmatprep.subr.mxu0 0.0
    %906 = vmatpush1.xpose.msra.mxu0 0.0
    %907 = vmatprep.subr.mxu0 0.0
    %908 = vmatpush1.xpose.msra.mxu0 0.0
    %909 = vmatprep.subr.mxu0 0.0
    %910 = vmatpush1.xpose.msra.mxu0 0.0
    %911 = vmatprep.subr.mxu0 0.0
    %912 = vmatpush1.xpose.msra.mxu0 0.0
    %913 = vmatprep.subr.mxu0 0.0
    %914 = vmatpush1.xpose.msra.mxu0 0.0
    %915 = vmatprep.subr.mxu0 0.0
    %916 = vmatpush1.xpose.msra.mxu0 0.0
    %917 = vmatprep.subr.mxu0 0.0
    %918 = vmatpush1.xpose.msra.mxu0 0.0
    %919 = vmatprep.subr.mxu0 0.0
    %920 = vmatpush1.xpose.msra.mxu0 0.0
    %921 = vmatprep.subr.mxu0 0.0
    %922 = vmatpush1.xpose.msra.mxu0 0.0
    %923 = vmatprep.subr.mxu0 0.0
    %924 = vmatpush1.xpose.msra.mxu0 0.0
    %925 = vmatprep.subr.mxu0 0.0
    %926 = vmatpush1.xpose.msra.mxu0 0.0
    %927 = vmatprep.subr.mxu0 0.0
    %928 = vmatpush1.xpose.msra.mxu0 0.0
    %929 = vmatprep.subr.mxu0 0.0
    %930 = vmatpush1.xpose.msra.mxu0 0.0
    %931 = vmatprep.mubr.f32.mxu0 0.0
    %932 = vmatmul.mubr.f32.gmra.mrb[0].mxu0 %v864
    %v933 = vpop.f32.mrb[0].mxu0
    %v934 = vadd.f32 0.0, %v933
    %v935 = vpop.f32.mrb[0].mxu0
    %936 = vdwg.mxu0
    %vm937 = vcmask 55296
    %v938 = vsel %vm937, %v934, -inf
    %939 = vmax.xlane.f32.xlu0 %v938
    %v940 = vpop.xlane.xlu0 %939
    %v941 = vsub.f32 %v934, %v940
    %v942 = vmul.f32 %v941, 1.442695
    %v943 = vpow.pop %v942
    %v944 = vsel %vm937, %v943, 0.0
    %945 = vadd.xlane.f32.xlu0 %v944
    %v946 = vpop.xlane.xlu0 %945
    %v947 = vrcp.pop %v946
    %v948 = vmul.f32 %v943, %v947
    %v949 = vld [vmem:[#allocation3 + $0x680] sm:$0xff]
    %v950 = vld [vmem:[#allocation3 + $0x688] sm:$0xff]
    %v951 = vld [vmem:[#allocation3 + $0x690] sm:$0xff]
    %v952 = vld [vmem:[#allocation3 + $0x698] sm:$0xff]
    %v953 = vld [vmem:[#allocation3 + $0x6a0] sm:$0xff]
    %v954 = vld [vmem:[#allocation3 + $0x6a8] sm:$0xff]
    %v955 = vld [vmem:[#allocation3 + $0x6b0] sm:$0xff]
    %v956 = vld [vmem:[#allocation3 + $0x6b8] sm:$0xff]
    %v957 = vld [vmem:[#allocation3 + $0x6c0] sm:$0xff]
    %v958 = vld [vmem:[#allocation3 + $0x6c8] sm:$0xff]
    %v959 = vld [vmem:[#allocation3 + $0x6d0] sm:$0xff]
    %v960 = vld [vmem:[#allocation3 + $0x6d8] sm:$0xff]
    %v961 = vld [vmem:[#allocation3 + $0x6e0] sm:$0xff]
    %v962 = vld [vmem:[#allocation3 + $0x6e8] sm:$0xff]
    %v963 = vld [vmem:[#allocation3 + $0x6f0] sm:$0xff]
    %v964 = vld [vmem:[#allocation3 + $0x6f8] sm:$0xff]
    %965 = vmatprep.subr.mxu0 0.0
    %966 = vmatpush1.msra.mxu0 %v949
    %967 = vmatprep.subr.mxu0 0.0
    %968 = vmatpush1.msra.mxu0 %v950
    %969 = vmatprep.subr.mxu0 0.0
    %970 = vmatpush1.msra.mxu0 %v951
    %971 = vmatprep.subr.mxu0 0.0
    %972 = vmatpush1.msra.mxu0 %v952
    %973 = vmatprep.subr.mxu0 0.0
    %974 = vmatpush1.msra.mxu0 %v953
    %975 = vmatprep.subr.mxu0 0.0
    %976 = vmatpush1.msra.mxu0 %v954
    %977 = vmatprep.subr.mxu0 0.0
    %978 = vmatpush1.msra.mxu0 %v955
    %979 = vmatprep.subr.mxu0 0.0
    %980 = vmatpush1.msra.mxu0 %v956
    %981 = vmatprep.subr.mxu0 0.0
    %982 = vmatpush1.msra.mxu0 %v957
    %983 = vmatprep.subr.mxu0 0.0
    %984 = vmatpush1.msra.mxu0 %v958
    %985 = vmatprep.subr.mxu0 0.0
    %986 = vmatpush1.msra.mxu0 %v959
    %987 = vmatprep.subr.mxu0 0.0
    %988 = vmatpush1.msra.mxu0 %v960
    %989 = vmatprep.subr.mxu0 0.0
    %990 = vmatpush1.msra.mxu0 %v961
    %991 = vmatprep.subr.mxu0 0.0
    %992 = vmatpush1.msra.mxu0 %v962
    %993 = vmatprep.subr.mxu0 0.0
    %994 = vmatpush1.msra.mxu0 %v963
    %995 = vmatprep.subr.mxu0 0.0
    %996 = vmatpush1.msra.mxu0 %v964
    %997 = vmatprep.subr.mxu0 0.0
    %998 = vmatpush1.msra.mxu0 0.0
    %999 = vmatprep.subr.mxu0 0.0
    %1000 = vmatpush1.msra.mxu0 0.0
    %1001 = vmatprep.subr.mxu0 0.0
    %1002 = vmatpush1.msra.mxu0 0.0
    %1003 = vmatprep.subr.mxu0 0.0
    %1004 = vmatpush1.msra.mxu0 0.0
    %1005 = vmatprep.subr.mxu0 0.0
    %1006 = vmatpush1.msra.mxu0 0.0
    %1007 = vmatprep.subr.mxu0 0.0
    %1008 = vmatpush1.msra.mxu0 0.0
    %1009 = vmatprep.subr.mxu0 0.0
    %1010 = vmatpush1.msra.mxu0 0.0
    %1011 = vmatprep.subr.mxu0 0.0
    %1012 = vmatpush1.msra.mxu0 0.0
    %1013 = vmatprep.subr.mxu0 0.0
    %1014 = vmatpush1.msra.mxu0 0.0
    %1015 = vmatprep.subr.mxu0 0.0
    %1016 = vmatpush1.msra.mxu0 0.0
    %1017 = vmatprep.subr.mxu0 0.0
    %1018 = vmatpush1.msra.mxu0 0.0
    %1019 = vmatprep.subr.mxu0 0.0
    %1020 = vmatpush1.msra.mxu0 0.0
    %1021 = vmatprep.subr.mxu0 0.0
    %1022 = vmatpush1.msra.mxu0 0.0
    %1023 = vmatprep.subr.mxu0 0.0
    %1024 = vmatpush1.msra.mxu0 0.0
    %1025 = vmatprep.subr.mxu0 0.0
    %1026 = vmatpush1.msra.mxu0 0.0
    %1027 = vmatprep.subr.mxu0 0.0
    %1028 = vmatpush1.msra.mxu0 0.0
    %1029 = vmatprep.mubr.f32.mxu0 0.0
    %1030 = vmatmul.mubr.f32.gmra.mrb[0].mxu0 %v780
    %v1031 = vpop.f32.mrb[0].mxu0
    %v1032 = vadd.f32 0.0, %v1031
    %v1033 = vpop.f32.mrb[0].mxu0
    %1034 = vdwg.mxu0
    %v1035 = vld [vmem:[#allocation3 + $0x700] sm:$0xff]
    %v1036 = vld [vmem:[#allocation3 + $0x708] sm:$0xff]
    %v1037 = vld [vmem:[#allocation3 + $0x710] sm:$0xff]
    %v1038 = vld [vmem:[#allocation3 + $0x718] sm:$0xff]
    %v1039 = vld [vmem:[#allocation3 + $0x720] sm:$0xff]
    %v1040 = vld [vmem:[#allocation3 + $0x728] sm:$0xff]
    %v1041 = vld [vmem:[#allocation3 + $0x730] sm:$0xff]
    %v1042 = vld [vmem:[#allocation3 + $0x738] sm:$0xff]
    %v1043 = vld [vmem:[#allocation3 + $0x740] sm:$0xff]
    %v1044 = vld [vmem:[#allocation3 + $0x748] sm:$0xff]
    %v1045 = vld [vmem:[#allocation3 + $0x750] sm:$0xff]
    %v1046 = vld [vmem:[#allocation3 + $0x758] sm:$0xff]
    %v1047 = vld [vmem:[#allocation3 + $0x760] sm:$0xff]
    %v1048 = vld [vmem:[#allocation3 + $0x768] sm:$0xff]
    %v1049 = vld [vmem:[#allocation3 + $0x770] sm:$0xff]
    %v1050 = vld [vmem:[#allocation3 + $0x778] sm:$0xff]
    %1051 = vmatprep.subr.mxu0 0.0
    %1052 = vmatpush1.msra.mxu0 %v1035
    %1053 = vmatprep.subr.mxu0 0.0
    %1054 = vmatpush1.msra.mxu0 %v1036
    %1055 = vmatprep.subr.mxu0 0.0
    %1056 = vmatpush1.msra.mxu0 %v1037
    %1057 = vmatprep.subr.mxu0 0.0
    %1058 = vmatpush1.msra.mxu0 %v1038
    %1059 = vmatprep.subr.mxu0 0.0
    %1060 = vmatpush1.msra.mxu0 %v1039
    %1061 = vmatprep.subr.mxu0 0.0
    %1062 = vmatpush1.msra.mxu0 %v1040
    %1063 = vmatprep.subr.mxu0 0.0
    %1064 = vmatpush1.msra.mxu0 %v1041
    %1065 = vmatprep.subr.mxu0 0.0
    %1066 = vmatpush1.msra.mxu0 %v1042
    %1067 = vmatprep.subr.mxu0 0.0
    %1068 = vmatpush1.msra.mxu0 %v1043
    %1069 = vmatprep.subr.mxu0 0.0
    %1070 = vmatpush1.msra.mxu0 %v1044
    %1071 = vmatprep.subr.mxu0 0.0
    %1072 = vmatpush1.msra.mxu0 %v1045
    %1073 = vmatprep.subr.mxu0 0.0
    %1074 = vmatpush1.msra.mxu0 %v1046
    %1075 = vmatprep.subr.mxu0 0.0
    %1076 = vmatpush1.msra.mxu0 %v1047
    %1077 = vmatprep.subr.mxu0 0.0
    %1078 = vmatpush1.msra.mxu0 %v1048
    %1079 = vmatprep.subr.mxu0 0.0
    %1080 = vmatpush1.msra.mxu0 %v1049
    %1081 = vmatprep.subr.mxu0 0.0
    %1082 = vmatpush1.msra.mxu0 %v1050
    %1083 = vmatprep.subr.mxu0 0.0
    %1084 = vmatpush1.msra.mxu0 0.0
    %1085 = vmatprep.subr.mxu0 0.0
    %1086 = vmatpush1.msra.mxu0 0.0
    %1087 = vmatprep.subr.mxu0 0.0
    %1088 = vmatpush1.msra.mxu0 0.0
    %1089 = vmatprep.subr.mxu0 0.0
    %1090 = vmatpush1.msra.mxu0 0.0
    %1091 = vmatprep.subr.mxu0 0.0
    %1092 = vmatpush1.msra.mxu0 0.0
    %1093 = vmatprep.subr.mxu0 0.0
    %1094 = vmatpush1.msra.mxu0 0.0
    %1095 = vmatprep.subr.mxu0 0.0
    %1096 = vmatpush1.msra.mxu0 0.0
    %1097 = vmatprep.subr.mxu0 0.0
    %1098 = vmatpush1.msra.mxu0 0.0
    %1099 = vmatprep.subr.mxu0 0.0
    %1100 = vmatpush1.msra.mxu0 0.0
    %1101 = vmatprep.subr.mxu0 0.0
    %1102 = vmatpush1.msra.mxu0 0.0
    %1103 = vmatprep.subr.mxu0 0.0
    %1104 = vmatpush1.msra.mxu0 0.0
    %1105 = vmatprep.subr.mxu0 0.0
    %1106 = vmatpush1.msra.mxu0 0.0
    %1107 = vmatprep.subr.mxu0 0.0
    %1108 = vmatpush1.msra.mxu0 0.0
    %1109 = vmatprep.subr.mxu0 0.0
    %1110 = vmatpush1.msra.mxu0 0.0
    %1111 = vmatprep.subr.mxu0 0.0
    %1112 = vmatpush1.msra.mxu0 0.0
    %1113 = vmatprep.subr.mxu0 0.0
    %1114 = vmatpush1.msra.mxu0 0.0
    %1115 = vmatprep.mubr.f32.mxu0 0.0
    %1116 = vmatmul.mubr.f32.gmra.mrb[0].mxu0 %v780
    %v1117 = vpop.f32.mrb[0].mxu0
    %v1118 = vadd.f32 0.0, %v1117
    %v1119 = vpop.f32.mrb[0].mxu0
    %1120 = vdwg.mxu0
    %1121 = vmatprep.subr.mxu0 0.0
    %1122 = vmatpush1.xpose.msra.mxu0 %v780
    %1123 = vmatprep.subr.mxu0 0.0
    %1124 = vmatpush1.xpose.msra.mxu0 0.0
    %1125 = vmatprep.subr.mxu0 0.0
    %1126 = vmatpush1.xpose.msra.mxu0 0.0
    %1127 = vmatprep.subr.mxu0 0.0
    %1128 = vmatpush1.xpose.msra.mxu0 0.0
    %1129 = vmatprep.subr.mxu0 0.0
    %1130 = vmatpush1.xpose.msra.mxu0 0.0
    %1131 = vmatprep.subr.mxu0 0.0
    %1132 = vmatpush1.xpose.msra.mxu0 0.0
    %1133 = vmatprep.subr.mxu0 0.0
    %1134 = vmatpush1.xpose.msra.mxu0 0.0
    %1135 = vmatprep.subr.mxu0 0.0
    %1136 = vmatpush1.xpose.msra.mxu0 0.0
    %1137 = vmatprep.subr.mxu0 0.0
    %1138 = vmatpush1.xpose.msra.mxu0 0.0
    %1139 = vmatprep.subr.mxu0 0.0
    %1140 = vmatpush1.xpose.msra.mxu0 0.0
    %1141 = vmatprep.subr.mxu0 0.0
    %1142 = vmatpush1.xpose.msra.mxu0 0.0
    %1143 = vmatprep.subr.mxu0 0.0
    %1144 = vmatpush1.xpose.msra.mxu0 0.0
    %1145 = vmatprep.subr.mxu0 0.0
    %1146 = vmatpush1.xpose.msra.mxu0 0.0
    %1147 = vmatprep.subr.mxu0 0.0
    %1148 = vmatpush1.xpose.msra.mxu0 0.0
    %1149 = vmatprep.subr.mxu0 0.0
    %1150 = vmatpush1.xpose.msra.mxu0 0.0
    %1151 = vmatprep.subr.mxu0 0.0
    %1152 = vmatpush1.xpose.msra.mxu0 0.0
    %1153 = vmatprep.subr.mxu0 0.0
    %1154 = vmatpush1.xpose.msra.mxu0 0.0
    %1155 = vmatprep.subr.mxu0 0.0
    %1156 = vmatpush1.xpose.msra.mxu0 0.0
    %1157 = vmatprep.subr.mxu0 0.0
    %1158 = vmatpush1.xpose.msra.mxu0 0.0
    %1159 = vmatprep.subr.mxu0 0.0
    %1160 = vmatpush1.xpose.msra.mxu0 0.0
    %1161 = vmatprep.subr.mxu0 0.0
    %1162 = vmatpush1.xpose.msra.mxu0 0.0
    %1163 = vmatprep.subr.mxu0 0.0
    %1164 = vmatpush1.xpose.msra.mxu0 0.0
    %1165 = vmatprep.subr.mxu0 0.0
    %1166 = vmatpush1.xpose.msra.mxu0 0.0
    %1167 = vmatprep.subr.mxu0 0.0
    %1168 = vmatpush1.xpose.msra.mxu0 0.0
    %1169 = vmatprep.subr.mxu0 0.0
    %1170 = vmatpush1.xpose.msra.mxu0 0.0
    %1171 = vmatprep.subr.mxu0 0.0
    %1172 = vmatpush1.xpose.msra.mxu0 0.0
    %1173 = vmatprep.subr.mxu0 0.0
    %1174 = vmatpush1.xpose.msra.mxu0 0.0
    %1175 = vmatprep.subr.mxu0 0.0
    %1176 = vmatpush1.xpose.msra.mxu0 0.0
    %1177 = vmatprep.subr.mxu0 0.0
    %1178 = vmatpush1.xpose.msra.mxu0 0.0
    %1179 = vmatprep.subr.mxu0 0.0
    %1180 = vmatpush1.xpose.msra.mxu0 0.0
    %1181 = vmatprep.subr.mxu0 0.0
    %1182 = vmatpush1.xpose.msra.mxu0 0.0
    %1183 = vmatprep.subr.mxu0 0.0
    %1184 = vmatpush1.xpose.msra.mxu0 0.0
    %1185 = vmatprep.mubr.f32.mxu0 0.0
    %1186 = vmatmul.mubr.f32.gmra.mrb[0].mxu0 %v1118
    %v1187 = vpop.f32.mrb[0].mxu0
    %v1188 = vadd.f32 0.0, %v1187
    %v1189 = vpop.f32.mrb[0].mxu0
    %1190 = vdwg.mxu0
    %v1191 = vsel %vm937, %v1188, -inf
    %1192 = vmax.xlane.f32.xlu0 %v1191
    %v1193 = vpop.xlane.xlu0 %1192
    %v1194 = vsub.f32 %v1188, %v1193
    %v1195 = vmul.f32 %v1194, 1.442695
    %v1196 = vpow.pop %v1195
    %v1197 = vsel %vm937, %v1196, 0.0
    %1198 = vadd.xlane.f32.xlu0 %v1197
    %v1199 = vpop.xlane.xlu0 %1198
    %v1200 = vrcp.pop %v1199
    %v1201 = vmul.f32 %v1196, %v1200
    %v1202 = vld [vmem:[#allocation3 + $0x780] sm:$0xff]
    %v1203 = vld [vmem:[#allocation3 + $0x788] sm:$0xff]
    %v1204 = vld [vmem:[#allocation3 + $0x790] sm:$0xff]
    %v1205 = vld [vmem:[#allocation3 + $0x798] sm:$0xff]
    %v1206 = vld [vmem:[#allocation3 + $0x7a0] sm:$0xff]
    %v1207 = vld [vmem:[#allocation3 + $0x7a8] sm:$0xff]
    %v1208 = vld [vmem:[#allocation3 + $0x7b0] sm:$0xff]
    %v1209 = vld [vmem:[#allocation3 + $0x7b8] sm:$0xff]
    %v1210 = vld [vmem:[#allocation3 + $0x7c0] sm:$0xff]
    %v1211 = vld [vmem:[#allocation3 + $0x7c8] sm:$0xff]
    %v1212 = vld [vmem:[#allocation3 + $0x7d0] sm:$0xff]
    %v1213 = vld [vmem:[#allocation3 + $0x7d8] sm:$0xff]
    %v1214 = vld [vmem:[#allocation3 + $0x7e0] sm:$0xff]
    %v1215 = vld [vmem:[#allocation3 + $0x7e8] sm:$0xff]
    %v1216 = vld [vmem:[#allocation3 + $0x7f0] sm:$0xff]
    %v1217 = vld [vmem:[#allocation3 + $0x7f8] sm:$0xff]
    %1218 = vmatprep.subr.mxu0 0.0
    %1219 = vmatpush1.msra.mxu0 %v1202
    %1220 = vmatprep.subr.mxu0 0.0
    %1221 = vmatpush1.msra.mxu0 %v1203
    %1222 = vmatprep.subr.mxu0 0.0
    %1223 = vmatpush1.msra.mxu0 %v1204
    %1224 = vmatprep.subr.mxu0 0.0
    %1225 = vmatpush1.msra.mxu0 %v1205
    %1226 = vmatprep.subr.mxu0 0.0
    %1227 = vmatpush1.msra.mxu0 %v1206
    %1228 = vmatprep.subr.mxu0 0.0
    %1229 = vmatpush1.msra.mxu0 %v1207
    %1230 = vmatprep.subr.mxu0 0.0
    %1231 = vmatpush1.msra.mxu0 %v1208
    %1232 = vmatprep.subr.mxu0 0.0
    %1233 = vmatpush1.msra.mxu0 %v1209
    %1234 = vmatprep.subr.mxu0 0.0
    %1235 = vmatpush1.msra.mxu0 %v1210
    %1236 = vmatprep.subr.mxu0 0.0
    %1237 = vmatpush1.msra.mxu0 %v1211
    %1238 = vmatprep.subr.mxu0 0.0
    %1239 = vmatpush1.msra.mxu0 %v1212
    %1240 = vmatprep.subr.mxu0 0.0
    %1241 = vmatpush1.msra.mxu0 %v1213
    %1242 = vmatprep.subr.mxu0 0.0
    %1243 = vmatpush1.msra.mxu0 %v1214
    %1244 = vmatprep.subr.mxu0 0.0
    %1245 = vmatpush1.msra.mxu0 %v1215
    %1246 = vmatprep.subr.mxu0 0.0
    %1247 = vmatpush1.msra.mxu0 %v1216
    %1248 = vmatprep.subr.mxu0 0.0
    %1249 = vmatpush1.msra.mxu0 %v1217
    %1250 = vmatprep.subr.mxu0 0.0
    %1251 = vmatpush1.msra.mxu0 0.0
    %1252 = vmatprep.subr.mxu0 0.0
    %1253 = vmatpush1.msra.mxu0 0.0
    %1254 = vmatprep.subr.mxu0 0.0
    %1255 = vmatpush1.msra.mxu0 0.0
    %1256 = vmatprep.subr.mxu0 0.0
    %1257 = vmatpush1.msra.mxu0 0.0
    %1258 = vmatprep.subr.mxu0 0.0
    %1259 = vmatpush1.msra.mxu0 0.0
    %1260 = vmatprep.subr.mxu0 0.0
    %1261 = vmatpush1.msra.mxu0 0.0
    %1262 = vmatprep.subr.mxu0 0.0
    %1263 = vmatpush1.msra.mxu0 0.0
    %1264 = vmatprep.subr.mxu0 0.0
    %1265 = vmatpush1.msra.mxu0 0.0
    %1266 = vmatprep.subr.mxu0 0.0
    %1267 = vmatpush1.msra.mxu0 0.0
    %1268 = vmatprep.subr.mxu0 0.0
    %1269 = vmatpush1.msra.mxu0 0.0
    %1270 = vmatprep.subr.mxu0 0.0
    %1271 = vmatpush1.msra.mxu0 0.0
    %1272 = vmatprep.subr.mxu0 0.0
    %1273 = vmatpush1.msra.mxu0 0.0
    %1274 = vmatprep.subr.mxu0 0.0
    %1275 = vmatpush1.msra.mxu0 0.0
    %1276 = vmatprep.subr.mxu0 0.0
    %1277 = vmatpush1.msra.mxu0 0.0
    %1278 = vmatprep.subr.mxu0 0.0
    %1279 = vmatpush1.msra.mxu0 0.0
    %1280 = vmatprep.subr.mxu0 0.0
    %1281 = vmatpush1.msra.mxu0 0.0
    %1282 = vmatprep.mubr.f32.mxu0 0.0
    %1283 = vmatmul.mubr.f32.gmra.mrb[0].mxu0 %v780
    %v1284 = vpop.f32.mrb[0].mxu0
    %v1285 = vadd.f32 0.0, %v1284
    %v1286 = vpop.f32.mrb[0].mxu0
    %1287 = vdwg.mxu0
    %vm1288 = vcmask 56320
    %v1290 = vsel %vm1288, %v1201, 0
    %vm1292 = vcmask 1046528
    %v1294 = vsel %vm1292, %v1285, 0
    %1296 = vmatprep.subr.mxu0 0.0
    %1297 = vmatpush1.msra.mxu0 %v1294
    %1298 = vmatprep.subr.mxu0 0.0
    %1299 = vmatpush1.msra.mxu0 0.0
    %1300 = vmatprep.subr.mxu0 0.0
    %1301 = vmatpush1.msra.mxu0 0.0
    %1302 = vmatprep.subr.mxu0 0.0
    %1303 = vmatpush1.msra.mxu0 0.0
    %1304 = vmatprep.subr.mxu0 0.0
    %1305 = vmatpush1.msra.mxu0 0.0
    %1306 = vmatprep.subr.mxu0 0.0
    %1307 = vmatpush1.msra.mxu0 0.0
    %1308 = vmatprep.subr.mxu0 0.0
    %1309 = vmatpush1.msra.mxu0 0.0
    %1310 = vmatprep.subr.mxu0 0.0
    %1311 = vmatpush1.msra.mxu0 0.0
    %1312 = vmatprep.subr.mxu0 0.0
    %1313 = vmatpush1.msra.mxu0 0.0
    %1314 = vmatprep.subr.mxu0 0.0
    %1315 = vmatpush1.msra.mxu0 0.0
    %1316 = vmatprep.subr.mxu0 0.0
    %1317 = vmatpush1.msra.mxu0 0.0
    %1318 = vmatprep.subr.mxu0 0.0
    %1319 = vmatpush1.msra.mxu0 0.0
    %1320 = vmatprep.subr.mxu0 0.0
    %1321 = vmatpush1.msra.mxu0 0.0
    %1322 = vmatprep.subr.mxu0 0.0
    %1323 = vmatpush1.msra.mxu0 0.0
    %1324 = vmatprep.subr.mxu0 0.0
    %1325 = vmatpush1.msra.mxu0 0.0
    %1326 = vmatprep.subr.mxu0 0.0
    %1327 = vmatpush1.msra.mxu0 0.0
    %1328 = vmatprep.subr.mxu0 0.0
    %1329 = vmatpush1.msra.mxu0 0.0
    %1330 = vmatprep.subr.mxu0 0.0
    %1331 = vmatpush1.msra.mxu0 0.0
    %1332 = vmatprep.subr.mxu0 0.0
    %1333 = vmatpush1.msra.mxu0 0.0
    %1334 = vmatprep.subr.mxu0 0.0
    %1335 = vmatpush1.msra.mxu0 0.0
    %1336 = vmatprep.subr.mxu0 0.0
    %1337 = vmatpush1.msra.mxu0 0.0
    %1338 = vmatprep.subr.mxu0 0.0
    %1339 = vmatpush1.msra.mxu0 0.0
    %1340 = vmatprep.subr.mxu0 0.0
    %1341 = vmatpush1.msra.mxu0 0.0
    %1342 = vmatprep.subr.mxu0 0.0
    %1343 = vmatpush1.msra.mxu0 0.0
    %1344 = vmatprep.subr.mxu0 0.0
    %1345 = vmatpush1.msra.mxu0 0.0
    %1346 = vmatprep.subr.mxu0 0.0
    %1347 = vmatpush1.msra.mxu0 0.0
    %1348 = vmatprep.subr.mxu0 0.0
    %1349 = vmatpush1.msra.mxu0 0.0
    %1350 = vmatprep.subr.mxu0 0.0
    %1351 = vmatpush1.msra.mxu0 0.0
    %1352 = vmatprep.subr.mxu0 0.0
    %1353 = vmatpush1.msra.mxu0 0.0
    %1354 = vmatprep.subr.mxu0 0.0
    %1355 = vmatpush1.msra.mxu0 0.0
    %1356 = vmatprep.subr.mxu0 0.0
    %1357 = vmatpush1.msra.mxu0 0.0
    %1358 = vmatprep.subr.mxu0 0.0
    %1359 = vmatpush1.msra.mxu0 0.0
    %1360 = vmatprep.mubr.f32.mxu0 0.0
    %1361 = vmatmul.mubr.f32.gmra.mrb[0].mxu0 %v1290
    %v1362 = vpop.f32.mrb[0].mxu0
    %v1363 = vadd.f32 0.0, %v1362
    %v1364 = vpop.f32.mrb[0].mxu0
    %1365 = vdwg.mxu0
    %v1367 = vsel %vm1288, %v948, 0
    %v1370 = vsel %vm1292, %v1032, 0
    %1372 = vmatprep.subr.mxu0 0.0
    %1373 = vmatpush1.msra.mxu0 %v1370
    %1374 = vmatprep.subr.mxu0 0.0
    %1375 = vmatpush1.msra.mxu0 0.0
    %1376 = vmatprep.subr.mxu0 0.0
    %1377 = vmatpush1.msra.mxu0 0.0
    %1378 = vmatprep.subr.mxu0 0.0
    %1379 = vmatpush1.msra.mxu0 0.0
    %1380 = vmatprep.subr.mxu0 0.0
    %1381 = vmatpush1.msra.mxu0 0.0
    %1382 = vmatprep.subr.mxu0 0.0
    %1383 = vmatpush1.msra.mxu0 0.0
    %1384 = vmatprep.subr.mxu0 0.0
    %1385 = vmatpush1.msra.mxu0 0.0
    %1386 = vmatprep.subr.mxu0 0.0
    %1387 = vmatpush1.msra.mxu0 0.0
    %1388 = vmatprep.subr.mxu0 0.0
    %1389 = vmatpush1.msra.mxu0 0.0
    %1390 = vmatprep.subr.mxu0 0.0
    %1391 = vmatpush1.msra.mxu0 0.0
    %1392 = vmatprep.subr.mxu0 0.0
    %1393 = vmatpush1.msra.mxu0 0.0
    %1394 = vmatprep.subr.mxu0 0.0
    %1395 = vmatpush1.msra.mxu0 0.0
    %1396 = vmatprep.subr.mxu0 0.0
    %1397 = vmatpush1.msra.mxu0 0.0
    %1398 = vmatprep.subr.mxu0 0.0
    %1399 = vmatpush1.msra.mxu0 0.0
    %1400 = vmatprep.subr.mxu0 0.0
    %1401 = vmatpush1.msra.mxu0 0.0
    %1402 = vmatprep.subr.mxu0 0.0
    %1403 = vmatpush1.msra.mxu0 0.0
    %1404 = vmatprep.subr.mxu0 0.0
    %1405 = vmatpush1.msra.mxu0 0.0
    %1406 = vmatprep.subr.mxu0 0.0
    %1407 = vmatpush1.msra.mxu0 0.0
    %1408 = vmatprep.subr.mxu0 0.0
    %1409 = vmatpush1.msra.mxu0 0.0
    %1410 = vmatprep.subr.mxu0 0.0
    %1411 = vmatpush1.msra.mxu0 0.0
    %1412 = vmatprep.subr.mxu0 0.0
    %1413 = vmatpush1.msra.mxu0 0.0
    %1414 = vmatprep.subr.mxu0 0.0
    %1415 = vmatpush1.msra.mxu0 0.0
    %1416 = vmatprep.subr.mxu0 0.0
    %1417 = vmatpush1.msra.mxu0 0.0
    %1418 = vmatprep.subr.mxu0 0.0
    %1419 = vmatpush1.msra.mxu0 0.0
    %1420 = vmatprep.subr.mxu0 0.0
    %1421 = vmatpush1.msra.mxu0 0.0
    %1422 = vmatprep.subr.mxu0 0.0
    %1423 = vmatpush1.msra.mxu0 0.0
    %1424 = vmatprep.subr.mxu0 0.0
    %1425 = vmatpush1.msra.mxu0 0.0
    %1426 = vmatprep.subr.mxu0 0.0
    %1427 = vmatpush1.msra.mxu0 0.0
    %1428 = vmatprep.subr.mxu0 0.0
    %1429 = vmatpush1.msra.mxu0 0.0
    %1430 = vmatprep.subr.mxu0 0.0
    %1431 = vmatpush1.msra.mxu0 0.0
    %1432 = vmatprep.subr.mxu0 0.0
    %1433 = vmatpush1.msra.mxu0 0.0
    %1434 = vmatprep.subr.mxu0 0.0
    %1435 = vmatpush1.msra.mxu0 0.0
    %1436 = vmatprep.mubr.f32.mxu0 0.0
    %1437 = vmatmul.mubr.f32.gmra.mrb[0].mxu0 %v1367
    %v1438 = vpop.f32.mrb[0].mxu0
    %v1439 = vadd.f32 %v1363, %v1438
    %v1440 = vpop.f32.mrb[0].mxu0
    %1441 = vdwg.mxu0
    %v1442 = vadd.f32 %v780, %v1439
    %v1443 = vld [vmem:[#allocation3 + $0x800] sm:$0xff]
    %v1444 = vld [vmem:[#allocation3 + $0x808] sm:$0xff]
    %v1445 = vld [vmem:[#allocation3 + $0x810] sm:$0xff]
    %v1446 = vld [vmem:[#allocation3 + $0x818] sm:$0xff]
    %v1447 = vld [vmem:[#allocation3 + $0x820] sm:$0xff]
    %v1448 = vld [vmem:[#allocation3 + $0x828] sm:$0xff]
    %v1449 = vld [vmem:[#allocation3 + $0x830] sm:$0xff]
    %v1450 = vld [vmem:[#allocation3 + $0x838] sm:$0xff]
    %v1451 = vld [vmem:[#allocation3 + $0x840] sm:$0xff]
    %v1452 = vld [vmem:[#allocation3 + $0x848] sm:$0xff]
    %v1453 = vld [vmem:[#allocation3 + $0x850] sm:$0xff]
    %v1454 = vld [vmem:[#allocation3 + $0x858] sm:$0xff]
    %v1455 = vld [vmem:[#allocation3 + $0x860] sm:$0xff]
    %v1456 = vld [vmem:[#allocation3 + $0x868] sm:$0xff]
    %v1457 = vld [vmem:[#allocation3 + $0x870] sm:$0xff]
    %v1458 = vld [vmem:[#allocation3 + $0x878] sm:$0xff]
    %v1459 = vld [vmem:[#allocation6 + $0xb] sm:$0x1]
    %v1460 = vlaneseq
    %v1461 = vshrl.u32 %v1460, 7
    %v1462 = vsub.s32 0, %v1461
    %v1463 = vrot.slane %v1459, %v1462
    %1464 = vmatprep.subr.mxu0 0.0
    %1465 = vmatpush1.msra.mxu0 %v1443
    %1466 = vmatprep.subr.mxu0 0.0
    %1467 = vmatpush1.msra.mxu0 %v1444
    %1468 = vmatprep.subr.mxu0 0.0
    %1469 = vmatpush1.msra.mxu0 %v1445
    %1470 = vmatprep.subr.mxu0 0.0
    %1471 = vmatpush1.msra.mxu0 %v1446
    %1472 = vmatprep.subr.mxu0 0.0
    %1473 = vmatpush1.msra.mxu0 %v1447
    %1474 = vmatprep.subr.mxu0 0.0
    %1475 = vmatpush1.msra.mxu0 %v1448
    %1476 = vmatprep.subr.mxu0 0.0
    %1477 = vmatpush1.msra.mxu0 %v1449
    %1478 = vmatprep.subr.mxu0 0.0
    %1479 = vmatpush1.msra.mxu0 %v1450
    %1480 = vmatprep.subr.mxu0 0.0
    %1481 = vmatpush1.msra.mxu0 %v1451
    %1482 = vmatprep.subr.mxu0 0.0
    %1483 = vmatpush1.msra.mxu0 %v1452
    %1484 = vmatprep.subr.mxu0 0.0
    %1485 = vmatpush1.msra.mxu0 %v1453
    %1486 = vmatprep.subr.mxu0 0.0
    %1487 = vmatpush1.msra.mxu0 %v1454
    %1488 = vmatprep.subr.mxu0 0.0
    %1489 = vmatpush1.msra.mxu0 %v1455
    %1490 = vmatprep.subr.mxu0 0.0
    %1491 = vmatpush1.msra.mxu0 %v1456
    %1492 = vmatprep.subr.mxu0 0.0
    %1493 = vmatpush1.msra.mxu0 %v1457
    %1494 = vmatprep.subr.mxu0 0.0
    %1495 = vmatpush1.msra.mxu0 %v1458
    %1496 = vmatprep.subr.mxu0 0.0
    %1497 = vmatpush1.msra.mxu0 0.0
    %1498 = vmatprep.subr.mxu0 0.0
    %1499 = vmatpush1.msra.mxu0 0.0
    %1500 = vmatprep.subr.mxu0 0.0
    %1501 = vmatpush1.msra.mxu0 0.0
    %1502 = vmatprep.subr.mxu0 0.0
    %1503 = vmatpush1.msra.mxu0 0.0
    %1504 = vmatprep.subr.mxu0 0.0
    %1505 = vmatpush1.msra.mxu0 0.0
    %1506 = vmatprep.subr.mxu0 0.0
    %1507 = vmatpush1.msra.mxu0 0.0
    %1508 = vmatprep.subr.mxu0 0.0
    %1509 = vmatpush1.msra.mxu0 0.0
    %1510 = vmatprep.subr.mxu0 0.0
    %1511 = vmatpush1.msra.mxu0 0.0
    %1512 = vmatprep.subr.mxu0 0.0
    %1513 = vmatpush1.msra.mxu0 0.0
    %1514 = vmatprep.subr.mxu0 0.0
    %1515 = vmatpush1.msra.mxu0 0.0
    %1516 = vmatprep.subr.mxu0 0.0
    %1517 = vmatpush1.msra.mxu0 0.0
    %1518 = vmatprep.subr.mxu0 0.0
    %1519 = vmatpush1.msra.mxu0 0.0
    %1520 = vmatprep.subr.mxu0 0.0
    %1521 = vmatpush1.msra.mxu0 0.0
    %1522 = vmatprep.subr.mxu0 0.0
    %1523 = vmatpush1.msra.mxu0 0.0
    %1524 = vmatprep.subr.mxu0 0.0
    %1525 = vmatpush1.msra.mxu0 0.0
    %1526 = vmatprep.subr.mxu0 0.0
    %1527 = vmatpush1.msra.mxu0 0.0
    %1528 = vmatprep.mubr.f32.mxu0 0.0
    %1529 = vmatmul.mubr.f32.gmra.mrb[0].mxu0 %v1442
    %v1530 = vpop.f32.mrb[0].mxu0
    %v1531 = vadd.f32 %v1463, %v1530
    %v1532 = vpop.f32.mrb[0].mxu0
    %1533 = vdwg.mxu0
    %v1534 = vmax.f32 %v1531, 0.0
    %v1535 = vadd.f32 %v780, %v1534
    %1536 = vmatprep.subr.mxu0 0.0
    %1537 = vmatpush1.msra.mxu0 %v781
    %1538 = vmatprep.subr.mxu0 0.0
    %1539 = vmatpush1.msra.mxu0 %v782
    %1540 = vmatprep.subr.mxu0 0.0
    %1541 = vmatpush1.msra.mxu0 %v783
    %1542 = vmatprep.subr.mxu0 0.0
    %1543 = vmatpush1.msra.mxu0 %v784
    %1544 = vmatprep.subr.mxu0 0.0
    %1545 = vmatpush1.msra.mxu0 %v785
    %1546 = vmatprep.subr.mxu0 0.0
    %1547 = vmatpush1.msra.mxu0 %v786
    %1548 = vmatprep.subr.mxu0 0.0
    %1549 = vmatpush1.msra.mxu0 %v787
    %1550 = vmatprep.subr.mxu0 0.0
    %1551 = vmatpush1.msra.mxu0 %v788
    %1552 = vmatprep.subr.mxu0 0.0
    %1553 = vmatpush1.msra.mxu0 %v789
    %1554 = vmatprep.subr.mxu0 0.0
    %1555 = vmatpush1.msra.mxu0 %v790
    %1556 = vmatprep.subr.mxu0 0.0
    %1557 = vmatpush1.msra.mxu0 %v791
    %1558 = vmatprep.subr.mxu0 0.0
    %1559 = vmatpush1.msra.mxu0 %v792
    %1560 = vmatprep.subr.mxu0 0.0
    %1561 = vmatpush1.msra.mxu0 %v793
    %1562 = vmatprep.subr.mxu0 0.0
    %1563 = vmatpush1.msra.mxu0 %v794
    %1564 = vmatprep.subr.mxu0 0.0
    %1565 = vmatpush1.msra.mxu0 %v795
    %1566 = vmatprep.subr.mxu0 0.0
    %1567 = vmatpush1.msra.mxu0 %v796
    %1568 = vmatprep.subr.mxu0 0.0
    %1569 = vmatpush1.msra.mxu0 0.0
    %1570 = vmatprep.subr.mxu0 0.0
    %1571 = vmatpush1.msra.mxu0 0.0
    %1572 = vmatprep.subr.mxu0 0.0
    %1573 = vmatpush1.msra.mxu0 0.0
    %1574 = vmatprep.subr.mxu0 0.0
    %1575 = vmatpush1.msra.mxu0 0.0
    %1576 = vmatprep.subr.mxu0 0.0
    %1577 = vmatpush1.msra.mxu0 0.0
    %1578 = vmatprep.subr.mxu0 0.0
    %1579 = vmatpush1.msra.mxu0 0.0
    %1580 = vmatprep.subr.mxu0 0.0
    %1581 = vmatpush1.msra.mxu0 0.0
    %1582 = vmatprep.subr.mxu0 0.0
    %1583 = vmatpush1.msra.mxu0 0.0
    %1584 = vmatprep.subr.mxu0 0.0
    %1585 = vmatpush1.msra.mxu0 0.0
    %1586 = vmatprep.subr.mxu0 0.0
    %1587 = vmatpush1.msra.mxu0 0.0
    %1588 = vmatprep.subr.mxu0 0.0
    %1589 = vmatpush1.msra.mxu0 0.0
    %1590 = vmatprep.subr.mxu0 0.0
    %1591 = vmatpush1.msra.mxu0 0.0
    %1592 = vmatprep.subr.mxu0 0.0
    %1593 = vmatpush1.msra.mxu0 0.0
    %1594 = vmatprep.subr.mxu0 0.0
    %1595 = vmatpush1.msra.mxu0 0.0
    %1596 = vmatprep.subr.mxu0 0.0
    %1597 = vmatpush1.msra.mxu0 0.0
    %1598 = vmatprep.subr.mxu0 0.0
    %1599 = vmatpush1.msra.mxu0 0.0
    %1600 = vmatprep.mubr.f32.mxu0 0.0
    %1601 = vmatmul.mubr.f32.gmra.mrb[0].mxu0 %v1535
    %v1602 = vpop.f32.mrb[0].mxu0
    %v1603 = vadd.f32 0.0, %v1602
    %v1604 = vpop.f32.mrb[0].mxu0
    %1605 = vdwg.mxu0
    %1606 = vmatprep.subr.mxu0 0.0
    %1607 = vmatpush1.xpose.msra.mxu0 %v1535
    %1608 = vmatprep.subr.mxu0 0.0
    %1609 = vmatpush1.xpose.msra.mxu0 0.0
    %1610 = vmatprep.subr.mxu0 0.0
    %1611 = vmatpush1.xpose.msra.mxu0 0.0
    %1612 = vmatprep.subr.mxu0 0.0
    %1613 = vmatpush1.xpose.msra.mxu0 0.0
    %1614 = vmatprep.subr.mxu0 0.0
    %1615 = vmatpush1.xpose.msra.mxu0 0.0
    %1616 = vmatprep.subr.mxu0 0.0
    %1617 = vmatpush1.xpose.msra.mxu0 0.0
    %1618 = vmatprep.subr.mxu0 0.0
    %1619 = vmatpush1.xpose.msra.mxu0 0.0
    %1620 = vmatprep.subr.mxu0 0.0
    %1621 = vmatpush1.xpose.msra.mxu0 0.0
    %1622 = vmatprep.subr.mxu0 0.0
    %1623 = vmatpush1.xpose.msra.mxu0 0.0
    %1624 = vmatprep.subr.mxu0 0.0
    %1625 = vmatpush1.xpose.msra.mxu0 0.0
    %1626 = vmatprep.subr.mxu0 0.0
    %1627 = vmatpush1.xpose.msra.mxu0 0.0
    %1628 = vmatprep.subr.mxu0 0.0
    %1629 = vmatpush1.xpose.msra.mxu0 0.0
    %1630 = vmatprep.subr.mxu0 0.0
    %1631 = vmatpush1.xpose.msra.mxu0 0.0
    %1632 = vmatprep.subr.mxu0 0.0
    %1633 = vmatpush1.xpose.msra.mxu0 0.0
    %1634 = vmatprep.subr.mxu0 0.0
    %1635 = vmatpush1.xpose.msra.mxu0 0.0
    %1636 = vmatprep.subr.mxu0 0.0
    %1637 = vmatpush1.xpose.msra.mxu0 0.0
    %1638 = vmatprep.subr.mxu0 0.0
    %1639 = vmatpush1.xpose.msra.mxu0 0.0
    %1640 = vmatprep.subr.mxu0 0.0
    %1641 = vmatpush1.xpose.msra.mxu0 0.0
    %1642 = vmatprep.subr.mxu0 0.0
    %1643 = vmatpush1.xpose.msra.mxu0 0.0
    %1644 = vmatprep.subr.mxu0 0.0
    %1645 = vmatpush1.xpose.msra.mxu0 0.0
    %1646 = vmatprep.subr.mxu0 0.0
    %1647 = vmatpush1.xpose.msra.mxu0 0.0
    %1648 = vmatprep.subr.mxu0 0.0
    %1649 = vmatpush1.xpose.msra.mxu0 0.0
    %1650 = vmatprep.subr.mxu0 0.0
    %1651 = vmatpush1.xpose.msra.mxu0 0.0
    %1652 = vmatprep.subr.mxu0 0.0
    %1653 = vmatpush1.xpose.msra.mxu0 0.0
    %1654 = vmatprep.subr.mxu0 0.0
    %1655 = vmatpush1.xpose.msra.mxu0 0.0
    %1656 = vmatprep.subr.mxu0 0.0
    %1657 = vmatpush1.xpose.msra.mxu0 0.0
    %1658 = vmatprep.subr.mxu0 0.0
    %1659 = vmatpush1.xpose.msra.mxu0 0.0
    %1660 = vmatprep.subr.mxu0 0.0
    %1661 = vmatpush1.xpose.msra.mxu0 0.0
    %1662 = vmatprep.subr.mxu0 0.0
    %1663 = vmatpush1.xpose.msra.mxu0 0.0
    %1664 = vmatprep.subr.mxu0 0.0
    %1665 = vmatpush1.xpose.msra.mxu0 0.0
    %1666 = vmatprep.subr.mxu0 0.0
    %1667 = vmatpush1.xpose.msra.mxu0 0.0
    %1668 = vmatprep.subr.mxu0 0.0
    %1669 = vmatpush1.xpose.msra.mxu0 0.0
    %1670 = vmatprep.mubr.f32.mxu0 0.0
    %1671 = vmatmul.mubr.f32.gmra.mrb[0].mxu0 %v1603
    %v1672 = vpop.f32.mrb[0].mxu0
    %v1673 = vadd.f32 0.0, %v1672
    %v1674 = vpop.f32.mrb[0].mxu0
    %1675 = vdwg.mxu0
    %v1676 = vsel %vm937, %v1673, -inf
    %1677 = vmax.xlane.f32.xlu0 %v1676
    %v1678 = vpop.xlane.xlu0 %1677
    %v1679 = vsub.f32 %v1673, %v1678
    %v1680 = vmul.f32 %v1679, 1.442695
    %v1681 = vpow.pop %v1680
    %v1682 = vsel %vm937, %v1681, 0.0
    %1683 = vadd.xlane.f32.xlu0 %v1682
    %v1684 = vpop.xlane.xlu0 %1683
    %v1685 = vrcp.pop %v1684
    %v1686 = vmul.f32 %v1681, %v1685
    %1687 = vmatprep.subr.mxu0 0.0
    %1688 = vmatpush1.msra.mxu0 %v949
    %1689 = vmatprep.subr.mxu0 0.0
    %1690 = vmatpush1.msra.mxu0 %v950
    %1691 = vmatprep.subr.mxu0 0.0
    %1692 = vmatpush1.msra.mxu0 %v951
    %1693 = vmatprep.subr.mxu0 0.0
    %1694 = vmatpush1.msra.mxu0 %v952
    %1695 = vmatprep.subr.mxu0 0.0
    %1696 = vmatpush1.msra.mxu0 %v953
    %1697 = vmatprep.subr.mxu0 0.0
    %1698 = vmatpush1.msra.mxu0 %v954
    %1699 = vmatprep.subr.mxu0 0.0
    %1700 = vmatpush1.msra.mxu0 %v955
    %1701 = vmatprep.subr.mxu0 0.0
    %1702 = vmatpush1.msra.mxu0 %v956
    %1703 = vmatprep.subr.mxu0 0.0
    %1704 = vmatpush1.msra.mxu0 %v957
    %1705 = vmatprep.subr.mxu0 0.0
    %1706 = vmatpush1.msra.mxu0 %v958
    %1707 = vmatprep.subr.mxu0 0.0
    %1708 = vmatpush1.msra.mxu0 %v959
    %1709 = vmatprep.subr.mxu0 0.0
    %1710 = vmatpush1.msra.mxu0 %v960
    %1711 = vmatprep.subr.mxu0 0.0
    %1712 = vmatpush1.msra.mxu0 %v961
    %1713 = vmatprep.subr.mxu0 0.0
    %1714 = vmatpush1.msra.mxu0 %v962
    %1715 = vmatprep.subr.mxu0 0.0
    %1716 = vmatpush1.msra.mxu0 %v963
    %1717 = vmatprep.subr.mxu0 0.0
    %1718 = vmatpush1.msra.mxu0 %v964
    %1719 = vmatprep.subr.mxu0 0.0
    %1720 = vmatpush1.msra.mxu0 0.0
    %1721 = vmatprep.subr.mxu0 0.0
    %1722 = vmatpush1.msra.mxu0 0.0
    %1723 = vmatprep.subr.mxu0 0.0
    %1724 = vmatpush1.msra.mxu0 0.0
    %1725 = vmatprep.subr.mxu0 0.0
    %1726 = vmatpush1.msra.mxu0 0.0
    %1727 = vmatprep.subr.mxu0 0.0
    %1728 = vmatpush1.msra.mxu0 0.0
    %1729 = vmatprep.subr.mxu0 0.0
    %1730 = vmatpush1.msra.mxu0 0.0
    %1731 = vmatprep.subr.mxu0 0.0
    %1732 = vmatpush1.msra.mxu0 0.0
    %1733 = vmatprep.subr.mxu0 0.0
    %1734 = vmatpush1.msra.mxu0 0.0
    %1735 = vmatprep.subr.mxu0 0.0
    %1736 = vmatpush1.msra.mxu0 0.0
    %1737 = vmatprep.subr.mxu0 0.0
    %1738 = vmatpush1.msra.mxu0 0.0
    %1739 = vmatprep.subr.mxu0 0.0
    %1740 = vmatpush1.msra.mxu0 0.0
    %1741 = vmatprep.subr.mxu0 0.0
    %1742 = vmatpush1.msra.mxu0 0.0
    %1743 = vmatprep.subr.mxu0 0.0
    %1744 = vmatpush1.msra.mxu0 0.0
    %1745 = vmatprep.subr.mxu0 0.0
    %1746 = vmatpush1.msra.mxu0 0.0
    %1747 = vmatprep.subr.mxu0 0.0
    %1748 = vmatpush1.msra.mxu0 0.0
    %1749 = vmatprep.subr.mxu0 0.0
    %1750 = vmatpush1.msra.mxu0 0.0
    %1751 = vmatprep.mubr.f32.mxu0 0.0
    %1752 = vmatmul.mubr.f32.gmra.mrb[0].mxu0 %v1535
    %v1753 = vpop.f32.mrb[0].mxu0
    %v1754 = vadd.f32 0.0, %v1753
    %v1755 = vpop.f32.mrb[0].mxu0
    %1756 = vdwg.mxu0
    %1757 = vmatprep.subr.mxu0 0.0
    %1758 = vmatpush1.msra.mxu0 %v1035
    %1759 = vmatprep.subr.mxu0 0.0
    %1760 = vmatpush1.msra.mxu0 %v1036
    %1761 = vmatprep.subr.mxu0 0.0
    %1762 = vmatpush1.msra.mxu0 %v1037
    %1763 = vmatprep.subr.mxu0 0.0
    %1764 = vmatpush1.msra.mxu0 %v1038
    %1765 = vmatprep.subr.mxu0 0.0
    %1766 = vmatpush1.msra.mxu0 %v1039
    %1767 = vmatprep.subr.mxu0 0.0
    %1768 = vmatpush1.msra.mxu0 %v1040
    %1769 = vmatprep.subr.mxu0 0.0
    %1770 = vmatpush1.msra.mxu0 %v1041
    %1771 = vmatprep.subr.mxu0 0.0
    %1772 = vmatpush1.msra.mxu0 %v1042
    %1773 = vmatprep.subr.mxu0 0.0
    %1774 = vmatpush1.msra.mxu0 %v1043
    %1775 = vmatprep.subr.mxu0 0.0
    %1776 = vmatpush1.msra.mxu0 %v1044
    %1777 = vmatprep.subr.mxu0 0.0
    %1778 = vmatpush1.msra.mxu0 %v1045
    %1779 = vmatprep.subr.mxu0 0.0
    %1780 = vmatpush1.msra.mxu0 %v1046
    %1781 = vmatprep.subr.mxu0 0.0
    %1782 = vmatpush1.msra.mxu0 %v1047
    %1783 = vmatprep.subr.mxu0 0.0
    %1784 = vmatpush1.msra.mxu0 %v1048
    %1785 = vmatprep.subr.mxu0 0.0
    %1786 = vmatpush1.msra.mxu0 %v1049
    %1787 = vmatprep.subr.mxu0 0.0
    %1788 = vmatpush1.msra.mxu0 %v1050
    %1789 = vmatprep.subr.mxu0 0.0
    %1790 = vmatpush1.msra.mxu0 0.0
    %1791 = vmatprep.subr.mxu0 0.0
    %1792 = vmatpush1.msra.mxu0 0.0
    %1793 = vmatprep.subr.mxu0 0.0
    %1794 = vmatpush1.msra.mxu0 0.0
    %1795 = vmatprep.subr.mxu0 0.0
    %1796 = vmatpush1.msra.mxu0 0.0
    %1797 = vmatprep.subr.mxu0 0.0
    %1798 = vmatpush1.msra.mxu0 0.0
    %1799 = vmatprep.subr.mxu0 0.0
    %1800 = vmatpush1.msra.mxu0 0.0
    %1801 = vmatprep.subr.mxu0 0.0
    %1802 = vmatpush1.msra.mxu0 0.0
    %1803 = vmatprep.subr.mxu0 0.0
    %1804 = vmatpush1.msra.mxu0 0.0
    %1805 = vmatprep.subr.mxu0 0.0
    %1806 = vmatpush1.msra.mxu0 0.0
    %1807 = vmatprep.subr.mxu0 0.0
    %1808 = vmatpush1.msra.mxu0 0.0
    %1809 = vmatprep.subr.mxu0 0.0
    %1810 = vmatpush1.msra.mxu0 0.0
    %1811 = vmatprep.subr.mxu0 0.0
    %1812 = vmatpush1.msra.mxu0 0.0
    %1813 = vmatprep.subr.mxu0 0.0
    %1814 = vmatpush1.msra.mxu0 0.0
    %1815 = vmatprep.subr.mxu0 0.0
    %1816 = vmatpush1.msra.mxu0 0.0
    %1817 = vmatprep.subr.mxu0 0.0
    %1818 = vmatpush1.msra.mxu0 0.0
    %1819 = vmatprep.subr.mxu0 0.0
    %1820 = vmatpush1.msra.mxu0 0.0
    %1821 = vmatprep.mubr.f32.mxu0 0.0
    %1822 = vmatmul.mubr.f32.gmra.mrb[0].mxu0 %v1535
    %v1823 = vpop.f32.mrb[0].mxu0
    %v1824 = vadd.f32 0.0, %v1823
    %v1825 = vpop.f32.mrb[0].mxu0
    %1826 = vdwg.mxu0
    %1827 = vmatprep.subr.mxu0 0.0
    %1828 = vmatpush1.xpose.msra.mxu0 %v1535
    %1829 = vmatprep.subr.mxu0 0.0
    %1830 = vmatpush1.xpose.msra.mxu0 0.0
    %1831 = vmatprep.subr.mxu0 0.0
    %1832 = vmatpush1.xpose.msra.mxu0 0.0
    %1833 = vmatprep.subr.mxu0 0.0
    %1834 = vmatpush1.xpose.msra.mxu0 0.0
    %1835 = vmatprep.subr.mxu0 0.0
    %1836 = vmatpush1.xpose.msra.mxu0 0.0
    %1837 = vmatprep.subr.mxu0 0.0
    %1838 = vmatpush1.xpose.msra.mxu0 0.0
    %1839 = vmatprep.subr.mxu0 0.0
    %1840 = vmatpush1.xpose.msra.mxu0 0.0
    %1841 = vmatprep.subr.mxu0 0.0
    %1842 = vmatpush1.xpose.msra.mxu0 0.0
    %1843 = vmatprep.subr.mxu0 0.0
    %1844 = vmatpush1.xpose.msra.mxu0 0.0
    %1845 = vmatprep.subr.mxu0 0.0
    %1846 = vmatpush1.xpose.msra.mxu0 0.0
    %1847 = vmatprep.subr.mxu0 0.0
    %1848 = vmatpush1.xpose.msra.mxu0 0.0
    %1849 = vmatprep.subr.mxu0 0.0
    %1850 = vmatpush1.xpose.msra.mxu0 0.0
    %1851 = vmatprep.subr.mxu0 0.0
    %1852 = vmatpush1.xpose.msra.mxu0 0.0
    %1853 = vmatprep.subr.mxu0 0.0
    %1854 = vmatpush1.xpose.msra.mxu0 0.0
    %1855 = vmatprep.subr.mxu0 0.0
    %1856 = vmatpush1.xpose.msra.mxu0 0.0
    %1857 = vmatprep.subr.mxu0 0.0
    %1858 = vmatpush1.xpose.msra.mxu0 0.0
    %1859 = vmatprep.subr.mxu0 0.0
    %1860 = vmatpush1.xpose.msra.mxu0 0.0
    %1861 = vmatprep.subr.mxu0 0.0
    %1862 = vmatpush1.xpose.msra.mxu0 0.0
    %1863 = vmatprep.subr.mxu0 0.0
    %1864 = vmatpush1.xpose.msra.mxu0 0.0
    %1865 = vmatprep.subr.mxu0 0.0
    %1866 = vmatpush1.xpose.msra.mxu0 0.0
    %1867 = vmatprep.subr.mxu0 0.0
    %1868 = vmatpush1.xpose.msra.mxu0 0.0
    %1869 = vmatprep.subr.mxu0 0.0
    %1870 = vmatpush1.xpose.msra.mxu0 0.0
    %1871 = vmatprep.subr.mxu0 0.0
    %1872 = vmatpush1.xpose.msra.mxu0 0.0
    %1873 = vmatprep.subr.mxu0 0.0
    %1874 = vmatpush1.xpose.msra.mxu0 0.0
    %1875 = vmatprep.subr.mxu0 0.0
    %1876 = vmatpush1.xpose.msra.mxu0 0.0
    %1877 = vmatprep.subr.mxu0 0.0
    %1878 = vmatpush1.xpose.msra.mxu0 0.0
    %1879 = vmatprep.subr.mxu0 0.0
    %1880 = vmatpush1.xpose.msra.mxu0 0.0
    %1881 = vmatprep.subr.mxu0 0.0
    %1882 = vmatpush1.xpose.msra.mxu0 0.0
    %1883 = vmatprep.subr.mxu0 0.0
    %1884 = vmatpush1.xpose.msra.mxu0 0.0
    %1885 = vmatprep.subr.mxu0 0.0
    %1886 = vmatpush1.xpose.msra.mxu0 0.0
    %1887 = vmatprep.subr.mxu0 0.0
    %1888 = vmatpush1.xpose.msra.mxu0 0.0
    %1889 = vmatprep.subr.mxu0 0.0
    %1890 = vmatpush1.xpose.msra.mxu0 0.0
    %1891 = vmatprep.mubr.f32.mxu0 0.0
    %1892 = vmatmul.mubr.f32.gmra.mrb[0].mxu0 %v1824
    %v1893 = vpop.f32.mrb[0].mxu0
    %v1894 = vadd.f32 0.0, %v1893
    %v1895 = vpop.f32.mrb[0].mxu0
    %1896 = vdwg.mxu0
    %v1897 = vsel %vm937, %v1894, -inf
    %1898 = vmax.xlane.f32.xlu0 %v1897
    %v1899 = vpop.xlane.xlu0 %1898
    %v1900 = vsub.f32 %v1894, %v1899
    %v1901 = vmul.f32 %v1900, 1.442695
    %v1902 = vpow.pop %v1901
    %v1903 = vsel %vm937, %v1902, 0.0
    %1904 = vadd.xlane.f32.xlu0 %v1903
    %v1905 = vpop.xlane.xlu0 %1904
    %v1906 = vrcp.pop %v1905
    %v1907 = vmul.f32 %v1902, %v1906
    %1908 = vmatprep.subr.mxu0 0.0
    %1909 = vmatpush1.msra.mxu0 %v1202
    %1910 = vmatprep.subr.mxu0 0.0
    %1911 = vmatpush1.msra.mxu0 %v1203
    %1912 = vmatprep.subr.mxu0 0.0
    %1913 = vmatpush1.msra.mxu0 %v1204
    %1914 = vmatprep.subr.mxu0 0.0
    %1915 = vmatpush1.msra.mxu0 %v1205
    %1916 = vmatprep.subr.mxu0 0.0
    %1917 = vmatpush1.msra.mxu0 %v1206
    %1918 = vmatprep.subr.mxu0 0.0
    %1919 = vmatpush1.msra.mxu0 %v1207
    %1920 = vmatprep.subr.mxu0 0.0
    %1921 = vmatpush1.msra.mxu0 %v1208
    %1922 = vmatprep.subr.mxu0 0.0
    %1923 = vmatpush1.msra.mxu0 %v1209
    %1924 = vmatprep.subr.mxu0 0.0
    %1925 = vmatpush1.msra.mxu0 %v1210
    %1926 = vmatprep.subr.mxu0 0.0
    %1927 = vmatpush1.msra.mxu0 %v1211
    %1928 = vmatprep.subr.mxu0 0.0
    %1929 = vmatpush1.msra.mxu0 %v1212
    %1930 = vmatprep.subr.mxu0 0.0
    %1931 = vmatpush1.msra.mxu0 %v1213
    %1932 = vmatprep.subr.mxu0 0.0
    %1933 = vmatpush1.msra.mxu0 %v1214
    %1934 = vmatprep.subr.mxu0 0.0
    %1935 = vmatpush1.msra.mxu0 %v1215
    %1936 = vmatprep.subr.mxu0 0.0
    %1937 = vmatpush1.msra.mxu0 %v1216
    %1938 = vmatprep.subr.mxu0 0.0
    %1939 = vmatpush1.msra.mxu0 %v1217
    %1940 = vmatprep.subr.mxu0 0.0
    %1941 = vmatpush1.msra.mxu0 0.0
    %1942 = vmatprep.subr.mxu0 0.0
    %1943 = vmatpush1.msra.mxu0 0.0
    %1944 = vmatprep.subr.mxu0 0.0
    %1945 = vmatpush1.msra.mxu0 0.0
    %1946 = vmatprep.subr.mxu0 0.0
    %1947 = vmatpush1.msra.mxu0 0.0
    %1948 = vmatprep.subr.mxu0 0.0
    %1949 = vmatpush1.msra.mxu0 0.0
    %1950 = vmatprep.subr.mxu0 0.0
    %1951 = vmatpush1.msra.mxu0 0.0
    %1952 = vmatprep.subr.mxu0 0.0
    %1953 = vmatpush1.msra.mxu0 0.0
    %1954 = vmatprep.subr.mxu0 0.0
    %1955 = vmatpush1.msra.mxu0 0.0
    %1956 = vmatprep.subr.mxu0 0.0
    %1957 = vmatpush1.msra.mxu0 0.0
    %1958 = vmatprep.subr.mxu0 0.0
    %1959 = vmatpush1.msra.mxu0 0.0
    %1960 = vmatprep.subr.mxu0 0.0
    %1961 = vmatpush1.msra.mxu0 0.0
    %1962 = vmatprep.subr.mxu0 0.0
    %1963 = vmatpush1.msra.mxu0 0.0
    %1964 = vmatprep.subr.mxu0 0.0
    %1965 = vmatpush1.msra.mxu0 0.0
    %1966 = vmatprep.subr.mxu0 0.0
    %1967 = vmatpush1.msra.mxu0 0.0
    %1968 = vmatprep.subr.mxu0 0.0
    %1969 = vmatpush1.msra.mxu0 0.0
    %1970 = vmatprep.subr.mxu0 0.0
    %1971 = vmatpush1.msra.mxu0 0.0
    %1972 = vmatprep.mubr.f32.mxu0 0.0
    %1973 = vmatmul.mubr.f32.gmra.mrb[0].mxu0 %v1535
    %v1974 = vpop.f32.mrb[0].mxu0
    %v1975 = vadd.f32 0.0, %v1974
    %v1976 = vpop.f32.mrb[0].mxu0
    %1977 = vdwg.mxu0
    %v1979 = vsel %vm1288, %v1907, 0
    %v1982 = vsel %vm1292, %v1975, 0
    %1984 = vmatprep.subr.mxu0 0.0
    %1985 = vmatpush1.msra.mxu0 %v1982
    %1986 = vmatprep.subr.mxu0 0.0
    %1987 = vmatpush1.msra.mxu0 0.0
    %1988 = vmatprep.subr.mxu0 0.0
    %1989 = vmatpush1.msra.mxu0 0.0
    %1990 = vmatprep.subr.mxu0 0.0
    %1991 = vmatpush1.msra.mxu0 0.0
    %1992 = vmatprep.subr.mxu0 0.0
    %1993 = vmatpush1.msra.mxu0 0.0
    %1994 = vmatprep.subr.mxu0 0.0
    %1995 = vmatpush1.msra.mxu0 0.0
    %1996 = vmatprep.subr.mxu0 0.0
    %1997 = vmatpush1.msra.mxu0 0.0
    %1998 = vmatprep.subr.mxu0 0.0
    %1999 = vmatpush1.msra.mxu0 0.0
    %2000 = vmatprep.subr.mxu0 0.0
    %2001 = vmatpush1.msra.mxu0 0.0
    %2002 = vmatprep.subr.mxu0 0.0
    %2003 = vmatpush1.msra.mxu0 0.0
    %2004 = vmatprep.subr.mxu0 0.0
    %2005 = vmatpush1.msra.mxu0 0.0
    %2006 = vmatprep.subr.mxu0 0.0
    %2007 = vmatpush1.msra.mxu0 0.0
    %2008 = vmatprep.subr.mxu0 0.0
    %2009 = vmatpush1.msra.mxu0 0.0
    %2010 = vmatprep.subr.mxu0 0.0
    %2011 = vmatpush1.msra.mxu0 0.0
    %2012 = vmatprep.subr.mxu0 0.0
    %2013 = vmatpush1.msra.mxu0 0.0
    %2014 = vmatprep.subr.mxu0 0.0
    %2015 = vmatpush1.msra.mxu0 0.0
    %2016 = vmatprep.subr.mxu0 0.0
    %2017 = vmatpush1.msra.mxu0 0.0
    %2018 = vmatprep.subr.mxu0 0.0
    %2019 = vmatpush1.msra.mxu0 0.0
    %2020 = vmatprep.subr.mxu0 0.0
    %2021 = vmatpush1.msra.mxu0 0.0
    %2022 = vmatprep.subr.mxu0 0.0
    %2023 = vmatpush1.msra.mxu0 0.0
    %2024 = vmatprep.subr.mxu0 0.0
    %2025 = vmatpush1.msra.mxu0 0.0
    %2026 = vmatprep.subr.mxu0 0.0
    %2027 = vmatpush1.msra.mxu0 0.0
    %2028 = vmatprep.subr.mxu0 0.0
    %2029 = vmatpush1.msra.mxu0 0.0
    %2030 = vmatprep.subr.mxu0 0.0
    %2031 = vmatpush1.msra.mxu0 0.0
    %2032 = vmatprep.subr.mxu0 0.0
    %2033 = vmatpush1.msra.mxu0 0.0
    %2034 = vmatprep.subr.mxu0 0.0
    %2035 = vmatpush1.msra.mxu0 0.0
    %2036 = vmatprep.subr.mxu0 0.0
    %2037 = vmatpush1.msra.mxu0 0.0
    %2038 = vmatprep.subr.mxu0 0.0
    %2039 = vmatpush1.msra.mxu0 0.0
    %2040 = vmatprep.subr.mxu0 0.0
    %2041 = vmatpush1.msra.mxu0 0.0
    %2042 = vmatprep.subr.mxu0 0.0
    %2043 = vmatpush1.msra.mxu0 0.0
    %2044 = vmatprep.subr.mxu0 0.0
    %2045 = vmatpush1.msra.mxu0 0.0
    %2046 = vmatprep.subr.mxu0 0.0
    %2047 = vmatpush1.msra.mxu0 0.0
    %2048 = vmatprep.mubr.f32.mxu0 0.0
    %2049 = vmatmul.mubr.f32.gmra.mrb[0].mxu0 %v1979
    %v2050 = vpop.f32.mrb[0].mxu0
    %v2051 = vadd.f32 0.0, %v2050
    %v2052 = vpop.f32.mrb[0].mxu0
    %2053 = vdwg.mxu0
    %v2055 = vsel %vm1288, %v1686, 0
    %v2058 = vsel %vm1292, %v1754, 0
    %2060 = vmatprep.subr.mxu0 0.0
    %2061 = vmatpush1.msra.mxu0 %v2058
    %2062 = vmatprep.subr.mxu0 0.0
    %2063 = vmatpush1.msra.mxu0 0.0
    %2064 = vmatprep.subr.mxu0 0.0
    %2065 = vmatpush1.msra.mxu0 0.0
    %2066 = vmatprep.subr.mxu0 0.0
    %2067 = vmatpush1.msra.mxu0 0.0
    %2068 = vmatprep.subr.mxu0 0.0
    %2069 = vmatpush1.msra.mxu0 0.0
    %2070 = vmatprep.subr.mxu0 0.0
    %2071 = vmatpush1.msra.mxu0 0.0
    %2072 = vmatprep.subr.mxu0 0.0
    %2073 = vmatpush1.msra.mxu0 0.0
    %2074 = vmatprep.subr.mxu0 0.0
    %2075 = vmatpush1.msra.mxu0 0.0
    %2076 = vmatprep.subr.mxu0 0.0
    %2077 = vmatpush1.msra.mxu0 0.0
    %2078 = vmatprep.subr.mxu0 0.0
    %2079 = vmatpush1.msra.mxu0 0.0
    %2080 = vmatprep.subr.mxu0 0.0
    %2081 = vmatpush1.msra.mxu0 0.0
    %2082 = vmatprep.subr.mxu0 0.0
    %2083 = vmatpush1.msra.mxu0 0.0
    %2084 = vmatprep.subr.mxu0 0.0
    %2085 = vmatpush1.msra.mxu0 0.0
    %2086 = vmatprep.subr.mxu0 0.0
    %2087 = vmatpush1.msra.mxu0 0.0
    %2088 = vmatprep.subr.mxu0 0.0
    %2089 = vmatpush1.msra.mxu0 0.0
    %2090 = vmatprep.subr.mxu0 0.0
    %2091 = vmatpush1.msra.mxu0 0.0
    %2092 = vmatprep.subr.mxu0 0.0
    %2093 = vmatpush1.msra.mxu0 0.0
    %2094 = vmatprep.subr.mxu0 0.0
    %2095 = vmatpush1.msra.mxu0 0.0
    %2096 = vmatprep.subr.mxu0 0.0
    %2097 = vmatpush1.msra.mxu0 0.0
    %2098 = vmatprep.subr.mxu0 0.0
    %2099 = vmatpush1.msra.mxu0 0.0
    %2100 = vmatprep.subr.mxu0 0.0
    %2101 = vmatpush1.msra.mxu0 0.0
    %2102 = vmatprep.subr.mxu0 0.0
    %2103 = vmatpush1.msra.mxu0 0.0
    %2104 = vmatprep.subr.mxu0 0.0
    %2105 = vmatpush1.msra.mxu0 0.0
    %2106 = vmatprep.subr.mxu0 0.0
    %2107 = vmatpush1.msra.mxu0 0.0
    %2108 = vmatprep.subr.mxu0 0.0
    %2109 = vmatpush1.msra.mxu0 0.0
    %2110 = vmatprep.subr.mxu0 0.0
    %2111 = vmatpush1.msra.mxu0 0.0
    %2112 = vmatprep.subr.mxu0 0.0
    %2113 = vmatpush1.msra.mxu0 0.0
    %2114 = vmatprep.subr.mxu0 0.0
    %2115 = vmatpush1.msra.mxu0 0.0
    %2116 = vmatprep.subr.mxu0 0.0
    %2117 = vmatpush1.msra.mxu0 0.0
    %2118 = vmatprep.subr.mxu0 0.0
    %2119 = vmatpush1.msra.mxu0 0.0
    %2120 = vmatprep.subr.mxu0 0.0
    %2121 = vmatpush1.msra.mxu0 0.0
    %2122 = vmatprep.subr.mxu0 0.0
    %2123 = vmatpush1.msra.mxu0 0.0
    %2124 = vmatprep.mubr.f32.mxu0 0.0
    %2125 = vmatmul.mubr.f32.gmra.mrb[0].mxu0 %v2055
    %v2126 = vpop.f32.mrb[0].mxu0
    %v2127 = vadd.f32 %v2051, %v2126
    %v2128 = vpop.f32.mrb[0].mxu0
    %2129 = vdwg.mxu0
    %v2130 = vadd.f32 %v1535, %v2127
    %2131 = vmatprep.subr.mxu0 0.0
    %2132 = vmatpush1.msra.mxu0 %v1443
    %2133 = vmatprep.subr.mxu0 0.0
    %2134 = vmatpush1.msra.mxu0 %v1444
    %2135 = vmatprep.subr.mxu0 0.0
    %2136 = vmatpush1.msra.mxu0 %v1445
    %2137 = vmatprep.subr.mxu0 0.0
    %2138 = vmatpush1.msra.mxu0 %v1446
    %2139 = vmatprep.subr.mxu0 0.0
    %2140 = vmatpush1.msra.mxu0 %v1447
    %2141 = vmatprep.subr.mxu0 0.0
    %2142 = vmatpush1.msra.mxu0 %v1448
    %2143 = vmatprep.subr.mxu0 0.0
    %2144 = vmatpush1.msra.mxu0 %v1449
    %2145 = vmatprep.subr.mxu0 0.0
    %2146 = vmatpush1.msra.mxu0 %v1450
    %2147 = vmatprep.subr.mxu0 0.0
    %2148 = vmatpush1.msra.mxu0 %v1451
    %2149 = vmatprep.subr.mxu0 0.0
    %2150 = vmatpush1.msra.mxu0 %v1452
    %2151 = vmatprep.subr.mxu0 0.0
    %2152 = vmatpush1.msra.mxu0 %v1453
    %2153 = vmatprep.subr.mxu0 0.0
    %2154 = vmatpush1.msra.mxu0 %v1454
    %2155 = vmatprep.subr.mxu0 0.0
    %2156 = vmatpush1.msra.mxu0 %v1455
    %2157 = vmatprep.subr.mxu0 0.0
    %2158 = vmatpush1.msra.mxu0 %v1456
    %2159 = vmatprep.subr.mxu0 0.0
    %2160 = vmatpush1.msra.mxu0 %v1457
    %2161 = vmatprep.subr.mxu0 0.0
    %2162 = vmatpush1.msra.mxu0 %v1458
    %2163 = vmatprep.subr.mxu0 0.0
    %2164 = vmatpush1.msra.mxu0 0.0
    %2165 = vmatprep.subr.mxu0 0.0
    %2166 = vmatpush1.msra.mxu0 0.0
    %2167 = vmatprep.subr.mxu0 0.0
    %2168 = vmatpush1.msra.mxu0 0.0
    %2169 = vmatprep.subr.mxu0 0.0
    %2170 = vmatpush1.msra.mxu0 0.0
    %2171 = vmatprep.subr.mxu0 0.0
    %2172 = vmatpush1.msra.mxu0 0.0
    %2173 = vmatprep.subr.mxu0 0.0
    %2174 = vmatpush1.msra.mxu0 0.0
    %2175 = vmatprep.subr.mxu0 0.0
    %2176 = vmatpush1.msra.mxu0 0.0
    %2177 = vmatprep.subr.mxu0 0.0
    %2178 = vmatpush1.msra.mxu0 0.0
    %2179 = vmatprep.subr.mxu0 0.0
    %2180 = vmatpush1.msra.mxu0 0.0
    %2181 = vmatprep.subr.mxu0 0.0
    %2182 = vmatpush1.msra.mxu0 0.0
    %2183 = vmatprep.subr.mxu0 0.0
    %2184 = vmatpush1.msra.mxu0 0.0
    %2185 = vmatprep.subr.mxu0 0.0
    %2186 = vmatpush1.msra.mxu0 0.0
    %2187 = vmatprep.subr.mxu0 0.0
    %2188 = vmatpush1.msra.mxu0 0.0
    %2189 = vmatprep.subr.mxu0 0.0
    %2190 = vmatpush1.msra.mxu0 0.0
    %2191 = vmatprep.subr.mxu0 0.0
    %2192 = vmatpush1.msra.mxu0 0.0
    %2193 = vmatprep.subr.mxu0 0.0
    %2194 = vmatpush1.msra.mxu0 0.0
    %2195 = vmatprep.mubr.f32.mxu0 0.0
    %2196 = vmatmul.mubr.f32.gmra.mrb[0].mxu0 %v2130
    %v2197 = vpop.f32.mrb[0].mxu0
    %v2198 = vadd.f32 %v1463, %v2197
    %v2199 = vpop.f32.mrb[0].mxu0
    %2200 = vdwg.mxu0
    %v2201 = vmax.f32 %v2198, 0.0
    %v2202 = vadd.f32 %v1535, %v2201
    %v2203 = vsel %vm1292, %v2202, 0.0
    %v2204 = vrot.slane %v2203, 4
    %v2205 = vadd.f32 %v2203, %v2204
    %v2206 = vrot.slane %v2205, 2
    %v2207 = vadd.f32 %v2205, %v2206
    %v2208 = vrot.slane %v2207, 1
    %v2209 = vadd.f32 %v2207, %v2208
    %v2210 = vrcp.pop 7.0
    %v2211 = vmul.f32 %v2209, %v2210
    %v2212 = vld [vmem:[#allocation3 + $0x880] sm:$0xff]
    %v2213 = vld [vmem:[#allocation3 + $0x888] sm:$0xff]
    %v2214 = vld [vmem:[#allocation3 + $0x890] sm:$0xff]
    %v2215 = vld [vmem:[#allocation3 + $0x898] sm:$0xff]
    %v2216 = vld [vmem:[#allocation3 + $0x8a0] sm:$0xff]
    %v2217 = vld [vmem:[#allocation3 + $0x8a8] sm:$0xff]
    %v2218 = vld [vmem:[#allocation3 + $0x8b0] sm:$0xff]
    %v2219 = vld [vmem:[#allocation3 + $0x8b8] sm:$0xff]
    %v2220 = vld [vmem:[#allocation3 + $0x8c0] sm:$0xff]
    %v2221 = vld [vmem:[#allocation3 + $0x8c8] sm:$0xff]
    %v2222 = vld [vmem:[#allocation3 + $0x8d0] sm:$0xff]
    %v2223 = vld [vmem:[#allocation3 + $0x8d8] sm:$0xff]
    %v2224 = vld [vmem:[#allocation3 + $0x8e0] sm:$0xff]
    %v2225 = vld [vmem:[#allocation3 + $0x8e8] sm:$0xff]
    %v2226 = vld [vmem:[#allocation3 + $0x8f0] sm:$0xff]
    %v2227 = vld [vmem:[#allocation3 + $0x8f8] sm:$0xff]
    %v2228 = vld [vmem:[#allocation6 + $0xc] sm:$0x1]
    %2229 = vmatprep.subr.mxu0 0.0
    %2230 = vmatpush1.msra.mxu0 %v2212
    %2231 = vmatprep.subr.mxu0 0.0
    %2232 = vmatpush1.msra.mxu0 %v2213
    %2233 = vmatprep.subr.mxu0 0.0
    %2234 = vmatpush1.msra.mxu0 %v2214
    %2235 = vmatprep.subr.mxu0 0.0
    %2236 = vmatpush1.msra.mxu0 %v2215
    %2237 = vmatprep.subr.mxu0 0.0
    %2238 = vmatpush1.msra.mxu0 %v2216
    %2239 = vmatprep.subr.mxu0 0.0
    %2240 = vmatpush1.msra.mxu0 %v2217
    %2241 = vmatprep.subr.mxu0 0.0
    %2242 = vmatpush1.msra.mxu0 %v2218
    %2243 = vmatprep.subr.mxu0 0.0
    %2244 = vmatpush1.msra.mxu0 %v2219
    %2245 = vmatprep.subr.mxu0 0.0
    %2246 = vmatpush1.msra.mxu0 %v2220
    %2247 = vmatprep.subr.mxu0 0.0
    %2248 = vmatpush1.msra.mxu0 %v2221
    %2249 = vmatprep.subr.mxu0 0.0
    %2250 = vmatpush1.msra.mxu0 %v2222
    %2251 = vmatprep.subr.mxu0 0.0
    %2252 = vmatpush1.msra.mxu0 %v2223
    %2253 = vmatprep.subr.mxu0 0.0
    %2254 = vmatpush1.msra.mxu0 %v2224
    %2255 = vmatprep.subr.mxu0 0.0
    %2256 = vmatpush1.msra.mxu0 %v2225
    %2257 = vmatprep.subr.mxu0 0.0
    %2258 = vmatpush1.msra.mxu0 %v2226
    %2259 = vmatprep.subr.mxu0 0.0
    %2260 = vmatpush1.msra.mxu0 %v2227
    %2261 = vmatprep.subr.mxu0 0.0
    %2262 = vmatpush1.msra.mxu0 0.0
    %2263 = vmatprep.subr.mxu0 0.0
    %2264 = vmatpush1.msra.mxu0 0.0
    %2265 = vmatprep.subr.mxu0 0.0
    %2266 = vmatpush1.msra.mxu0 0.0
    %2267 = vmatprep.subr.mxu0 0.0
    %2268 = vmatpush1.msra.mxu0 0.0
    %2269 = vmatprep.subr.mxu0 0.0
    %2270 = vmatpush1.msra.mxu0 0.0
    %2271 = vmatprep.subr.mxu0 0.0
    %2272 = vmatpush1.msra.mxu0 0.0
    %2273 = vmatprep.subr.mxu0 0.0
    %2274 = vmatpush1.msra.mxu0 0.0
    %2275 = vmatprep.subr.mxu0 0.0
    %2276 = vmatpush1.msra.mxu0 0.0
    %2277 = vmatprep.subr.mxu0 0.0
    %2278 = vmatpush1.msra.mxu0 0.0
    %2279 = vmatprep.subr.mxu0 0.0
    %2280 = vmatpush1.msra.mxu0 0.0
    %2281 = vmatprep.subr.mxu0 0.0
    %2282 = vmatpush1.msra.mxu0 0.0
    %2283 = vmatprep.subr.mxu0 0.0
    %2284 = vmatpush1.msra.mxu0 0.0
    %2285 = vmatprep.subr.mxu0 0.0
    %2286 = vmatpush1.msra.mxu0 0.0
    %2287 = vmatprep.subr.mxu0 0.0
    %2288 = vmatpush1.msra.mxu0 0.0
    %2289 = vmatprep.subr.mxu0 0.0
    %2290 = vmatpush1.msra.mxu0 0.0
    %2291 = vmatprep.subr.mxu0 0.0
    %2292 = vmatpush1.msra.mxu0 0.0
    %2293 = vmatprep.mubr.f32.mxu0 0.0
    %2294 = vmatmul.mubr.f32.gmra.mrb[0].mxu0 %v2211
    %v2295 = vpop.f32.mrb[0].mxu0
    %v2296 = vadd.f32 %v2228, %v2295
    %v2297 = vpop.f32.mrb[0].mxu0
    %2298 = vdwg.mxu0
    %v2299 = vld [vmem:[#allocation3 + $0x900] sm:$0xff]
    %v2300 = vld [vmem:[#allocation3 + $0x908] sm:$0xff]
    %v2301 = vld [vmem:[#allocation3 + $0x910] sm:$0xff]
    %v2302 = vld [vmem:[#allocation3 + $0x918] sm:$0xff]
    %v2303 = vld [vmem:[#allocation3 + $0x920] sm:$0xff]
    %v2304 = vld [vmem:[#allocation3 + $0x928] sm:$0xff]
    %v2305 = vld [vmem:[#allocation3 + $0x930] sm:$0xff]
    %v2306 = vld [vmem:[#allocation3 + $0x938] sm:$0xff]
    %v2307 = vld [vmem:[#allocation3 + $0x940] sm:$0xff]
    %v2308 = vld [vmem:[#allocation3 + $0x948] sm:$0xff]
    %v2309 = vld [vmem:[#allocation3 + $0x950] sm:$0xff]
    %v2310 = vld [vmem:[#allocation3 + $0x958] sm:$0xff]
    %v2311 = vld [vmem:[#allocation3 + $0x960] sm:$0xff]
    %v2312 = vld [vmem:[#allocation3 + $0x968] sm:$0xff]
    %v2313 = vld [vmem:[#allocation3 + $0x970] sm:$0xff]
    %v2314 = vld [vmem:[#allocation3 + $0x978] sm:$0xff]
    %v2315 = vld [vmem:[#allocation3 + $0x980] sm:$0xff]
    %v2316 = vld [vmem:[#allocation3 + $0x988] sm:$0xff]
    %v2317 = vld [vmem:[#allocation3 + $0x990] sm:$0xff]
    %v2318 = vld [vmem:[#allocation3 + $0x998] sm:$0xff]
    %v2319 = vld [vmem:[#allocation3 + $0x9a0] sm:$0xff]
    %v2320 = vld [vmem:[#allocation3 + $0x9a8] sm:$0xff]
    %v2321 = vld [vmem:[#allocation3 + $0x9b0] sm:$0xff]
    %v2322 = vld [vmem:[#allocation3 + $0x9b8] sm:$0xff]
    %v2323 = vld [vmem:[#allocation3 + $0x9c0] sm:$0xff]
    %v2324 = vld [vmem:[#allocation3 + $0x9c8] sm:$0xff]
    %v2325 = vld [vmem:[#allocation3 + $0x9d0] sm:$0xff]
    %v2326 = vld [vmem:[#allocation3 + $0x9d8] sm:$0xff]
    %v2327 = vld [vmem:[#allocation3 + $0x9e0] sm:$0xff]
    %v2328 = vld [vmem:[#allocation3 + $0x9e8] sm:$0xff]
    %v2329 = vld [vmem:[#allocation3 + $0x9f0] sm:$0xff]
    %v2330 = vld [vmem:[#allocation3 + $0x9f8] sm:$0xff]
    %2331 = vmatprep.subr.mxu0 0.0
    %2332 = vmatpush1.msra.mxu0 %v2315
    %2333 = vmatprep.subr.mxu0 0.0
    %2334 = vmatpush1.msra.mxu0 %v2316
    %2335 = vmatprep.subr.mxu0 0.0
    %2336 = vmatpush1.msra.mxu0 %v2317
    %2337 = vmatprep.subr.mxu0 0.0
    %2338 = vmatpush1.msra.mxu0 %v2318
    %2339 = vmatprep.subr.mxu0 0.0
    %2340 = vmatpush1.msra.mxu0 %v2319
    %2341 = vmatprep.subr.mxu0 0.0
    %2342 = vmatpush1.msra.mxu0 %v2320
    %2343 = vmatprep.subr.mxu0 0.0
    %2344 = vmatpush1.msra.mxu0 %v2321
    %2345 = vmatprep.subr.mxu0 0.0
    %2346 = vmatpush1.msra.mxu0 %v2322
    %2347 = vmatprep.subr.mxu0 0.0
    %2348 = vmatpush1.msra.mxu0 %v2323
    %2349 = vmatprep.subr.mxu0 0.0
    %2350 = vmatpush1.msra.mxu0 %v2324
    %2351 = vmatprep.subr.mxu0 0.0
    %2352 = vmatpush1.msra.mxu0 %v2325
    %2353 = vmatprep.subr.mxu0 0.0
    %2354 = vmatpush1.msra.mxu0 %v2326
    %2355 = vmatprep.subr.mxu0 0.0
    %2356 = vmatpush1.msra.mxu0 %v2327
    %2357 = vmatprep.subr.mxu0 0.0
    %2358 = vmatpush1.msra.mxu0 %v2328
    %2359 = vmatprep.subr.mxu0 0.0
    %2360 = vmatpush1.msra.mxu0 %v2329
    %2361 = vmatprep.subr.mxu0 0.0
    %2362 = vmatpush1.msra.mxu0 %v2330
    %2363 = vmatprep.subr.mxu0 0.0
    %2364 = vmatpush1.msra.mxu0 0.0
    %2365 = vmatprep.subr.mxu0 0.0
    %2366 = vmatpush1.msra.mxu0 0.0
    %2367 = vmatprep.subr.mxu0 0.0
    %2368 = vmatpush1.msra.mxu0 0.0
    %2369 = vmatprep.subr.mxu0 0.0
    %2370 = vmatpush1.msra.mxu0 0.0
    %2371 = vmatprep.subr.mxu0 0.0
    %2372 = vmatpush1.msra.mxu0 0.0
    %2373 = vmatprep.subr.mxu0 0.0
    %2374 = vmatpush1.msra.mxu0 0.0
    %2375 = vmatprep.subr.mxu0 0.0
    %2376 = vmatpush1.msra.mxu0 0.0
    %2377 = vmatprep.subr.mxu0 0.0
    %2378 = vmatpush1.msra.mxu0 0.0
    %2379 = vmatprep.subr.mxu0 0.0
    %2380 = vmatpush1.msra.mxu0 0.0
    %2381 = vmatprep.subr.mxu0 0.0
    %2382 = vmatpush1.msra.mxu0 0.0
    %2383 = vmatprep.subr.mxu0 0.0
    %2384 = vmatpush1.msra.mxu0 0.0
    %2385 = vmatprep.subr.mxu0 0.0
    %2386 = vmatpush1.msra.mxu0 0.0
    %2387 = vmatprep.subr.mxu0 0.0
    %2388 = vmatpush1.msra.mxu0 0.0
    %2389 = vmatprep.subr.mxu0 0.0
    %2390 = vmatpush1.msra.mxu0 0.0
    %2391 = vmatprep.subr.mxu0 0.0
    %2392 = vmatpush1.msra.mxu0 0.0
    %2393 = vmatprep.subr.mxu0 0.0
    %2394 = vmatpush1.msra.mxu0 0.0
    %2395 = vmatprep.mubr.f32.mxu0 0.0
    %2396 = vmatmul.mubr.f32.gmra.mrb[0].mxu0 %v2296
    %v2397 = vpop.f32.mrb[0].mxu0
    %v2398 = vadd.f32 0.0, %v2397
    %v2399 = vpop.f32.mrb[0].mxu0
    %2400 = vdwg.mxu0
    %2401 = vmatprep.subr.mxu0 0.0
    %2402 = vmatpush1.msra.mxu0 %v2299
    %2403 = vmatprep.subr.mxu0 0.0
    %2404 = vmatpush1.msra.mxu0 %v2300
    %2405 = vmatprep.subr.mxu0 0.0
    %2406 = vmatpush1.msra.mxu0 %v2301
    %2407 = vmatprep.subr.mxu0 0.0
    %2408 = vmatpush1.msra.mxu0 %v2302
    %2409 = vmatprep.subr.mxu0 0.0
    %2410 = vmatpush1.msra.mxu0 %v2303
    %2411 = vmatprep.subr.mxu0 0.0
    %2412 = vmatpush1.msra.mxu0 %v2304
    %2413 = vmatprep.subr.mxu0 0.0
    %2414 = vmatpush1.msra.mxu0 %v2305
    %2415 = vmatprep.subr.mxu0 0.0
    %2416 = vmatpush1.msra.mxu0 %v2306
    %2417 = vmatprep.subr.mxu0 0.0
    %2418 = vmatpush1.msra.mxu0 %v2307
    %2419 = vmatprep.subr.mxu0 0.0
    %2420 = vmatpush1.msra.mxu0 %v2308
    %2421 = vmatprep.subr.mxu0 0.0
    %2422 = vmatpush1.msra.mxu0 %v2309
    %2423 = vmatprep.subr.mxu0 0.0
    %2424 = vmatpush1.msra.mxu0 %v2310
    %2425 = vmatprep.subr.mxu0 0.0
    %2426 = vmatpush1.msra.mxu0 %v2311
    %2427 = vmatprep.subr.mxu0 0.0
    %2428 = vmatpush1.msra.mxu0 %v2312
    %2429 = vmatprep.subr.mxu0 0.0
    %2430 = vmatpush1.msra.mxu0 %v2313
    %2431 = vmatprep.subr.mxu0 0.0
    %2432 = vmatpush1.msra.mxu0 %v2314
    %2433 = vmatprep.subr.mxu0 0.0
    %2434 = vmatpush1.msra.mxu0 0.0
    %2435 = vmatprep.subr.mxu0 0.0
    %2436 = vmatpush1.msra.mxu0 0.0
    %2437 = vmatprep.subr.mxu0 0.0
    %2438 = vmatpush1.msra.mxu0 0.0
    %2439 = vmatprep.subr.mxu0 0.0
    %2440 = vmatpush1.msra.mxu0 0.0
    %2441 = vmatprep.subr.mxu0 0.0
    %2442 = vmatpush1.msra.mxu0 0.0
    %2443 = vmatprep.subr.mxu0 0.0
    %2444 = vmatpush1.msra.mxu0 0.0
    %2445 = vmatprep.subr.mxu0 0.0
    %2446 = vmatpush1.msra.mxu0 0.0
    %2447 = vmatprep.subr.mxu0 0.0
    %2448 = vmatpush1.msra.mxu0 0.0
    %2449 = vmatprep.subr.mxu0 0.0
    %2450 = vmatpush1.msra.mxu0 0.0
    %2451 = vmatprep.subr.mxu0 0.0
    %2452 = vmatpush1.msra.mxu0 0.0
    %2453 = vmatprep.subr.mxu0 0.0
    %2454 = vmatpush1.msra.mxu0 0.0
    %2455 = vmatprep.subr.mxu0 0.0
    %2456 = vmatpush1.msra.mxu0 0.0
    %2457 = vmatprep.subr.mxu0 0.0
    %2458 = vmatpush1.msra.mxu0 0.0
    %2459 = vmatprep.subr.mxu0 0.0
    %2460 = vmatpush1.msra.mxu0 0.0
    %2461 = vmatprep.subr.mxu0 0.0
    %2462 = vmatpush1.msra.mxu0 0.0
    %2463 = vmatprep.subr.mxu0 0.0
    %2464 = vmatpush1.msra.mxu0 0.0
    %2465 = vmatprep.mubr.f32.mxu0 0.0
    %2466 = vmatmul.mubr.f32.gmra.mrb[0].mxu0 %v2202
    %v2467 = vpop.f32.mrb[0].mxu0
    %v2468 = vadd.f32 %v2398, %v2467
    %v2469 = vpop.f32.mrb[0].mxu0
    %2470 = vdwg.mxu0
    %v2471 = vld [vmem:[#allocation6 + $0xd] sm:$0x1]
    %v2472 = vadd.f32 %v2468, %v2471
    %2473 = vst [vmem:[#allocation9] sm:$0x1] %v2472
    %v2474 = vld [vmem:[#allocation3 + $0x180] sm:$0xff]
    %v2475 = vld [vmem:[#allocation3 + $0x188] sm:$0xff]
    %v2476 = vld [vmem:[#allocation3 + $0x190] sm:$0xff]
    %v2477 = vld [vmem:[#allocation3 + $0x198] sm:$0xff]
    %v2478 = vld [vmem:[#allocation3 + $0x1a0] sm:$0xff]
    %v2479 = vld [vmem:[#allocation3 + $0x1a8] sm:$0xff]
    %v2480 = vld [vmem:[#allocation3 + $0x1b0] sm:$0xff]
    %v2481 = vld [vmem:[#allocation3 + $0x1b8] sm:$0xff]
    %v2482 = vld [vmem:[#allocation3 + $0x1c0] sm:$0xff]
    %v2483 = vld [vmem:[#allocation3 + $0x1c8] sm:$0xff]
    %v2484 = vld [vmem:[#allocation3 + $0x1d0] sm:$0xff]
    %v2485 = vld [vmem:[#allocation3 + $0x1d8] sm:$0xff]
    %v2486 = vld [vmem:[#allocation3 + $0x1e0] sm:$0xff]
    %v2487 = vld [vmem:[#allocation3 + $0x1e8] sm:$0xff]
    %v2488 = vld [vmem:[#allocation3 + $0x1f0] sm:$0xff]
    %v2489 = vld [vmem:[#allocation3 + $0x1f8] sm:$0xff]
    %v2490 = vld [vmem:[#allocation6 + $0x3] sm:$0x1]
    %2491 = vmatprep.subr.mxu0 0.0
    %2492 = vmatpush1.msra.mxu0 %v2474
    %2493 = vmatprep.subr.mxu0 0.0
    %2494 = vmatpush1.msra.mxu0 %v2475
    %2495 = vmatprep.subr.mxu0 0.0
    %2496 = vmatpush1.msra.mxu0 %v2476
    %2497 = vmatprep.subr.mxu0 0.0
    %2498 = vmatpush1.msra.mxu0 %v2477
    %2499 = vmatprep.subr.mxu0 0.0
    %2500 = vmatpush1.msra.mxu0 %v2478
    %2501 = vmatprep.subr.mxu0 0.0
    %2502 = vmatpush1.msra.mxu0 %v2479
    %2503 = vmatprep.subr.mxu0 0.0
    %2504 = vmatpush1.msra.mxu0 %v2480
    %2505 = vmatprep.subr.mxu0 0.0
    %2506 = vmatpush1.msra.mxu0 %v2481
    %2507 = vmatprep.subr.mxu0 0.0
    %2508 = vmatpush1.msra.mxu0 %v2482
    %2509 = vmatprep.subr.mxu0 0.0
    %2510 = vmatpush1.msra.mxu0 %v2483
    %2511 = vmatprep.subr.mxu0 0.0
    %2512 = vmatpush1.msra.mxu0 %v2484
    %2513 = vmatprep.subr.mxu0 0.0
    %2514 = vmatpush1.msra.mxu0 %v2485
    %2515 = vmatprep.subr.mxu0 0.0
    %2516 = vmatpush1.msra.mxu0 %v2486
    %2517 = vmatprep.subr.mxu0 0.0
    %2518 = vmatpush1.msra.mxu0 %v2487
    %2519 = vmatprep.subr.mxu0 0.0
    %2520 = vmatpush1.msra.mxu0 %v2488
    %2521 = vmatprep.subr.mxu0 0.0
    %2522 = vmatpush1.msra.mxu0 %v2489
    %2523 = vmatprep.subr.mxu0 0.0
    %2524 = vmatpush1.msra.mxu0 0.0
    %2525 = vmatprep.subr.mxu0 0.0
    %2526 = vmatpush1.msra.mxu0 0.0
    %2527 = vmatprep.subr.mxu0 0.0
    %2528 = vmatpush1.msra.mxu0 0.0
    %2529 = vmatprep.subr.mxu0 0.0
    %2530 = vmatpush1.msra.mxu0 0.0
    %2531 = vmatprep.subr.mxu0 0.0
    %2532 = vmatpush1.msra.mxu0 0.0
    %2533 = vmatprep.subr.mxu0 0.0
    %2534 = vmatpush1.msra.mxu0 0.0
    %2535 = vmatprep.subr.mxu0 0.0
    %2536 = vmatpush1.msra.mxu0 0.0
    %2537 = vmatprep.subr.mxu0 0.0
    %2538 = vmatpush1.msra.mxu0 0.0
    %2539 = vmatprep.subr.mxu0 0.0
    %2540 = vmatpush1.msra.mxu0 0.0
    %2541 = vmatprep.subr.mxu0 0.0
    %2542 = vmatpush1.msra.mxu0 0.0
    %2543 = vmatprep.subr.mxu0 0.0
    %2544 = vmatpush1.msra.mxu0 0.0
    %2545 = vmatprep.subr.mxu0 0.0
    %2546 = vmatpush1.msra.mxu0 0.0
    %2547 = vmatprep.subr.mxu0 0.0
    %2548 = vmatpush1.msra.mxu0 0.0
    %2549 = vmatprep.subr.mxu0 0.0
    %2550 = vmatpush1.msra.mxu0 0.0
    %2551 = vmatprep.subr.mxu0 0.0
    %2552 = vmatpush1.msra.mxu0 0.0
    %2553 = vmatprep.subr.mxu0 0.0
    %2554 = vmatpush1.msra.mxu0 0.0
    %2555 = vmatprep.mubr.f32.mxu0 0.0
    %2556 = vmatmul.mubr.f32.gmra.mrb[0].mxu0 %v2296
    %v2557 = vpop.f32.mrb[0].mxu0
    %v2558 = vadd.f32 %v2490, %v2557
    %v2559 = vpop.f32.mrb[0].mxu0
    %2560 = vdwg.mxu0
    %v2561 = vld [vmem:[#allocation3 + $0x100] sm:$0xff]
    %v2562 = vld [vmem:[#allocation3 + $0x108] sm:$0xff]
    %v2563 = vld [vmem:[#allocation3 + $0x110] sm:$0xff]
    %v2564 = vld [vmem:[#allocation3 + $0x118] sm:$0xff]
    %v2565 = vld [vmem:[#allocation3 + $0x120] sm:$0xff]
    %v2566 = vld [vmem:[#allocation3 + $0x128] sm:$0xff]
    %v2567 = vld [vmem:[#allocation3 + $0x130] sm:$0xff]
    %v2568 = vld [vmem:[#allocation3 + $0x138] sm:$0xff]
    %v2569 = vld [vmem:[#allocation3 + $0x140] sm:$0xff]
    %v2570 = vld [vmem:[#allocation3 + $0x148] sm:$0xff]
    %v2571 = vld [vmem:[#allocation3 + $0x150] sm:$0xff]
    %v2572 = vld [vmem:[#allocation3 + $0x158] sm:$0xff]
    %v2573 = vld [vmem:[#allocation3 + $0x160] sm:$0xff]
    %v2574 = vld [vmem:[#allocation3 + $0x168] sm:$0xff]
    %v2575 = vld [vmem:[#allocation3 + $0x170] sm:$0xff]
    %v2576 = vld [vmem:[#allocation3 + $0x178] sm:$0xff]
    %v2577 = vlaneseq
    %v2578 = vshrl.u32 %v2577, 7
    %v2579 = vsub.s32 0, %v2578
    %v2580 = vrot.slane %v2558, %v2579
    %v2582 = vrot.slane %v2202, 1
    %2584 = vmatprep.subr.mxu0 0.0
    %2585 = vmatpush1.msra.mxu0 %v2561
    %2586 = vmatprep.subr.mxu0 0.0
    %2587 = vmatpush1.msra.mxu0 %v2562
    %2588 = vmatprep.subr.mxu0 0.0
    %2589 = vmatpush1.msra.mxu0 %v2563
    %2590 = vmatprep.subr.mxu0 0.0
    %2591 = vmatpush1.msra.mxu0 %v2564
    %2592 = vmatprep.subr.mxu0 0.0
    %2593 = vmatpush1.msra.mxu0 %v2565
    %2594 = vmatprep.subr.mxu0 0.0
    %2595 = vmatpush1.msra.mxu0 %v2566
    %2596 = vmatprep.subr.mxu0 0.0
    %2597 = vmatpush1.msra.mxu0 %v2567
    %2598 = vmatprep.subr.mxu0 0.0
    %2599 = vmatpush1.msra.mxu0 %v2568
    %2600 = vmatprep.subr.mxu0 0.0
    %2601 = vmatpush1.msra.mxu0 %v2569
    %2602 = vmatprep.subr.mxu0 0.0
    %2603 = vmatpush1.msra.mxu0 %v2570
    %2604 = vmatprep.subr.mxu0 0.0
    %2605 = vmatpush1.msra.mxu0 %v2571
    %2606 = vmatprep.subr.mxu0 0.0
    %2607 = vmatpush1.msra.mxu0 %v2572
    %2608 = vmatprep.subr.mxu0 0.0
    %2609 = vmatpush1.msra.mxu0 %v2573
    %2610 = vmatprep.subr.mxu0 0.0
    %2611 = vmatpush1.msra.mxu0 %v2574
    %2612 = vmatprep.subr.mxu0 0.0
    %2613 = vmatpush1.msra.mxu0 %v2575
    %2614 = vmatprep.subr.mxu0 0.0
    %2615 = vmatpush1.msra.mxu0 %v2576
    %2616 = vmatprep.subr.mxu0 0.0
    %2617 = vmatpush1.msra.mxu0 0.0
    %2618 = vmatprep.subr.mxu0 0.0
    %2619 = vmatpush1.msra.mxu0 0.0
    %2620 = vmatprep.subr.mxu0 0.0
    %2621 = vmatpush1.msra.mxu0 0.0
    %2622 = vmatprep.subr.mxu0 0.0
    %2623 = vmatpush1.msra.mxu0 0.0
    %2624 = vmatprep.subr.mxu0 0.0
    %2625 = vmatpush1.msra.mxu0 0.0
    %2626 = vmatprep.subr.mxu0 0.0
    %2627 = vmatpush1.msra.mxu0 0.0
    %2628 = vmatprep.subr.mxu0 0.0
    %2629 = vmatpush1.msra.mxu0 0.0
    %2630 = vmatprep.subr.mxu0 0.0
    %2631 = vmatpush1.msra.mxu0 0.0
    %2632 = vmatprep.subr.mxu0 0.0
    %2633 = vmatpush1.msra.mxu0 0.0
    %2634 = vmatprep.subr.mxu0 0.0
    %2635 = vmatpush1.msra.mxu0 0.0
    %2636 = vmatprep.subr.mxu0 0.0
    %2637 = vmatpush1.msra.mxu0 0.0
    %2638 = vmatprep.subr.mxu0 0.0
    %2639 = vmatpush1.msra.mxu0 0.0
    %2640 = vmatprep.subr.mxu0 0.0
    %2641 = vmatpush1.msra.mxu0 0.0
    %2642 = vmatprep.subr.mxu0 0.0
    %2643 = vmatpush1.msra.mxu0 0.0
    %2644 = vmatprep.subr.mxu0 0.0
    %2645 = vmatpush1.msra.mxu0 0.0
    %2646 = vmatprep.subr.mxu0 0.0
    %2647 = vmatpush1.msra.mxu0 0.0
    %2648 = vmatprep.mubr.f32.mxu0 0.0
    %2649 = vmatmul.mubr.f32.gmra.mrb[0].mxu0 %v2582
    %v2650 = vpop.f32.mrb[0].mxu0
    %v2651 = vadd.f32 %v2580, %v2650
    %v2652 = vpop.f32.mrb[0].mxu0
    %2653 = vdwg.mxu0
    %2654 = vst [vmem:[#allocation9 + $0x1] sm:$0x3] %v2651
    %v2655 = vld [vmem:[#allocation3 + $0x380] sm:$0xff]
    %v2656 = vld [vmem:[#allocation3 + $0x388] sm:$0xff]
    %v2657 = vld [vmem:[#allocation3 + $0x390] sm:$0xff]
    %v2658 = vld [vmem:[#allocation3 + $0x398] sm:$0xff]
    %v2659 = vld [vmem:[#allocation3 + $0x3a0] sm:$0xff]
    %v2660 = vld [vmem:[#allocation3 + $0x3a8] sm:$0xff]
    %v2661 = vld [vmem:[#allocation3 + $0x3b0] sm:$0xff]
    %v2662 = vld [vmem:[#allocation3 + $0x3b8] sm:$0xff]
    %v2663 = vld [vmem:[#allocation3 + $0x3c0] sm:$0xff]
    %v2664 = vld [vmem:[#allocation3 + $0x3c8] sm:$0xff]
    %v2665 = vld [vmem:[#allocation3 + $0x3d0] sm:$0xff]
    %v2666 = vld [vmem:[#allocation3 + $0x3d8] sm:$0xff]
    %v2667 = vld [vmem:[#allocation3 + $0x3e0] sm:$0xff]
    %v2668 = vld [vmem:[#allocation3 + $0x3e8] sm:$0xff]
    %v2669 = vld [vmem:[#allocation3 + $0x3f0] sm:$0xff]
    %v2670 = vld [vmem:[#allocation3 + $0x3f8] sm:$0xff]
    %v2671 = vld [vmem:[#allocation6 + $0x6] sm:$0x1]
    %2672 = vmatprep.subr.mxu0 0.0
    %2673 = vmatpush1.msra.mxu0 %v2655
    %2674 = vmatprep.subr.mxu0 0.0
    %2675 = vmatpush1.msra.mxu0 %v2656
    %2676 = vmatprep.subr.mxu0 0.0
    %2677 = vmatpush1.msra.mxu0 %v2657
    %2678 = vmatprep.subr.mxu0 0.0
    %2679 = vmatpush1.msra.mxu0 %v2658
    %2680 = vmatprep.subr.mxu0 0.0
    %2681 = vmatpush1.msra.mxu0 %v2659
    %2682 = vmatprep.subr.mxu0 0.0
    %2683 = vmatpush1.msra.mxu0 %v2660
    %2684 = vmatprep.subr.mxu0 0.0
    %2685 = vmatpush1.msra.mxu0 %v2661
    %2686 = vmatprep.subr.mxu0 0.0
    %2687 = vmatpush1.msra.mxu0 %v2662
    %2688 = vmatprep.subr.mxu0 0.0
    %2689 = vmatpush1.msra.mxu0 %v2663
    %2690 = vmatprep.subr.mxu0 0.0
    %2691 = vmatpush1.msra.mxu0 %v2664
    %2692 = vmatprep.subr.mxu0 0.0
    %2693 = vmatpush1.msra.mxu0 %v2665
    %2694 = vmatprep.subr.mxu0 0.0
    %2695 = vmatpush1.msra.mxu0 %v2666
    %2696 = vmatprep.subr.mxu0 0.0
    %2697 = vmatpush1.msra.mxu0 %v2667
    %2698 = vmatprep.subr.mxu0 0.0
    %2699 = vmatpush1.msra.mxu0 %v2668
    %2700 = vmatprep.subr.mxu0 0.0
    %2701 = vmatpush1.msra.mxu0 %v2669
    %2702 = vmatprep.subr.mxu0 0.0
    %2703 = vmatpush1.msra.mxu0 %v2670
    %2704 = vmatprep.subr.mxu0 0.0
    %2705 = vmatpush1.msra.mxu0 0.0
    %2706 = vmatprep.subr.mxu0 0.0
    %2707 = vmatpush1.msra.mxu0 0.0
    %2708 = vmatprep.subr.mxu0 0.0
    %2709 = vmatpush1.msra.mxu0 0.0
    %2710 = vmatprep.subr.mxu0 0.0
    %2711 = vmatpush1.msra.mxu0 0.0
    %2712 = vmatprep.subr.mxu0 0.0
    %2713 = vmatpush1.msra.mxu0 0.0
    %2714 = vmatprep.subr.mxu0 0.0
    %2715 = vmatpush1.msra.mxu0 0.0
    %2716 = vmatprep.subr.mxu0 0.0
    %2717 = vmatpush1.msra.mxu0 0.0
    %2718 = vmatprep.subr.mxu0 0.0
    %2719 = vmatpush1.msra.mxu0 0.0
    %2720 = vmatprep.subr.mxu0 0.0
    %2721 = vmatpush1.msra.mxu0 0.0
    %2722 = vmatprep.subr.mxu0 0.0
    %2723 = vmatpush1.msra.mxu0 0.0
    %2724 = vmatprep.subr.mxu0 0.0
    %2725 = vmatpush1.msra.mxu0 0.0
    %2726 = vmatprep.subr.mxu0 0.0
    %2727 = vmatpush1.msra.mxu0 0.0
    %2728 = vmatprep.subr.mxu0 0.0
    %2729 = vmatpush1.msra.mxu0 0.0
    %2730 = vmatprep.subr.mxu0 0.0
    %2731 = vmatpush1.msra.mxu0 0.0
    %2732 = vmatprep.subr.mxu0 0.0
    %2733 = vmatpush1.msra.mxu0 0.0
    %2734 = vmatprep.subr.mxu0 0.0
    %2735 = vmatpush1.msra.mxu0 0.0
    %2736 = vmatprep.mubr.f32.mxu0 0.0
    %2737 = vmatmul.mubr.f32.gmra.mrb[0].mxu0 %v2296
    %v2738 = vpop.f32.mrb[0].mxu0
    %v2739 = vadd.f32 %v2671, %v2738
    %v2740 = vpop.f32.mrb[0].mxu0
    %2741 = vdwg.mxu0
    %v2742 = vld [vmem:[#allocation3 + $0x300] sm:$0xff]
    %v2743 = vld [vmem:[#allocation3 + $0x308] sm:$0xff]
    %v2744 = vld [vmem:[#allocation3 + $0x310] sm:$0xff]
    %v2745 = vld [vmem:[#allocation3 + $0x318] sm:$0xff]
    %v2746 = vld [vmem:[#allocation3 + $0x320] sm:$0xff]
    %v2747 = vld [vmem:[#allocation3 + $0x328] sm:$0xff]
    %v2748 = vld [vmem:[#allocation3 + $0x330] sm:$0xff]
    %v2749 = vld [vmem:[#allocation3 + $0x338] sm:$0xff]
    %v2750 = vld [vmem:[#allocation3 + $0x340] sm:$0xff]
    %v2751 = vld [vmem:[#allocation3 + $0x348] sm:$0xff]
    %v2752 = vld [vmem:[#allocation3 + $0x350] sm:$0xff]
    %v2753 = vld [vmem:[#allocation3 + $0x358] sm:$0xff]
    %v2754 = vld [vmem:[#allocation3 + $0x360] sm:$0xff]
    %v2755 = vld [vmem:[#allocation3 + $0x368] sm:$0xff]
    %v2756 = vld [vmem:[#allocation3 + $0x370] sm:$0xff]
    %v2757 = vld [vmem:[#allocation3 + $0x378] sm:$0xff]
    %v2758 = vrot.slane %v2202, 3
    %2760 = vmatprep.subr.mxu0 0.0
    %2761 = vmatpush1.msra.mxu0 %v2742
    %2762 = vmatprep.subr.mxu0 0.0
    %2763 = vmatpush1.msra.mxu0 %v2743
    %2764 = vmatprep.subr.mxu0 0.0
    %2765 = vmatpush1.msra.mxu0 %v2744
    %2766 = vmatprep.subr.mxu0 0.0
    %2767 = vmatpush1.msra.mxu0 %v2745
    %2768 = vmatprep.subr.mxu0 0.0
    %2769 = vmatpush1.msra.mxu0 %v2746
    %2770 = vmatprep.subr.mxu0 0.0
    %2771 = vmatpush1.msra.mxu0 %v2747
    %2772 = vmatprep.subr.mxu0 0.0
    %2773 = vmatpush1.msra.mxu0 %v2748
    %2774 = vmatprep.subr.mxu0 0.0
    %2775 = vmatpush1.msra.mxu0 %v2749
    %2776 = vmatprep.subr.mxu0 0.0
    %2777 = vmatpush1.msra.mxu0 %v2750
    %2778 = vmatprep.subr.mxu0 0.0
    %2779 = vmatpush1.msra.mxu0 %v2751
    %2780 = vmatprep.subr.mxu0 0.0
    %2781 = vmatpush1.msra.mxu0 %v2752
    %2782 = vmatprep.subr.mxu0 0.0
    %2783 = vmatpush1.msra.mxu0 %v2753
    %2784 = vmatprep.subr.mxu0 0.0
    %2785 = vmatpush1.msra.mxu0 %v2754
    %2786 = vmatprep.subr.mxu0 0.0
    %2787 = vmatpush1.msra.mxu0 %v2755
    %2788 = vmatprep.subr.mxu0 0.0
    %2789 = vmatpush1.msra.mxu0 %v2756
    %2790 = vmatprep.subr.mxu0 0.0
    %2791 = vmatpush1.msra.mxu0 %v2757
    %2792 = vmatprep.subr.mxu0 0.0
    %2793 = vmatpush1.msra.mxu0 0.0
    %2794 = vmatprep.subr.mxu0 0.0
    %2795 = vmatpush1.msra.mxu0 0.0
    %2796 = vmatprep.subr.mxu0 0.0
    %2797 = vmatpush1.msra.mxu0 0.0
    %2798 = vmatprep.subr.mxu0 0.0
    %2799 = vmatpush1.msra.mxu0 0.0
    %2800 = vmatprep.subr.mxu0 0.0
    %2801 = vmatpush1.msra.mxu0 0.0
    %2802 = vmatprep.subr.mxu0 0.0
    %2803 = vmatpush1.msra.mxu0 0.0
    %2804 = vmatprep.subr.mxu0 0.0
    %2805 = vmatpush1.msra.mxu0 0.0
    %2806 = vmatprep.subr.mxu0 0.0
    %2807 = vmatpush1.msra.mxu0 0.0
    %2808 = vmatprep.subr.mxu0 0.0
    %2809 = vmatpush1.msra.mxu0 0.0
    %2810 = vmatprep.subr.mxu0 0.0
    %2811 = vmatpush1.msra.mxu0 0.0
    %2812 = vmatprep.subr.mxu0 0.0
    %2813 = vmatpush1.msra.mxu0 0.0
    %2814 = vmatprep.subr.mxu0 0.0
    %2815 = vmatpush1.msra.mxu0 0.0
    %2816 = vmatprep.subr.mxu0 0.0
    %2817 = vmatpush1.msra.mxu0 0.0
    %2818 = vmatprep.subr.mxu0 0.0
    %2819 = vmatpush1.msra.mxu0 0.0
    %2820 = vmatprep.subr.mxu0 0.0
    %2821 = vmatpush1.msra.mxu0 0.0
    %2822 = vmatprep.subr.mxu0 0.0
    %2823 = vmatpush1.msra.mxu0 0.0
    %2824 = vmatprep.mubr.f32.mxu0 0.0
    %2825 = vmatmul.mubr.f32.gmra.mrb[0].mxu0 %v2758
    %v2826 = vpop.f32.mrb[0].mxu0
    %v2827 = vadd.f32 %v2739, %v2826
    %v2828 = vpop.f32.mrb[0].mxu0
    %2829 = vdwg.mxu0
    %2830 = vst [vmem:[#allocation9 + $0x3] sm:$0x1] %v2827
    %2831 = vst [vmem:[#allocation9 + $0x4] sm:$0xf] 0.0
    // Predicated region
    $region26: #{tpu_custom_call.1} parent=1 // pred_check
      _
    $region27: #{tpu_custom_call.1} parent=1 // pred_check_branch
      %2833 = sbr.rel (0) target = $region29
    $region28: #{tpu_custom_call.1} parent=1 // pred_region
      %s2835 = ssub.s32 128, 128
      %2836 = vsyncadd [#allocation5], %s2835
      %s2838 = sshll.u32 [#allocation9], 4
      %s2839 = int_to_ptr.vmem [resolvable:$true] %s2838
      %2841 = dma.vmem_to_hbm [thread:$0]  %s2839, 128, %s3, [#allocation5]
    $region29: #{tpu_custom_call.1} parent=1 // pred_fallthru
      _
    // Predicated region
    $region30: #{tpu_custom_call.1} parent=1 // pred_check
      _
    $region31: #{tpu_custom_call.1} parent=1 // pred_check_branch
      %2843 = sbr.rel (0) target = $region33
    $region32: #{tpu_custom_call.1} parent=1 // pred_region
      %2844 = dma.done [#allocation5], 128
    $region33: #{tpu_custom_call.1} parent=1 // pred_fallthru
      _
    %2845 = vsyncpa [#allocation4], 1
    %2846 = vsyncpa [#allocation7], 1
    %2847 = vsyncpa [#allocation5], 1

</llo_original>
